<compile_context>
chip_gen: v7x
topology: tpu7x:2x2x1
jax: 0.10.0
libtpu: 0.0.40
codegen_flags: <defaults>
</compile_context>

<pallas_src>
import math
import functools

import jax
import jax.numpy as jnp
from jax.experimental import pallas as pl
from jax.experimental.pallas import tpu as pltpu

# ----------------------- small, module-consistent config -----------------------
NTOKEN = 50
D_MODEL = 32
NHEAD = 4
HEAD_DIM = D_MODEL // NHEAD
D_HID = 64
NLAYERS = 2
SEQ = 8          # sequence_size  (weighted_pool = Linear(sequence_size, 1))
CLASS_NUM = 10
BATCH = 2
BS = BATCH * SEQ
LN_EPS = 1e-5

assert (SEQ & (SEQ - 1)) == 0, "batch-mask uses a right-shift; SEQ must be 2^k"
_SEQ_SHIFT = SEQ.bit_length() - 1

# packed weight-slab column offsets (all 128-lane-tile aligned -> no relayout)
W_SLAB = 384
COL_QKV = 0          # wqkv: cols [0, 96)
COL_FF1 = 128        # w1  : cols [128, 192)
COL_OUT = 256        # wo  : cols [256, 288)
BIAS_LANES = 128
HC_LANES = 256       # head consts: pool matrix at col 0, folded bias at col 128

_EINSUM = functools.partial(jnp.einsum, precision=jax.lax.Precision.HIGHEST)


def _layernorm(y, w, b):
    mu = jnp.mean(y, axis=-1, keepdims=True)
    var = jnp.mean((y - mu) ** 2, axis=-1, keepdims=True)
    return (y - mu) * jax.lax.rsqrt(var + LN_EPS) * w + b


# --------------------------------- Pallas kernel --------------------------------
def transformer_kernel(ids_ref, emb_ref, pe_ref, wslab_ref, w2_ref, bias_ref,
                       head_w_ref, head_c_ref, out_ref):
    D = D_MODEL
    inv_sqrt_hd = 1.0 / math.sqrt(HEAD_DIM)

    def mm_bf16(a, w):          # f32 activations x bf16 weights -> f32 (MXU)
        return jax.lax.dot_general(a.astype(jnp.bfloat16), w,
                                   (((1,), (0,)), ((), ())),
                                   preferred_element_type=jnp.float32)

    def mm_nt(a, b):            # f32: a (m,k), b (n,k) -> (m,n)
        return jax.lax.dot_general(a, b, (((1,), (1,)), ((), ())),
                                   preferred_element_type=jnp.float32)

    def mm_nn(a, b):            # f32: a (m,k), b (k,n) -> (m,n)
        return jax.lax.dot_general(a, b, (((1,), (0,)), ((), ())),
                                   preferred_element_type=jnp.float32)

    # ---- fused embedding gather (one-hot MXU matmul, exact) + PE add ----------
    ids = ids_ref[...]                                            # (BS, 1) i32
    tok_iota = jax.lax.broadcasted_iota(jnp.int32, (BS, NTOKEN), 1)
    onehot = jnp.where(tok_iota == ids, jnp.float32(1.0), jnp.float32(0.0))
    x = mm_nn(onehot, emb_ref[...]) + pe_ref[...]                 # (BS, D) f32

    # ---- block-diagonal batch mask, built once (batch folded into rows) -------
    row_i = jax.lax.broadcasted_iota(jnp.int32, (BS, BS), 0)
    col_i = jax.lax.broadcasted_iota(jnp.int32, (BS, BS), 1)
    same_batch = jnp.right_shift(row_i, _SEQ_SHIFT) == jnp.right_shift(col_i, _SEQ_SHIFT)
    mask_add = jnp.where(same_batch, jnp.float32(0.0), jnp.float32(-1e30))

    for l in range(NLAYERS):
        # ---- lane-tile-aligned weight slices, pre-broadcast bias/LN rows ----
        wqkv = wslab_ref[l, :, COL_QKV:COL_QKV + 3 * D]           # (D, 3D) bf16
        w1 = wslab_ref[l, :, COL_FF1:COL_FF1 + D_HID]             # (D, D_HID)
        wo = wslab_ref[l, :, COL_OUT:COL_OUT + D]                 # (D, D)
        w2 = w2_ref[l]                                            # (D_HID, D)

        b_qkv = bias_ref[l, 0, :, 0:3 * D]                        # (BS, 3D) f32
        b_ff1 = bias_ref[l, 1, :, 0:D_HID]
        b_out = bias_ref[l, 2, :, 0:D]
        b_ff2 = bias_ref[l, 3, :, 0:D]
        ln1w = bias_ref[l, 4, :, 0:D]
        ln1b = bias_ref[l, 5, :, 0:D]
        ln2w = bias_ref[l, 6, :, 0:D]
        ln2b = bias_ref[l, 7, :, 0:D]

        # ---- fused QKV projection: one lane-dense (BS, D) @ (D, 3D) matmul ----
        qkv = mm_bf16(x, wqkv) + b_qkv                            # (BS, 3D) f32

        # ---- batch-folded attention: one (BS,BS) score per head (f32) ----
        heads = []
        for h in range(NHEAD):
            c = h * HEAD_DIM
            qh = qkv[:, c:c + HEAD_DIM]                           # (BS, hd)
            kh = qkv[:, D + c:D + c + HEAD_DIM]                   # (BS, hd)
            vh = qkv[:, 2 * D + c:2 * D + c + HEAD_DIM]           # (BS, hd)
            s = mm_nt(qh, kh) * inv_sqrt_hd + mask_add            # (BS, BS)
            s = s - jnp.max(s, axis=-1, keepdims=True)
            p = jnp.exp(s)
            p = p * pl.reciprocal(jnp.sum(p, axis=-1, keepdims=True), approx=True)
            heads.append(mm_nn(p, vh))                            # (BS, hd)
        attn = jnp.concatenate(heads, axis=-1)                    # (BS, D)

        # ---- single fused output projection + post-LN ----
        x = _layernorm(x + mm_bf16(attn, wo) + b_out, ln1w, ln1b)

        # ---- feed forward (relu) + post-LN ----
        h1 = jnp.maximum(mm_bf16(x, w1) + b_ff1, 0.0)             # (BS, D_HID)
        x = _layernorm(x + mm_bf16(h1, w2) + b_ff2, ln2w, ln2b)

    # ---- classifier + block-diagonal weighted pooling (single matmul) ----------
    logits = mm_bf16(x, head_w_ref[...])                          # (BS, C), no bias
    pool_mat = head_c_ref[:, 0:BS]                                # (B, BS)
    head_bias = head_c_ref[:, 128:128 + CLASS_NUM]                # (B, C) (folded)
    pooled = mm_nn(pool_mat, logits) + head_bias                  # (B, C)
    # log_softmax over class dim
    z = pooled - jnp.max(pooled, axis=-1, keepdims=True)
    out_ref[...] = z - jnp.log(jnp.sum(jnp.exp(z), axis=-1, keepdims=True))


@jax.jit
def pallas_forward(src, kernel_weights):
    # batch-major row ordering: row b*SEQ + s  <->  src[s, b]
    ids = jnp.transpose(src).reshape(BS, 1)
    n_in = 1 + len(kernel_weights)
    return pl.pallas_call(
        transformer_kernel,
        out_shape=jax.ShapeDtypeStruct((BATCH, CLASS_NUM), jnp.float32),
        in_specs=[pl.BlockSpec(memory_space=pltpu.MemorySpace.VMEM)
                  for _ in range(n_in)],
        out_specs=pl.BlockSpec(memory_space=pltpu.MemorySpace.VMEM),
    )(ids, *kernel_weights)                                       # (B, C)


# ------------------------------ parameters (synthetic) ---------------------------
def _uniform(key, shape, scale=0.1):
    return jax.random.uniform(key, shape, jnp.float32, -scale, scale)


def make_params(key):
    keys = iter(jax.random.split(key, 8 * NLAYERS + 8))
    D = D_MODEL
    # positional encoding buffer (max_len = sequence_size)
    position = jnp.arange(SEQ, dtype=jnp.float32)[:, None]
    div_term = jnp.exp(jnp.arange(0, D, 2, dtype=jnp.float32) *
                       (-math.log(10000.0) / D))
    pe = jnp.zeros((SEQ, D), jnp.float32)
    pe = pe.at[:, 0::2].set(jnp.sin(position * div_term))
    pe = pe.at[:, 1::2].set(jnp.cos(position * div_term))

    layers = []
    for _ in range(NLAYERS):
        layers.append(dict(
            in_w=_uniform(next(keys), (3 * D, D)),
            in_b=_uniform(next(keys), (3 * D,)),
            out_w=_uniform(next(keys), (D, D)),
            out_b=_uniform(next(keys), (D,)),
            ff1_w=_uniform(next(keys), (D_HID, D)),
            ff1_b=_uniform(next(keys), (D_HID,)),
            ff2_w=_uniform(next(keys), (D, D_HID)),
            ff2_b=_uniform(next(keys), (D,)),
            ln1_w=jnp.ones((D,), jnp.float32), ln1_b=jnp.zeros((D,), jnp.float32),
            ln2_w=jnp.ones((D,), jnp.float32), ln2_b=jnp.zeros((D,), jnp.float32),
        ))
    return dict(
        emb=_uniform(next(keys), (NTOKEN, D)),          # encoder.weight (init_weights)
        pe=pe,
        layers=layers,
        lin_w=_uniform(next(keys), (CLASS_NUM, D)),     # self.linear
        lin_b=_uniform(next(keys), (CLASS_NUM,)),
        wp_w=_uniform(next(keys), (1, SEQ)),            # self.weighted_pool
        wp_b=_uniform(next(keys), (1,)),
    )


def pack_kernel_weights(params):
    """One-time host packing: bf16 matmul slabs, pre-broadcast f32 bias rows,
    batch-tiled PE, pre-scaled embedding, block-diag pooling matrix."""
    D = D_MODEL
    wslab, w2, bias_layers = [], [], []

    def brow(v):  # pad a (n,) vector to 128 lanes and pre-broadcast to BS sublanes
        r = jnp.zeros((BIAS_LANES,), jnp.float32).at[:v.shape[0]].set(v)
        return jnp.broadcast_to(r, (BS, BIAS_LANES))

    for lp in params['layers']:
        slab = jnp.zeros((D, W_SLAB), jnp.float32)
        slab = slab.at[:, COL_QKV:COL_QKV + 3 * D].set(lp['in_w'].T)
        slab = slab.at[:, COL_FF1:COL_FF1 + D_HID].set(lp['ff1_w'].T)
        slab = slab.at[:, COL_OUT:COL_OUT + D].set(lp['out_w'].T)
        wslab.append(slab)
        w2.append(lp['ff2_w'].T)
        bias_layers.append(jnp.stack([
            brow(lp['in_b']),                            # row 0: qkv bias
            brow(lp['ff1_b']),                           # row 1: ffn1 bias
            brow(lp['out_b']),                           # row 2: out-proj bias
            brow(lp['ff2_b']),                           # row 3: ffn2 bias
            brow(lp['ln1_w']), brow(lp['ln1_b']),        # rows 4-5
            brow(lp['ln2_w']), brow(lp['ln2_b']),        # rows 6-7
        ], axis=0))                                      # (8, BS, 128)

    # classifier consts: block-diag pooling matrix + folded (lin_b, wp_b) bias
    hc = jnp.zeros((BATCH, HC_LANES), jnp.float32)
    for b in range(BATCH):
        hc = hc.at[b, b * SEQ:(b + 1) * SEQ].set(params['wp_w'][0])
    folded_bias = jnp.sum(params['wp_w'][0]) * params['lin_b'] + params['wp_b'][0]
    hc = hc.at[:, 128:128 + CLASS_NUM].set(
        jnp.broadcast_to(folded_bias, (BATCH, CLASS_NUM)))

    return [
        (params['emb'] * math.sqrt(D)).astype(jnp.float32),   # (NTOKEN, D), pre-scaled
        jnp.tile(params['pe'], (BATCH, 1)),                   # (BS, D) batch-tiled PE
        jnp.stack(wslab).astype(jnp.bfloat16),                # (L, D, 384) [wqkv|w1|wo]
        jnp.stack(w2).astype(jnp.bfloat16),                   # (L, D_HID, D)
        jnp.stack(bias_layers),                               # (L, 8, BS, 128) f32
        params['lin_w'].T.astype(jnp.bfloat16),               # (D, C)
        hc,                                                   # (B, 256) f32
    ]


# ----------------------------- pure-JAX reference --------------------------------
def ref_forward(params, src):
    D = D_MODEL
    x = params['emb'][src] * math.sqrt(D) + params['pe'][:, None, :]  # (S, B, D)
    S, B, _ = x.shape
    for lp in params['layers']:
        qkv = _EINSUM('sbd,ed->sbe', x, lp['in_w']) + lp['in_b']       # (S, B, 3D)
        q, k, v = jnp.split(qkv, 3, axis=-1)
        heads = lambda t: t.reshape(S, B, NHEAD, HEAD_DIM).transpose(1, 2, 0, 3)
        qh, kh, vh = heads(q), heads(k), heads(v)
        scores = _EINSUM('bhqd,bhkd->bhqk', qh, kh) / math.sqrt(HEAD_DIM)
        p = jax.nn.softmax(scores, axis=-1)
        attn = _EINSUM('bhqk,bhkd->bhqd', p, vh)
        attn = attn.transpose(2, 0, 1, 3).reshape(S, B, D)
        attn = _EINSUM('sbd,ed->sbe', attn, lp['out_w']) + lp['out_b']
        x = _layernorm(x + attn, lp['ln1_w'], lp['ln1_b'])
        h = jax.nn.relu(_EINSUM('sbd,ed->sbe', x, lp['ff1_w']) + lp['ff1_b'])
        h = _EINSUM('sbe,de->sbd', h, lp['ff2_w']) + lp['ff2_b']
        x = _layernorm(x + h, lp['ln2_w'], lp['ln2_b'])
    out = _EINSUM('sbd,cd->sbc', x, params['lin_w']) + params['lin_b']  # (S, B, C)
    pooled = _EINSUM('sbc,s->bc', out, params['wp_w'][0]) + params['wp_b'][0]
    return jax.nn.log_softmax(pooled, axis=-1)                          # (B, C)


# ---------------------------------------- main -----------------------------------
if __name__ == "__main__":
    key = jax.random.PRNGKey(0)
    pkey, skey = jax.random.split(key)
    params = make_params(pkey)
    src = jax.random.randint(skey, (SEQ, BATCH), 0, NTOKEN, dtype=jnp.int32)

    kernel_weights = pack_kernel_weights(params)
    out = pallas_forward(src, kernel_weights)
    out = jax.block_until_ready(out)                                    # (B, C)

    ref = ref_forward(params, src)
    assert out.shape == (BATCH, CLASS_NUM)
    assert bool(jnp.all(jnp.isfinite(out)))
    err = float(jnp.max(jnp.abs(out - ref)))
    # tolerance widened vs f32-only version: matmul operands are bf16 (f32 accum)
    # and the softmax denominator uses the approximate EUP reciprocal.
    assert err < 2e-2, f"max abs err vs reference: {err}"
    print("KERNEL_OK")
</pallas_src>

<mosaic_0001>
module attributes {stable_mosaic.version = 11 : i64} {
  func.func @transformer_kernel(%arg0: memref<16x1xi32, #tpu.memory_space<vmem>>, %arg1: memref<50x32xf32, #tpu.memory_space<vmem>>, %arg2: memref<16x32xf32, #tpu.memory_space<vmem>>, %arg3: memref<2x32x384xbf16, #tpu.memory_space<vmem>>, %arg4: memref<2x64x32xbf16, #tpu.memory_space<vmem>>, %arg5: memref<2x8x16x128xf32, #tpu.memory_space<vmem>>, %arg6: memref<32x10xbf16, #tpu.memory_space<vmem>>, %arg7: memref<2x256xf32, #tpu.memory_space<vmem>>, %arg8: memref<2x10xf32, #tpu.memory_space<vmem>>) attributes {dimension_semantics = [], scalar_prefetch = 0 : i64, scratch_operands = 0 : i64, tpu.core_type = #tpu.core_type<tc>} {
    %c0 = arith.constant 0 : index
    %c0_0 = arith.constant 0 : index
    %0 = vector.load %arg0[%c0, %c0_0] : memref<16x1xi32, #tpu.memory_space<vmem>>, vector<16x1xi32>
    %1 = tpu.iota {dimensions = array<i32: 1>} : vector<16x50xi32>
    %2 = vector.broadcast %0 : vector<16x1xi32> to vector<16x50xi32>
    %3 = arith.cmpi eq, %1, %2 : vector<16x50xi32>
    %cst = arith.constant 1.000000e+00 : f32
    %cst_1 = arith.constant 0.000000e+00 : f32
    %4 = vector.broadcast %cst : f32 to vector<16x50xf32>
    %5 = vector.broadcast %cst_1 : f32 to vector<16x50xf32>
    %6 = arith.select %3, %4, %5 : vector<16x50xi1>, vector<16x50xf32>
    %c0_2 = arith.constant 0 : index
    %c0_3 = arith.constant 0 : index
    %7 = vector.load %arg1[%c0_2, %c0_3] : memref<50x32xf32, #tpu.memory_space<vmem>>, vector<50x32xf32>
    %cst_4 = arith.constant dense<0.000000e+00> : vector<16x32xf32>
    %8 = tpu.matmul %6, %7, %cst_4 {dimension_numbers = #tpu.dot_dimension_numbers<[1], [0], [0], [1], [0, 0, 1, 1], [], []>} : vector<16x50xf32>, vector<50x32xf32>, vector<16x32xf32> -> vector<16x32xf32>
    %c0_5 = arith.constant 0 : index
    %c0_6 = arith.constant 0 : index
    %9 = vector.load %arg2[%c0_5, %c0_6] : memref<16x32xf32, #tpu.memory_space<vmem>>, vector<16x32xf32>
    %10 = arith.addf %8, %9 : vector<16x32xf32>
    %11 = tpu.iota {dimensions = array<i32: 0>} : vector<16x16xi32>
    %12 = tpu.iota {dimensions = array<i32: 1>} : vector<16x16xi32>
    %c3_i32 = arith.constant 3 : i32
    %13 = vector.broadcast %c3_i32 : i32 to vector<16x16xi32>
    %14 = arith.shrsi %11, %13 : vector<16x16xi32>
    %c3_i32_7 = arith.constant 3 : i32
    %15 = vector.broadcast %c3_i32_7 : i32 to vector<16x16xi32>
    %16 = arith.shrsi %12, %15 : vector<16x16xi32>
    %17 = arith.cmpi eq, %14, %16 : vector<16x16xi32>
    %cst_8 = arith.constant 0.000000e+00 : f32
    %cst_9 = arith.constant -1.000000e+30 : f32
    %18 = vector.broadcast %cst_8 : f32 to vector<16x16xf32>
    %19 = vector.broadcast %cst_9 : f32 to vector<16x16xf32>
    %20 = arith.select %17, %18, %19 : vector<16x16xi1>, vector<16x16xf32>
    %c0_10 = arith.constant 0 : index
    %c0_11 = arith.constant 0 : index
    %c0_12 = arith.constant 0 : index
    %21 = vector.load %arg3[%c0_10, %c0_11, %c0_12] : memref<2x32x384xbf16, #tpu.memory_space<vmem>>, vector<1x32x96xbf16>
    %22 = vector.shape_cast %21 : vector<1x32x96xbf16> to vector<32x96xbf16>
    %c0_13 = arith.constant 0 : index
    %c0_14 = arith.constant 0 : index
    %c128 = arith.constant 128 : index
    %23 = vector.load %arg3[%c0_13, %c0_14, %c128] : memref<2x32x384xbf16, #tpu.memory_space<vmem>>, vector<1x32x64xbf16>
    %24 = vector.shape_cast %23 : vector<1x32x64xbf16> to vector<32x64xbf16>
    %c0_15 = arith.constant 0 : index
    %c0_16 = arith.constant 0 : index
    %c256 = arith.constant 256 : index
    %25 = vector.load %arg3[%c0_15, %c0_16, %c256] : memref<2x32x384xbf16, #tpu.memory_space<vmem>>, vector<1x32x32xbf16>
    %26 = vector.shape_cast %25 : vector<1x32x32xbf16> to vector<32x32xbf16>
    %c0_17 = arith.constant 0 : index
    %c0_18 = arith.constant 0 : index
    %c0_19 = arith.constant 0 : index
    %27 = vector.load %arg4[%c0_17, %c0_18, %c0_19] : memref<2x64x32xbf16, #tpu.memory_space<vmem>>, vector<1x64x32xbf16>
    %28 = vector.shape_cast %27 : vector<1x64x32xbf16> to vector<64x32xbf16>
    %c0_20 = arith.constant 0 : index
    %c0_21 = arith.constant 0 : index
    %c0_22 = arith.constant 0 : index
    %c0_23 = arith.constant 0 : index
    %29 = vector.load %arg5[%c0_20, %c0_21, %c0_22, %c0_23] : memref<2x8x16x128xf32, #tpu.memory_space<vmem>>, vector<1x1x16x96xf32>
    %30 = vector.shape_cast %29 : vector<1x1x16x96xf32> to vector<16x96xf32>
    %c0_24 = arith.constant 0 : index
    %c1 = arith.constant 1 : index
    %c0_25 = arith.constant 0 : index
    %c0_26 = arith.constant 0 : index
    %31 = vector.load %arg5[%c0_24, %c1, %c0_25, %c0_26] : memref<2x8x16x128xf32, #tpu.memory_space<vmem>>, vector<1x1x16x64xf32>
    %32 = vector.shape_cast %31 : vector<1x1x16x64xf32> to vector<16x64xf32>
    %c0_27 = arith.constant 0 : index
    %c2 = arith.constant 2 : index
    %c0_28 = arith.constant 0 : index
    %c0_29 = arith.constant 0 : index
    %33 = vector.load %arg5[%c0_27, %c2, %c0_28, %c0_29] : memref<2x8x16x128xf32, #tpu.memory_space<vmem>>, vector<1x1x16x32xf32>
    %34 = vector.shape_cast %33 : vector<1x1x16x32xf32> to vector<16x32xf32>
    %c0_30 = arith.constant 0 : index
    %c3 = arith.constant 3 : index
    %c0_31 = arith.constant 0 : index
    %c0_32 = arith.constant 0 : index
    %35 = vector.load %arg5[%c0_30, %c3, %c0_31, %c0_32] : memref<2x8x16x128xf32, #tpu.memory_space<vmem>>, vector<1x1x16x32xf32>
    %36 = vector.shape_cast %35 : vector<1x1x16x32xf32> to vector<16x32xf32>
    %c0_33 = arith.constant 0 : index
    %c4 = arith.constant 4 : index
    %c0_34 = arith.constant 0 : index
    %c0_35 = arith.constant 0 : index
    %37 = vector.load %arg5[%c0_33, %c4, %c0_34, %c0_35] : memref<2x8x16x128xf32, #tpu.memory_space<vmem>>, vector<1x1x16x32xf32>
    %38 = vector.shape_cast %37 : vector<1x1x16x32xf32> to vector<16x32xf32>
    %c0_36 = arith.constant 0 : index
    %c5 = arith.constant 5 : index
    %c0_37 = arith.constant 0 : index
    %c0_38 = arith.constant 0 : index
    %39 = vector.load %arg5[%c0_36, %c5, %c0_37, %c0_38] : memref<2x8x16x128xf32, #tpu.memory_space<vmem>>, vector<1x1x16x32xf32>
    %40 = vector.shape_cast %39 : vector<1x1x16x32xf32> to vector<16x32xf32>
    %c0_39 = arith.constant 0 : index
    %c6 = arith.constant 6 : index
    %c0_40 = arith.constant 0 : index
    %c0_41 = arith.constant 0 : index
    %41 = vector.load %arg5[%c0_39, %c6, %c0_40, %c0_41] : memref<2x8x16x128xf32, #tpu.memory_space<vmem>>, vector<1x1x16x32xf32>
    %42 = vector.shape_cast %41 : vector<1x1x16x32xf32> to vector<16x32xf32>
    %c0_42 = arith.constant 0 : index
    %c7 = arith.constant 7 : index
    %c0_43 = arith.constant 0 : index
    %c0_44 = arith.constant 0 : index
    %43 = vector.load %arg5[%c0_42, %c7, %c0_43, %c0_44] : memref<2x8x16x128xf32, #tpu.memory_space<vmem>>, vector<1x1x16x32xf32>
    %44 = vector.shape_cast %43 : vector<1x1x16x32xf32> to vector<16x32xf32>
    %45 = arith.truncf %10 : vector<16x32xf32> to vector<16x32xbf16>
    %cst_45 = arith.constant dense<0.000000e+00> : vector<16x96xf32>
    %46 = tpu.matmul %45, %22, %cst_45 {dimension_numbers = #tpu.dot_dimension_numbers<[1], [0], [0], [1], [0, 0, 1, 1], [], []>} : vector<16x32xbf16>, vector<32x96xbf16>, vector<16x96xf32> -> vector<16x96xf32>
    %47 = arith.addf %46, %30 : vector<16x96xf32>
    %48 = vector.extract_strided_slice %47 {offsets = [0, 0], sizes = [16, 8], strides = [1, 1]} : vector<16x96xf32> to vector<16x8xf32>
    %49 = vector.extract_strided_slice %47 {offsets = [0, 32], sizes = [16, 8], strides = [1, 1]} : vector<16x96xf32> to vector<16x8xf32>
    %50 = vector.extract_strided_slice %47 {offsets = [0, 64], sizes = [16, 8], strides = [1, 1]} : vector<16x96xf32> to vector<16x8xf32>
    %cst_46 = arith.constant dense<0.000000e+00> : vector<16x16xf32>
    %51 = tpu.matmul %48, %49, %cst_46 {dimension_numbers = #tpu.dot_dimension_numbers<[1], [1], [0], [0], [0, 0, 1, 0], [], []>} : vector<16x8xf32>, vector<16x8xf32>, vector<16x16xf32> -> vector<16x16xf32>
    %cst_47 = arith.constant 0.353553385 : f32
    %52 = vector.broadcast %cst_47 : f32 to vector<16x16xf32>
    %53 = arith.mulf %51, %52 : vector<16x16xf32>
    %54 = arith.addf %53, %20 : vector<16x16xf32>
    %cst_48 = arith.constant dense<0xFF800000> : vector<16xf32>
    %55 = vector.multi_reduction <maximumf>, %54, %cst_48 [1] : vector<16x16xf32> to vector<16xf32>
    %56 = vector.shape_cast %55 : vector<16xf32> to vector<16x1xf32>
    %57 = vector.broadcast %56 : vector<16x1xf32> to vector<16x16xf32>
    %58 = arith.subf %54, %57 : vector<16x16xf32>
    %59 = math.exp %58 : vector<16x16xf32>
    %cst_49 = arith.constant dense<0.000000e+00> : vector<16xf32>
    %60 = vector.multi_reduction <add>, %59, %cst_49 [1] : vector<16x16xf32> to vector<16xf32>
    %61 = vector.shape_cast %60 : vector<16xf32> to vector<16x1xf32>
    %62 = tpu.reciprocal %61 {approx = true} : vector<16x1xf32> -> vector<16x1xf32>
    %63 = vector.broadcast %62 : vector<16x1xf32> to vector<16x16xf32>
    %64 = arith.mulf %59, %63 : vector<16x16xf32>
    %cst_50 = arith.constant dense<0.000000e+00> : vector<16x8xf32>
    %65 = tpu.matmul %64, %50, %cst_50 {dimension_numbers = #tpu.dot_dimension_numbers<[1], [0], [0], [1], [0, 0, 1, 1], [], []>} : vector<16x16xf32>, vector<16x8xf32>, vector<16x8xf32> -> vector<16x8xf32>
    %66 = vector.extract_strided_slice %47 {offsets = [0, 8], sizes = [16, 8], strides = [1, 1]} : vector<16x96xf32> to vector<16x8xf32>
    %67 = vector.extract_strided_slice %47 {offsets = [0, 40], sizes = [16, 8], strides = [1, 1]} : vector<16x96xf32> to vector<16x8xf32>
    %68 = vector.extract_strided_slice %47 {offsets = [0, 72], sizes = [16, 8], strides = [1, 1]} : vector<16x96xf32> to vector<16x8xf32>
    %cst_51 = arith.constant dense<0.000000e+00> : vector<16x16xf32>
    %69 = tpu.matmul %66, %67, %cst_51 {dimension_numbers = #tpu.dot_dimension_numbers<[1], [1], [0], [0], [0, 0, 1, 0], [], []>} : vector<16x8xf32>, vector<16x8xf32>, vector<16x16xf32> -> vector<16x16xf32>
    %cst_52 = arith.constant 0.353553385 : f32
    %70 = vector.broadcast %cst_52 : f32 to vector<16x16xf32>
    %71 = arith.mulf %69, %70 : vector<16x16xf32>
    %72 = arith.addf %71, %20 : vector<16x16xf32>
    %cst_53 = arith.constant dense<0xFF800000> : vector<16xf32>
    %73 = vector.multi_reduction <maximumf>, %72, %cst_53 [1] : vector<16x16xf32> to vector<16xf32>
    %74 = vector.shape_cast %73 : vector<16xf32> to vector<16x1xf32>
    %75 = vector.broadcast %74 : vector<16x1xf32> to vector<16x16xf32>
    %76 = arith.subf %72, %75 : vector<16x16xf32>
    %77 = math.exp %76 : vector<16x16xf32>
    %cst_54 = arith.constant dense<0.000000e+00> : vector<16xf32>
    %78 = vector.multi_reduction <add>, %77, %cst_54 [1] : vector<16x16xf32> to vector<16xf32>
    %79 = vector.shape_cast %78 : vector<16xf32> to vector<16x1xf32>
    %80 = tpu.reciprocal %79 {approx = true} : vector<16x1xf32> -> vector<16x1xf32>
    %81 = vector.broadcast %80 : vector<16x1xf32> to vector<16x16xf32>
    %82 = arith.mulf %77, %81 : vector<16x16xf32>
    %cst_55 = arith.constant dense<0.000000e+00> : vector<16x8xf32>
    %83 = tpu.matmul %82, %68, %cst_55 {dimension_numbers = #tpu.dot_dimension_numbers<[1], [0], [0], [1], [0, 0, 1, 1], [], []>} : vector<16x16xf32>, vector<16x8xf32>, vector<16x8xf32> -> vector<16x8xf32>
    %84 = vector.extract_strided_slice %47 {offsets = [0, 16], sizes = [16, 8], strides = [1, 1]} : vector<16x96xf32> to vector<16x8xf32>
    %85 = vector.extract_strided_slice %47 {offsets = [0, 48], sizes = [16, 8], strides = [1, 1]} : vector<16x96xf32> to vector<16x8xf32>
    %86 = vector.extract_strided_slice %47 {offsets = [0, 80], sizes = [16, 8], strides = [1, 1]} : vector<16x96xf32> to vector<16x8xf32>
    %cst_56 = arith.constant dense<0.000000e+00> : vector<16x16xf32>
    %87 = tpu.matmul %84, %85, %cst_56 {dimension_numbers = #tpu.dot_dimension_numbers<[1], [1], [0], [0], [0, 0, 1, 0], [], []>} : vector<16x8xf32>, vector<16x8xf32>, vector<16x16xf32> -> vector<16x16xf32>
    %cst_57 = arith.constant 0.353553385 : f32
    %88 = vector.broadcast %cst_57 : f32 to vector<16x16xf32>
    %89 = arith.mulf %87, %88 : vector<16x16xf32>
    %90 = arith.addf %89, %20 : vector<16x16xf32>
    %cst_58 = arith.constant dense<0xFF800000> : vector<16xf32>
    %91 = vector.multi_reduction <maximumf>, %90, %cst_58 [1] : vector<16x16xf32> to vector<16xf32>
    %92 = vector.shape_cast %91 : vector<16xf32> to vector<16x1xf32>
    %93 = vector.broadcast %92 : vector<16x1xf32> to vector<16x16xf32>
    %94 = arith.subf %90, %93 : vector<16x16xf32>
    %95 = math.exp %94 : vector<16x16xf32>
    %cst_59 = arith.constant dense<0.000000e+00> : vector<16xf32>
    %96 = vector.multi_reduction <add>, %95, %cst_59 [1] : vector<16x16xf32> to vector<16xf32>
    %97 = vector.shape_cast %96 : vector<16xf32> to vector<16x1xf32>
    %98 = tpu.reciprocal %97 {approx = true} : vector<16x1xf32> -> vector<16x1xf32>
    %99 = vector.broadcast %98 : vector<16x1xf32> to vector<16x16xf32>
    %100 = arith.mulf %95, %99 : vector<16x16xf32>
    %cst_60 = arith.constant dense<0.000000e+00> : vector<16x8xf32>
    %101 = tpu.matmul %100, %86, %cst_60 {dimension_numbers = #tpu.dot_dimension_numbers<[1], [0], [0], [1], [0, 0, 1, 1], [], []>} : vector<16x16xf32>, vector<16x8xf32>, vector<16x8xf32> -> vector<16x8xf32>
    %102 = vector.extract_strided_slice %47 {offsets = [0, 24], sizes = [16, 8], strides = [1, 1]} : vector<16x96xf32> to vector<16x8xf32>
    %103 = vector.extract_strided_slice %47 {offsets = [0, 56], sizes = [16, 8], strides = [1, 1]} : vector<16x96xf32> to vector<16x8xf32>
    %104 = vector.extract_strided_slice %47 {offsets = [0, 88], sizes = [16, 8], strides = [1, 1]} : vector<16x96xf32> to vector<16x8xf32>
    %cst_61 = arith.constant dense<0.000000e+00> : vector<16x16xf32>
    %105 = tpu.matmul %102, %103, %cst_61 {dimension_numbers = #tpu.dot_dimension_numbers<[1], [1], [0], [0], [0, 0, 1, 0], [], []>} : vector<16x8xf32>, vector<16x8xf32>, vector<16x16xf32> -> vector<16x16xf32>
    %cst_62 = arith.constant 0.353553385 : f32
    %106 = vector.broadcast %cst_62 : f32 to vector<16x16xf32>
    %107 = arith.mulf %105, %106 : vector<16x16xf32>
    %108 = arith.addf %107, %20 : vector<16x16xf32>
    %cst_63 = arith.constant dense<0xFF800000> : vector<16xf32>
    %109 = vector.multi_reduction <maximumf>, %108, %cst_63 [1] : vector<16x16xf32> to vector<16xf32>
    %110 = vector.shape_cast %109 : vector<16xf32> to vector<16x1xf32>
    %111 = vector.broadcast %110 : vector<16x1xf32> to vector<16x16xf32>
    %112 = arith.subf %108, %111 : vector<16x16xf32>
    %113 = math.exp %112 : vector<16x16xf32>
    %cst_64 = arith.constant dense<0.000000e+00> : vector<16xf32>
    %114 = vector.multi_reduction <add>, %113, %cst_64 [1] : vector<16x16xf32> to vector<16xf32>
    %115 = vector.shape_cast %114 : vector<16xf32> to vector<16x1xf32>
    %116 = tpu.reciprocal %115 {approx = true} : vector<16x1xf32> -> vector<16x1xf32>
    %117 = vector.broadcast %116 : vector<16x1xf32> to vector<16x16xf32>
    %118 = arith.mulf %113, %117 : vector<16x16xf32>
    %cst_65 = arith.constant dense<0.000000e+00> : vector<16x8xf32>
    %119 = tpu.matmul %118, %104, %cst_65 {dimension_numbers = #tpu.dot_dimension_numbers<[1], [0], [0], [1], [0, 0, 1, 1], [], []>} : vector<16x16xf32>, vector<16x8xf32>, vector<16x8xf32> -> vector<16x8xf32>
    %120 = tpu.concatenate %65, %83, %101, %119 in 1 : vector<16x8xf32>, vector<16x8xf32>, vector<16x8xf32>, vector<16x8xf32> -> vector<16x32xf32>
    %121 = arith.truncf %120 : vector<16x32xf32> to vector<16x32xbf16>
    %cst_66 = arith.constant dense<0.000000e+00> : vector<16x32xf32>
    %122 = tpu.matmul %121, %26, %cst_66 {dimension_numbers = #tpu.dot_dimension_numbers<[1], [0], [0], [1], [0, 0, 1, 1], [], []>} : vector<16x32xbf16>, vector<32x32xbf16>, vector<16x32xf32> -> vector<16x32xf32>
    %123 = arith.addf %10, %122 : vector<16x32xf32>
    %124 = arith.addf %123, %34 : vector<16x32xf32>
    %cst_67 = arith.constant dense<0.000000e+00> : vector<16xf32>
    %125 = vector.multi_reduction <add>, %124, %cst_67 [1] : vector<16x32xf32> to vector<16xf32>
    %126 = vector.shape_cast %125 : vector<16xf32> to vector<16x1xf32>
    %cst_68 = arith.constant 3.200000e+01 : f32
    %127 = vector.broadcast %cst_68 : f32 to vector<16x1xf32>
    %128 = arith.divf %126, %127 : vector<16x1xf32>
    %129 = vector.broadcast %128 : vector<16x1xf32> to vector<16x32xf32>
    %130 = arith.subf %124, %129 : vector<16x32xf32>
    %131 = arith.mulf %130, %130 : vector<16x32xf32>
    %cst_69 = arith.constant dense<0.000000e+00> : vector<16xf32>
    %132 = vector.multi_reduction <add>, %131, %cst_69 [1] : vector<16x32xf32> to vector<16xf32>
    %133 = vector.shape_cast %132 : vector<16xf32> to vector<16x1xf32>
    %cst_70 = arith.constant 3.200000e+01 : f32
    %134 = vector.broadcast %cst_70 : f32 to vector<16x1xf32>
    %135 = arith.divf %133, %134 : vector<16x1xf32>
    %136 = vector.broadcast %128 : vector<16x1xf32> to vector<16x32xf32>
    %137 = arith.subf %124, %136 : vector<16x32xf32>
    %cst_71 = arith.constant 9.99999974E-6 : f32
    %138 = vector.broadcast %cst_71 : f32 to vector<16x1xf32>
    %139 = arith.addf %135, %138 : vector<16x1xf32>
    %140 = math.rsqrt %139 : vector<16x1xf32>
    %141 = vector.broadcast %140 : vector<16x1xf32> to vector<16x32xf32>
    %142 = arith.mulf %137, %141 : vector<16x32xf32>
    %143 = arith.mulf %142, %38 : vector<16x32xf32>
    %144 = arith.addf %143, %40 : vector<16x32xf32>
    %145 = arith.truncf %144 : vector<16x32xf32> to vector<16x32xbf16>
    %cst_72 = arith.constant dense<0.000000e+00> : vector<16x64xf32>
    %146 = tpu.matmul %145, %24, %cst_72 {dimension_numbers = #tpu.dot_dimension_numbers<[1], [0], [0], [1], [0, 0, 1, 1], [], []>} : vector<16x32xbf16>, vector<32x64xbf16>, vector<16x64xf32> -> vector<16x64xf32>
    %147 = arith.addf %146, %32 : vector<16x64xf32>
    %cst_73 = arith.constant 0.000000e+00 : f32
    %148 = vector.broadcast %cst_73 : f32 to vector<16x64xf32>
    %149 = arith.maximumf %147, %148 : vector<16x64xf32>
    %150 = arith.truncf %149 : vector<16x64xf32> to vector<16x64xbf16>
    %cst_74 = arith.constant dense<0.000000e+00> : vector<16x32xf32>
    %151 = tpu.matmul %150, %28, %cst_74 {dimension_numbers = #tpu.dot_dimension_numbers<[1], [0], [0], [1], [0, 0, 1, 1], [], []>} : vector<16x64xbf16>, vector<64x32xbf16>, vector<16x32xf32> -> vector<16x32xf32>
    %152 = arith.addf %144, %151 : vector<16x32xf32>
    %153 = arith.addf %152, %36 : vector<16x32xf32>
    %cst_75 = arith.constant dense<0.000000e+00> : vector<16xf32>
    %154 = vector.multi_reduction <add>, %153, %cst_75 [1] : vector<16x32xf32> to vector<16xf32>
    %155 = vector.shape_cast %154 : vector<16xf32> to vector<16x1xf32>
    %cst_76 = arith.constant 3.200000e+01 : f32
    %156 = vector.broadcast %cst_76 : f32 to vector<16x1xf32>
    %157 = arith.divf %155, %156 : vector<16x1xf32>
    %158 = vector.broadcast %157 : vector<16x1xf32> to vector<16x32xf32>
    %159 = arith.subf %153, %158 : vector<16x32xf32>
    %160 = arith.mulf %159, %159 : vector<16x32xf32>
    %cst_77 = arith.constant dense<0.000000e+00> : vector<16xf32>
    %161 = vector.multi_reduction <add>, %160, %cst_77 [1] : vector<16x32xf32> to vector<16xf32>
    %162 = vector.shape_cast %161 : vector<16xf32> to vector<16x1xf32>
    %cst_78 = arith.constant 3.200000e+01 : f32
    %163 = vector.broadcast %cst_78 : f32 to vector<16x1xf32>
    %164 = arith.divf %162, %163 : vector<16x1xf32>
    %165 = vector.broadcast %157 : vector<16x1xf32> to vector<16x32xf32>
    %166 = arith.subf %153, %165 : vector<16x32xf32>
    %cst_79 = arith.constant 9.99999974E-6 : f32
    %167 = vector.broadcast %cst_79 : f32 to vector<16x1xf32>
    %168 = arith.addf %164, %167 : vector<16x1xf32>
    %169 = math.rsqrt %168 : vector<16x1xf32>
    %170 = vector.broadcast %169 : vector<16x1xf32> to vector<16x32xf32>
    %171 = arith.mulf %166, %170 : vector<16x32xf32>
    %172 = arith.mulf %171, %42 : vector<16x32xf32>
    %173 = arith.addf %172, %44 : vector<16x32xf32>
    %c1_80 = arith.constant 1 : index
    %c0_81 = arith.constant 0 : index
    %c0_82 = arith.constant 0 : index
    %174 = vector.load %arg3[%c1_80, %c0_81, %c0_82] : memref<2x32x384xbf16, #tpu.memory_space<vmem>>, vector<1x32x96xbf16>
    %175 = vector.shape_cast %174 : vector<1x32x96xbf16> to vector<32x96xbf16>
    %c1_83 = arith.constant 1 : index
    %c0_84 = arith.constant 0 : index
    %c128_85 = arith.constant 128 : index
    %176 = vector.load %arg3[%c1_83, %c0_84, %c128_85] : memref<2x32x384xbf16, #tpu.memory_space<vmem>>, vector<1x32x64xbf16>
    %177 = vector.shape_cast %176 : vector<1x32x64xbf16> to vector<32x64xbf16>
    %c1_86 = arith.constant 1 : index
    %c0_87 = arith.constant 0 : index
    %c256_88 = arith.constant 256 : index
    %178 = vector.load %arg3[%c1_86, %c0_87, %c256_88] : memref<2x32x384xbf16, #tpu.memory_space<vmem>>, vector<1x32x32xbf16>
    %179 = vector.shape_cast %178 : vector<1x32x32xbf16> to vector<32x32xbf16>
    %c1_89 = arith.constant 1 : index
    %c0_90 = arith.constant 0 : index
    %c0_91 = arith.constant 0 : index
    %180 = vector.load %arg4[%c1_89, %c0_90, %c0_91] : memref<2x64x32xbf16, #tpu.memory_space<vmem>>, vector<1x64x32xbf16>
    %181 = vector.shape_cast %180 : vector<1x64x32xbf16> to vector<64x32xbf16>
    %c1_92 = arith.constant 1 : index
    %c0_93 = arith.constant 0 : index
    %c0_94 = arith.constant 0 : index
    %c0_95 = arith.constant 0 : index
    %182 = vector.load %arg5[%c1_92, %c0_93, %c0_94, %c0_95] : memref<2x8x16x128xf32, #tpu.memory_space<vmem>>, vector<1x1x16x96xf32>
    %183 = vector.shape_cast %182 : vector<1x1x16x96xf32> to vector<16x96xf32>
    %c1_96 = arith.constant 1 : index
    %c1_97 = arith.constant 1 : index
    %c0_98 = arith.constant 0 : index
    %c0_99 = arith.constant 0 : index
    %184 = vector.load %arg5[%c1_96, %c1_97, %c0_98, %c0_99] : memref<2x8x16x128xf32, #tpu.memory_space<vmem>>, vector<1x1x16x64xf32>
    %185 = vector.shape_cast %184 : vector<1x1x16x64xf32> to vector<16x64xf32>
    %c1_100 = arith.constant 1 : index
    %c2_101 = arith.constant 2 : index
    %c0_102 = arith.constant 0 : index
    %c0_103 = arith.constant 0 : index
    %186 = vector.load %arg5[%c1_100, %c2_101, %c0_102, %c0_103] : memref<2x8x16x128xf32, #tpu.memory_space<vmem>>, vector<1x1x16x32xf32>
    %187 = vector.shape_cast %186 : vector<1x1x16x32xf32> to vector<16x32xf32>
    %c1_104 = arith.constant 1 : index
    %c3_105 = arith.constant 3 : index
    %c0_106 = arith.constant 0 : index
    %c0_107 = arith.constant 0 : index
    %188 = vector.load %arg5[%c1_104, %c3_105, %c0_106, %c0_107] : memref<2x8x16x128xf32, #tpu.memory_space<vmem>>, vector<1x1x16x32xf32>
    %189 = vector.shape_cast %188 : vector<1x1x16x32xf32> to vector<16x32xf32>
    %c1_108 = arith.constant 1 : index
    %c4_109 = arith.constant 4 : index
    %c0_110 = arith.constant 0 : index
    %c0_111 = arith.constant 0 : index
    %190 = vector.load %arg5[%c1_108, %c4_109, %c0_110, %c0_111] : memref<2x8x16x128xf32, #tpu.memory_space<vmem>>, vector<1x1x16x32xf32>
    %191 = vector.shape_cast %190 : vector<1x1x16x32xf32> to vector<16x32xf32>
    %c1_112 = arith.constant 1 : index
    %c5_113 = arith.constant 5 : index
    %c0_114 = arith.constant 0 : index
    %c0_115 = arith.constant 0 : index
    %192 = vector.load %arg5[%c1_112, %c5_113, %c0_114, %c0_115] : memref<2x8x16x128xf32, #tpu.memory_space<vmem>>, vector<1x1x16x32xf32>
    %193 = vector.shape_cast %192 : vector<1x1x16x32xf32> to vector<16x32xf32>
    %c1_116 = arith.constant 1 : index
    %c6_117 = arith.constant 6 : index
    %c0_118 = arith.constant 0 : index
    %c0_119 = arith.constant 0 : index
    %194 = vector.load %arg5[%c1_116, %c6_117, %c0_118, %c0_119] : memref<2x8x16x128xf32, #tpu.memory_space<vmem>>, vector<1x1x16x32xf32>
    %195 = vector.shape_cast %194 : vector<1x1x16x32xf32> to vector<16x32xf32>
    %c1_120 = arith.constant 1 : index
    %c7_121 = arith.constant 7 : index
    %c0_122 = arith.constant 0 : index
    %c0_123 = arith.constant 0 : index
    %196 = vector.load %arg5[%c1_120, %c7_121, %c0_122, %c0_123] : memref<2x8x16x128xf32, #tpu.memory_space<vmem>>, vector<1x1x16x32xf32>
    %197 = vector.shape_cast %196 : vector<1x1x16x32xf32> to vector<16x32xf32>
    %198 = arith.truncf %173 : vector<16x32xf32> to vector<16x32xbf16>
    %cst_124 = arith.constant dense<0.000000e+00> : vector<16x96xf32>
    %199 = tpu.matmul %198, %175, %cst_124 {dimension_numbers = #tpu.dot_dimension_numbers<[1], [0], [0], [1], [0, 0, 1, 1], [], []>} : vector<16x32xbf16>, vector<32x96xbf16>, vector<16x96xf32> -> vector<16x96xf32>
    %200 = arith.addf %199, %183 : vector<16x96xf32>
    %201 = vector.extract_strided_slice %200 {offsets = [0, 0], sizes = [16, 8], strides = [1, 1]} : vector<16x96xf32> to vector<16x8xf32>
    %202 = vector.extract_strided_slice %200 {offsets = [0, 32], sizes = [16, 8], strides = [1, 1]} : vector<16x96xf32> to vector<16x8xf32>
    %203 = vector.extract_strided_slice %200 {offsets = [0, 64], sizes = [16, 8], strides = [1, 1]} : vector<16x96xf32> to vector<16x8xf32>
    %cst_125 = arith.constant dense<0.000000e+00> : vector<16x16xf32>
    %204 = tpu.matmul %201, %202, %cst_125 {dimension_numbers = #tpu.dot_dimension_numbers<[1], [1], [0], [0], [0, 0, 1, 0], [], []>} : vector<16x8xf32>, vector<16x8xf32>, vector<16x16xf32> -> vector<16x16xf32>
    %cst_126 = arith.constant 0.353553385 : f32
    %205 = vector.broadcast %cst_126 : f32 to vector<16x16xf32>
    %206 = arith.mulf %204, %205 : vector<16x16xf32>
    %207 = arith.addf %206, %20 : vector<16x16xf32>
    %cst_127 = arith.constant dense<0xFF800000> : vector<16xf32>
    %208 = vector.multi_reduction <maximumf>, %207, %cst_127 [1] : vector<16x16xf32> to vector<16xf32>
    %209 = vector.shape_cast %208 : vector<16xf32> to vector<16x1xf32>
    %210 = vector.broadcast %209 : vector<16x1xf32> to vector<16x16xf32>
    %211 = arith.subf %207, %210 : vector<16x16xf32>
    %212 = math.exp %211 : vector<16x16xf32>
    %cst_128 = arith.constant dense<0.000000e+00> : vector<16xf32>
    %213 = vector.multi_reduction <add>, %212, %cst_128 [1] : vector<16x16xf32> to vector<16xf32>
    %214 = vector.shape_cast %213 : vector<16xf32> to vector<16x1xf32>
    %215 = tpu.reciprocal %214 {approx = true} : vector<16x1xf32> -> vector<16x1xf32>
    %216 = vector.broadcast %215 : vector<16x1xf32> to vector<16x16xf32>
    %217 = arith.mulf %212, %216 : vector<16x16xf32>
    %cst_129 = arith.constant dense<0.000000e+00> : vector<16x8xf32>
    %218 = tpu.matmul %217, %203, %cst_129 {dimension_numbers = #tpu.dot_dimension_numbers<[1], [0], [0], [1], [0, 0, 1, 1], [], []>} : vector<16x16xf32>, vector<16x8xf32>, vector<16x8xf32> -> vector<16x8xf32>
    %219 = vector.extract_strided_slice %200 {offsets = [0, 8], sizes = [16, 8], strides = [1, 1]} : vector<16x96xf32> to vector<16x8xf32>
    %220 = vector.extract_strided_slice %200 {offsets = [0, 40], sizes = [16, 8], strides = [1, 1]} : vector<16x96xf32> to vector<16x8xf32>
    %221 = vector.extract_strided_slice %200 {offsets = [0, 72], sizes = [16, 8], strides = [1, 1]} : vector<16x96xf32> to vector<16x8xf32>
    %cst_130 = arith.constant dense<0.000000e+00> : vector<16x16xf32>
    %222 = tpu.matmul %219, %220, %cst_130 {dimension_numbers = #tpu.dot_dimension_numbers<[1], [1], [0], [0], [0, 0, 1, 0], [], []>} : vector<16x8xf32>, vector<16x8xf32>, vector<16x16xf32> -> vector<16x16xf32>
    %cst_131 = arith.constant 0.353553385 : f32
    %223 = vector.broadcast %cst_131 : f32 to vector<16x16xf32>
    %224 = arith.mulf %222, %223 : vector<16x16xf32>
    %225 = arith.addf %224, %20 : vector<16x16xf32>
    %cst_132 = arith.constant dense<0xFF800000> : vector<16xf32>
    %226 = vector.multi_reduction <maximumf>, %225, %cst_132 [1] : vector<16x16xf32> to vector<16xf32>
    %227 = vector.shape_cast %226 : vector<16xf32> to vector<16x1xf32>
    %228 = vector.broadcast %227 : vector<16x1xf32> to vector<16x16xf32>
    %229 = arith.subf %225, %228 : vector<16x16xf32>
    %230 = math.exp %229 : vector<16x16xf32>
    %cst_133 = arith.constant dense<0.000000e+00> : vector<16xf32>
    %231 = vector.multi_reduction <add>, %230, %cst_133 [1] : vector<16x16xf32> to vector<16xf32>
    %232 = vector.shape_cast %231 : vector<16xf32> to vector<16x1xf32>
    %233 = tpu.reciprocal %232 {approx = true} : vector<16x1xf32> -> vector<16x1xf32>
    %234 = vector.broadcast %233 : vector<16x1xf32> to vector<16x16xf32>
    %235 = arith.mulf %230, %234 : vector<16x16xf32>
    %cst_134 = arith.constant dense<0.000000e+00> : vector<16x8xf32>
    %236 = tpu.matmul %235, %221, %cst_134 {dimension_numbers = #tpu.dot_dimension_numbers<[1], [0], [0], [1], [0, 0, 1, 1], [], []>} : vector<16x16xf32>, vector<16x8xf32>, vector<16x8xf32> -> vector<16x8xf32>
    %237 = vector.extract_strided_slice %200 {offsets = [0, 16], sizes = [16, 8], strides = [1, 1]} : vector<16x96xf32> to vector<16x8xf32>
    %238 = vector.extract_strided_slice %200 {offsets = [0, 48], sizes = [16, 8], strides = [1, 1]} : vector<16x96xf32> to vector<16x8xf32>
    %239 = vector.extract_strided_slice %200 {offsets = [0, 80], sizes = [16, 8], strides = [1, 1]} : vector<16x96xf32> to vector<16x8xf32>
    %cst_135 = arith.constant dense<0.000000e+00> : vector<16x16xf32>
    %240 = tpu.matmul %237, %238, %cst_135 {dimension_numbers = #tpu.dot_dimension_numbers<[1], [1], [0], [0], [0, 0, 1, 0], [], []>} : vector<16x8xf32>, vector<16x8xf32>, vector<16x16xf32> -> vector<16x16xf32>
    %cst_136 = arith.constant 0.353553385 : f32
    %241 = vector.broadcast %cst_136 : f32 to vector<16x16xf32>
    %242 = arith.mulf %240, %241 : vector<16x16xf32>
    %243 = arith.addf %242, %20 : vector<16x16xf32>
    %cst_137 = arith.constant dense<0xFF800000> : vector<16xf32>
    %244 = vector.multi_reduction <maximumf>, %243, %cst_137 [1] : vector<16x16xf32> to vector<16xf32>
    %245 = vector.shape_cast %244 : vector<16xf32> to vector<16x1xf32>
    %246 = vector.broadcast %245 : vector<16x1xf32> to vector<16x16xf32>
    %247 = arith.subf %243, %246 : vector<16x16xf32>
    %248 = math.exp %247 : vector<16x16xf32>
    %cst_138 = arith.constant dense<0.000000e+00> : vector<16xf32>
    %249 = vector.multi_reduction <add>, %248, %cst_138 [1] : vector<16x16xf32> to vector<16xf32>
    %250 = vector.shape_cast %249 : vector<16xf32> to vector<16x1xf32>
    %251 = tpu.reciprocal %250 {approx = true} : vector<16x1xf32> -> vector<16x1xf32>
    %252 = vector.broadcast %251 : vector<16x1xf32> to vector<16x16xf32>
    %253 = arith.mulf %248, %252 : vector<16x16xf32>
    %cst_139 = arith.constant dense<0.000000e+00> : vector<16x8xf32>
    %254 = tpu.matmul %253, %239, %cst_139 {dimension_numbers = #tpu.dot_dimension_numbers<[1], [0], [0], [1], [0, 0, 1, 1], [], []>} : vector<16x16xf32>, vector<16x8xf32>, vector<16x8xf32> -> vector<16x8xf32>
    %255 = vector.extract_strided_slice %200 {offsets = [0, 24], sizes = [16, 8], strides = [1, 1]} : vector<16x96xf32> to vector<16x8xf32>
    %256 = vector.extract_strided_slice %200 {offsets = [0, 56], sizes = [16, 8], strides = [1, 1]} : vector<16x96xf32> to vector<16x8xf32>
    %257 = vector.extract_strided_slice %200 {offsets = [0, 88], sizes = [16, 8], strides = [1, 1]} : vector<16x96xf32> to vector<16x8xf32>
    %cst_140 = arith.constant dense<0.000000e+00> : vector<16x16xf32>
    %258 = tpu.matmul %255, %256, %cst_140 {dimension_numbers = #tpu.dot_dimension_numbers<[1], [1], [0], [0], [0, 0, 1, 0], [], []>} : vector<16x8xf32>, vector<16x8xf32>, vector<16x16xf32> -> vector<16x16xf32>
    %cst_141 = arith.constant 0.353553385 : f32
    %259 = vector.broadcast %cst_141 : f32 to vector<16x16xf32>
    %260 = arith.mulf %258, %259 : vector<16x16xf32>
    %261 = arith.addf %260, %20 : vector<16x16xf32>
    %cst_142 = arith.constant dense<0xFF800000> : vector<16xf32>
    %262 = vector.multi_reduction <maximumf>, %261, %cst_142 [1] : vector<16x16xf32> to vector<16xf32>
    %263 = vector.shape_cast %262 : vector<16xf32> to vector<16x1xf32>
    %264 = vector.broadcast %263 : vector<16x1xf32> to vector<16x16xf32>
    %265 = arith.subf %261, %264 : vector<16x16xf32>
    %266 = math.exp %265 : vector<16x16xf32>
    %cst_143 = arith.constant dense<0.000000e+00> : vector<16xf32>
    %267 = vector.multi_reduction <add>, %266, %cst_143 [1] : vector<16x16xf32> to vector<16xf32>
    %268 = vector.shape_cast %267 : vector<16xf32> to vector<16x1xf32>
    %269 = tpu.reciprocal %268 {approx = true} : vector<16x1xf32> -> vector<16x1xf32>
    %270 = vector.broadcast %269 : vector<16x1xf32> to vector<16x16xf32>
    %271 = arith.mulf %266, %270 : vector<16x16xf32>
    %cst_144 = arith.constant dense<0.000000e+00> : vector<16x8xf32>
    %272 = tpu.matmul %271, %257, %cst_144 {dimension_numbers = #tpu.dot_dimension_numbers<[1], [0], [0], [1], [0, 0, 1, 1], [], []>} : vector<16x16xf32>, vector<16x8xf32>, vector<16x8xf32> -> vector<16x8xf32>
    %273 = tpu.concatenate %218, %236, %254, %272 in 1 : vector<16x8xf32>, vector<16x8xf32>, vector<16x8xf32>, vector<16x8xf32> -> vector<16x32xf32>
    %274 = arith.truncf %273 : vector<16x32xf32> to vector<16x32xbf16>
    %cst_145 = arith.constant dense<0.000000e+00> : vector<16x32xf32>
    %275 = tpu.matmul %274, %179, %cst_145 {dimension_numbers = #tpu.dot_dimension_numbers<[1], [0], [0], [1], [0, 0, 1, 1], [], []>} : vector<16x32xbf16>, vector<32x32xbf16>, vector<16x32xf32> -> vector<16x32xf32>
    %276 = arith.addf %173, %275 : vector<16x32xf32>
    %277 = arith.addf %276, %187 : vector<16x32xf32>
    %cst_146 = arith.constant dense<0.000000e+00> : vector<16xf32>
    %278 = vector.multi_reduction <add>, %277, %cst_146 [1] : vector<16x32xf32> to vector<16xf32>
    %279 = vector.shape_cast %278 : vector<16xf32> to vector<16x1xf32>
    %cst_147 = arith.constant 3.200000e+01 : f32
    %280 = vector.broadcast %cst_147 : f32 to vector<16x1xf32>
    %281 = arith.divf %279, %280 : vector<16x1xf32>
    %282 = vector.broadcast %281 : vector<16x1xf32> to vector<16x32xf32>
    %283 = arith.subf %277, %282 : vector<16x32xf32>
    %284 = arith.mulf %283, %283 : vector<16x32xf32>
    %cst_148 = arith.constant dense<0.000000e+00> : vector<16xf32>
    %285 = vector.multi_reduction <add>, %284, %cst_148 [1] : vector<16x32xf32> to vector<16xf32>
    %286 = vector.shape_cast %285 : vector<16xf32> to vector<16x1xf32>
    %cst_149 = arith.constant 3.200000e+01 : f32
    %287 = vector.broadcast %cst_149 : f32 to vector<16x1xf32>
    %288 = arith.divf %286, %287 : vector<16x1xf32>
    %289 = vector.broadcast %281 : vector<16x1xf32> to vector<16x32xf32>
    %290 = arith.subf %277, %289 : vector<16x32xf32>
    %cst_150 = arith.constant 9.99999974E-6 : f32
    %291 = vector.broadcast %cst_150 : f32 to vector<16x1xf32>
    %292 = arith.addf %288, %291 : vector<16x1xf32>
    %293 = math.rsqrt %292 : vector<16x1xf32>
    %294 = vector.broadcast %293 : vector<16x1xf32> to vector<16x32xf32>
    %295 = arith.mulf %290, %294 : vector<16x32xf32>
    %296 = arith.mulf %295, %191 : vector<16x32xf32>
    %297 = arith.addf %296, %193 : vector<16x32xf32>
    %298 = arith.truncf %297 : vector<16x32xf32> to vector<16x32xbf16>
    %cst_151 = arith.constant dense<0.000000e+00> : vector<16x64xf32>
    %299 = tpu.matmul %298, %177, %cst_151 {dimension_numbers = #tpu.dot_dimension_numbers<[1], [0], [0], [1], [0, 0, 1, 1], [], []>} : vector<16x32xbf16>, vector<32x64xbf16>, vector<16x64xf32> -> vector<16x64xf32>
    %300 = arith.addf %299, %185 : vector<16x64xf32>
    %cst_152 = arith.constant 0.000000e+00 : f32
    %301 = vector.broadcast %cst_152 : f32 to vector<16x64xf32>
    %302 = arith.maximumf %300, %301 : vector<16x64xf32>
    %303 = arith.truncf %302 : vector<16x64xf32> to vector<16x64xbf16>
    %cst_153 = arith.constant dense<0.000000e+00> : vector<16x32xf32>
    %304 = tpu.matmul %303, %181, %cst_153 {dimension_numbers = #tpu.dot_dimension_numbers<[1], [0], [0], [1], [0, 0, 1, 1], [], []>} : vector<16x64xbf16>, vector<64x32xbf16>, vector<16x32xf32> -> vector<16x32xf32>
    %305 = arith.addf %297, %304 : vector<16x32xf32>
    %306 = arith.addf %305, %189 : vector<16x32xf32>
    %cst_154 = arith.constant dense<0.000000e+00> : vector<16xf32>
    %307 = vector.multi_reduction <add>, %306, %cst_154 [1] : vector<16x32xf32> to vector<16xf32>
    %308 = vector.shape_cast %307 : vector<16xf32> to vector<16x1xf32>
    %cst_155 = arith.constant 3.200000e+01 : f32
    %309 = vector.broadcast %cst_155 : f32 to vector<16x1xf32>
    %310 = arith.divf %308, %309 : vector<16x1xf32>
    %311 = vector.broadcast %310 : vector<16x1xf32> to vector<16x32xf32>
    %312 = arith.subf %306, %311 : vector<16x32xf32>
    %313 = arith.mulf %312, %312 : vector<16x32xf32>
    %cst_156 = arith.constant dense<0.000000e+00> : vector<16xf32>
    %314 = vector.multi_reduction <add>, %313, %cst_156 [1] : vector<16x32xf32> to vector<16xf32>
    %315 = vector.shape_cast %314 : vector<16xf32> to vector<16x1xf32>
    %cst_157 = arith.constant 3.200000e+01 : f32
    %316 = vector.broadcast %cst_157 : f32 to vector<16x1xf32>
    %317 = arith.divf %315, %316 : vector<16x1xf32>
    %318 = vector.broadcast %310 : vector<16x1xf32> to vector<16x32xf32>
    %319 = arith.subf %306, %318 : vector<16x32xf32>
    %cst_158 = arith.constant 9.99999974E-6 : f32
    %320 = vector.broadcast %cst_158 : f32 to vector<16x1xf32>
    %321 = arith.addf %317, %320 : vector<16x1xf32>
    %322 = math.rsqrt %321 : vector<16x1xf32>
    %323 = vector.broadcast %322 : vector<16x1xf32> to vector<16x32xf32>
    %324 = arith.mulf %319, %323 : vector<16x32xf32>
    %325 = arith.mulf %324, %195 : vector<16x32xf32>
    %326 = arith.addf %325, %197 : vector<16x32xf32>
    %c0_159 = arith.constant 0 : index
    %c0_160 = arith.constant 0 : index
    %327 = vector.load %arg6[%c0_159, %c0_160] : memref<32x10xbf16, #tpu.memory_space<vmem>>, vector<32x10xbf16>
    %328 = arith.truncf %326 : vector<16x32xf32> to vector<16x32xbf16>
    %cst_161 = arith.constant dense<0.000000e+00> : vector<16x10xf32>
    %329 = tpu.matmul %328, %327, %cst_161 {dimension_numbers = #tpu.dot_dimension_numbers<[1], [0], [0], [1], [0, 0, 1, 1], [], []>} : vector<16x32xbf16>, vector<32x10xbf16>, vector<16x10xf32> -> vector<16x10xf32>
    %c0_162 = arith.constant 0 : index
    %c0_163 = arith.constant 0 : index
    %330 = vector.load %arg7[%c0_162, %c0_163] : memref<2x256xf32, #tpu.memory_space<vmem>>, vector<2x16xf32>
    %c0_164 = arith.constant 0 : index
    %c128_165 = arith.constant 128 : index
    %331 = vector.load %arg7[%c0_164, %c128_165] : memref<2x256xf32, #tpu.memory_space<vmem>>, vector<2x10xf32>
    %cst_166 = arith.constant dense<0.000000e+00> : vector<2x10xf32>
    %332 = tpu.matmul %330, %329, %cst_166 {dimension_numbers = #tpu.dot_dimension_numbers<[1], [0], [0], [1], [0, 0, 1, 1], [], []>} : vector<2x16xf32>, vector<16x10xf32>, vector<2x10xf32> -> vector<2x10xf32>
    %333 = arith.addf %332, %331 : vector<2x10xf32>
    %cst_167 = arith.constant dense<0xFF800000> : vector<2xf32>
    %334 = vector.multi_reduction <maximumf>, %333, %cst_167 [1] : vector<2x10xf32> to vector<2xf32>
    %335 = vector.shape_cast %334 : vector<2xf32> to vector<2x1xf32>
    %336 = vector.broadcast %335 : vector<2x1xf32> to vector<2x10xf32>
    %337 = arith.subf %333, %336 : vector<2x10xf32>
    %338 = math.exp %337 : vector<2x10xf32>
    %cst_168 = arith.constant dense<0.000000e+00> : vector<2xf32>
    %339 = vector.multi_reduction <add>, %338, %cst_168 [1] : vector<2x10xf32> to vector<2xf32>
    %340 = vector.shape_cast %339 : vector<2xf32> to vector<2x1xf32>
    %341 = math.log %340 : vector<2x1xf32>
    %342 = vector.broadcast %341 : vector<2x1xf32> to vector<2x10xf32>
    %343 = arith.subf %337, %342 : vector<2x10xf32>
    %c0_169 = arith.constant 0 : index
    %c0_170 = arith.constant 0 : index
    %344 = vector.load %arg8[%c0_169, %c0_170] : memref<2x10xf32, #tpu.memory_space<vmem>>, vector<2x10xf32>
    tpu.vector_store %arg8[%c0_169, %c0_170], %343 {strides = array<i32>} : memref<2x10xf32, #tpu.memory_space<vmem>>, vector<2x10xf32>,
    return
  }
}

</mosaic_0001>

<llo_original>
// kernel: pallas_forward.1
$region0: #{pallas_forward.1}
  #allocation0 [shape = 'u32[]', space=smem, size = 0x4, offset = 0x4, fixed_abs, tag = 'smem constant byte address 0x4 - core index']
  #allocation1 [shape = 'u32[144,128]{1,0:T(1,128)}', space=vmem, size = 0x12000, scoped, tag = 'internal scratch']
  %s0 = inlined_call_operand.vmem [shape: s32[16,1], index: 0, kind: input, shape index: {}]
  %s1 = inlined_call_operand.vmem [shape: f32[50,32], index: 1, kind: input, shape index: {}]
  %s2 = inlined_call_operand.vmem [shape: f32[16,32], index: 2, kind: input, shape index: {}]
  %s3 = inlined_call_operand.vmem [shape: bf16[2,32,384], index: 3, kind: input, shape index: {}]
  %s4 = inlined_call_operand.vmem [shape: bf16[2,64,32], index: 4, kind: input, shape index: {}]
  %s5 = inlined_call_operand.hbm [shape: f32[2,8,16,128], index: 5, kind: input, shape index: {}]
  %s6 = inlined_call_operand.vmem [shape: bf16[32,10], index: 6, kind: input, shape index: {}]
  %s7 = inlined_call_operand.vmem [shape: f32[2,256], index: 7, kind: input, shape index: {}]
  %s8 = inlined_call_operand.hbm [shape: f32[2,10], index: 8, kind: output, shape index: {}]
  %s9 = sld [smem:[#allocation0]]
  $region46: #{pallas_forward.1} parent=0
    _
  %s11 = ssub.s32 1, %s9
  %s12 = scalar_select 0, %s11, %s9
  $region1: #{pallas_forward.1} parent=0
    #allocation2 [shape = 'u8[131072]{0}', space=vmem, size = 0x20000, scoped, tag = 'input window, operand 5, single buffered']
    #allocation3 [shape = 's32[1]{0}', space=sflag, size = 0x4, scoped, tag = 'scoped memory for pallas_forward.1']
    #allocation4 [shape = 's32[1]{0}', space=sflag, size = 0x4, scoped, tag = 'scoped memory for pallas_forward.1']
    #allocation5 [shape = 'u8[1024]{0}', space=vmem, size = 0x400, scoped, tag = 'output window, operand 0, single buffered']
    %13 = vsyncpa [#allocation3], 0
    %14 = vsyncpa [#allocation4], 0
    // Predicated region
    $region2: #{pallas_forward.1} parent=1 // pred_check
      _
    $region3: #{pallas_forward.1} parent=1 // pred_check_branch
      %16 = sbr.rel (0) target = $region5
    $region4: #{pallas_forward.1} parent=1 // pred_region
      _
    $region5: #{pallas_forward.1} parent=1 // pred_fallthru
      _
    // Predicated region
    $region6: #{pallas_forward.1} parent=1 // pred_check
      _
    $region7: #{pallas_forward.1} parent=1 // pred_check_branch
      %18 = sbr.rel (0) target = $region9
    $region8: #{pallas_forward.1} parent=1 // pred_region
      _
    $region9: #{pallas_forward.1} parent=1 // pred_fallthru
      _
    // Predicated region
    $region10: #{pallas_forward.1} parent=1 // pred_check
      _
    $region11: #{pallas_forward.1} parent=1 // pred_check_branch
      %20 = sbr.rel (0) target = $region13
    $region12: #{pallas_forward.1} parent=1 // pred_region
      _
    $region13: #{pallas_forward.1} parent=1 // pred_fallthru
      _
    // Predicated region
    $region14: #{pallas_forward.1} parent=1 // pred_check
      _
    $region15: #{pallas_forward.1} parent=1 // pred_check_branch
      %22 = sbr.rel (0) target = $region17
    $region16: #{pallas_forward.1} parent=1 // pred_region
      _
    $region17: #{pallas_forward.1} parent=1 // pred_fallthru
      _
    // Predicated region
    $region18: #{pallas_forward.1} parent=1 // pred_check
      _
    $region19: #{pallas_forward.1} parent=1 // pred_check_branch
      %24 = sbr.rel (0) target = $region21
    $region20: #{pallas_forward.1} parent=1 // pred_region
      _
    $region21: #{pallas_forward.1} parent=1 // pred_fallthru
      _
    // Predicated region
    $region22: #{pallas_forward.1} parent=1 // pred_check
      _
    $region23: #{pallas_forward.1} parent=1 // pred_check_branch
      %26 = sbr.rel (0) target = $region25
    $region24: #{pallas_forward.1} parent=1 // pred_region
      %s28 = ssub.s32 4096, 4096
      %29 = vsyncadd [#allocation3], %s28
      %s30 = sshll.u32 [#allocation2], 4
      %s31 = int_to_ptr.vmem [resolvable:$true] %s30
      %36 = dma.hbm_to_vmem [thread:$0]  %s5, 4096, %s31, [#allocation3], 128, 128, 8
    $region25: #{pallas_forward.1} parent=1 // pred_fallthru
      _
    // Predicated region
    $region26: #{pallas_forward.1} parent=1 // pred_check
      _
    $region27: #{pallas_forward.1} parent=1 // pred_check_branch
      %38 = sbr.rel (0) target = $region29
    $region28: #{pallas_forward.1} parent=1 // pred_region
      _
    $region29: #{pallas_forward.1} parent=1 // pred_fallthru
      _
    // Predicated region
    $region30: #{pallas_forward.1} parent=1 // pred_check
      _
    $region31: #{pallas_forward.1} parent=1 // pred_check_branch
      %40 = sbr.rel (0) target = $region33
    $region32: #{pallas_forward.1} parent=1 // pred_region
      _
    $region33: #{pallas_forward.1} parent=1 // pred_fallthru
      _
    // Predicated region
    $region34: #{pallas_forward.1} parent=1 // pred_check
      _
    $region35: #{pallas_forward.1} parent=1 // pred_check_branch
      %42 = sbr.rel (0) target = $region37
    $region36: #{pallas_forward.1} parent=1 // pred_region
      %43 = dma.done [#allocation3], 4096
    $region37: #{pallas_forward.1} parent=1 // pred_fallthru
      _
    %v45 = vld [vmem:[%s0] sm:$0xff]
    %v46 = vld [vmem:[%s0 + $0x8] sm:$0xff]
    %v47 = vlaneseq
    %v48 = vand.u32 %v47, 127
    %49 = vset.pattern.permute.xlu0 0
    %50 = vperm.xlu0 %49, %v45
    %v51 = vpop.permute.xlu0 %50
    %52 = vset.pattern.permute.xlu0 0
    %53 = vperm.xlu0 %52, %v46
    %v54 = vpop.permute.xlu0 %53
    %vm55 = vcmp.eq.s32.totalorder %v48, %v51
    %vm56 = vcmp.eq.s32.totalorder %v48, %v54
    %v57 = vsel %vm55, 1.0, 0.0
    %v58 = vsel %vm56, 1.0, 0.0
    %v59 = vld [vmem:[%s1] sm:$0xff]
    %v60 = vld [vmem:[%s1 + $0x8] sm:$0xff]
    %v61 = vld [vmem:[%s1 + $0x10] sm:$0xff]
    %v62 = vld [vmem:[%s1 + $0x18] sm:$0xff]
    %v63 = vld [vmem:[%s1 + $0x20] sm:$0xff]
    %v64 = vld [vmem:[%s1 + $0x28] sm:$0xff]
    %v65 = vld [vmem:[%s1 + $0x30] sm:$0x3]
    %v66 = vld [vmem:[%s2] sm:$0xff]
    %v67 = vld [vmem:[%s2 + $0x8] sm:$0xff]
    %vm68 = vcmask 408576
    %v70 = vsel %vm68, %v57, 0
    %v73 = vsel %vm68, %v58, 0
    %vm75 = vcmask 1041408
    %v77 = vsel %vm75, %v65, 0
    %79 = vmatprep.subr.mxu0 0.0
    %80 = vmatpush1.msra.mxu0 %v59
    %81 = vmatprep.subr.mxu0 0.0
    %82 = vmatpush1.msra.mxu0 %v60
    %83 = vmatprep.subr.mxu0 0.0
    %84 = vmatpush1.msra.mxu0 %v61
    %85 = vmatprep.subr.mxu0 0.0
    %86 = vmatpush1.msra.mxu0 %v62
    %87 = vmatprep.subr.mxu0 0.0
    %88 = vmatpush1.msra.mxu0 %v63
    %89 = vmatprep.subr.mxu0 0.0
    %90 = vmatpush1.msra.mxu0 %v64
    %91 = vmatprep.subr.mxu0 0.0
    %92 = vmatpush1.msra.mxu0 %v77
    %93 = vmatprep.subr.mxu0 0.0
    %94 = vmatpush1.msra.mxu0 0.0
    %95 = vmatprep.subr.mxu0 0.0
    %96 = vmatpush1.msra.mxu0 0.0
    %97 = vmatprep.subr.mxu0 0.0
    %98 = vmatpush1.msra.mxu0 0.0
    %99 = vmatprep.subr.mxu0 0.0
    %100 = vmatpush1.msra.mxu0 0.0
    %101 = vmatprep.subr.mxu0 0.0
    %102 = vmatpush1.msra.mxu0 0.0
    %103 = vmatprep.subr.mxu0 0.0
    %104 = vmatpush1.msra.mxu0 0.0
    %105 = vmatprep.subr.mxu0 0.0
    %106 = vmatpush1.msra.mxu0 0.0
    %107 = vmatprep.subr.mxu0 0.0
    %108 = vmatpush1.msra.mxu0 0.0
    %109 = vmatprep.subr.mxu0 0.0
    %110 = vmatpush1.msra.mxu0 0.0
    %111 = vmatprep.subr.mxu0 0.0
    %112 = vmatpush1.msra.mxu0 0.0
    %113 = vmatprep.subr.mxu0 0.0
    %114 = vmatpush1.msra.mxu0 0.0
    %115 = vmatprep.subr.mxu0 0.0
    %116 = vmatpush1.msra.mxu0 0.0
    %117 = vmatprep.subr.mxu0 0.0
    %118 = vmatpush1.msra.mxu0 0.0
    %119 = vmatprep.subr.mxu0 0.0
    %120 = vmatpush1.msra.mxu0 0.0
    %121 = vmatprep.subr.mxu0 0.0
    %122 = vmatpush1.msra.mxu0 0.0
    %123 = vmatprep.subr.mxu0 0.0
    %124 = vmatpush1.msra.mxu0 0.0
    %125 = vmatprep.subr.mxu0 0.0
    %126 = vmatpush1.msra.mxu0 0.0
    %127 = vmatprep.subr.mxu0 0.0
    %128 = vmatpush1.msra.mxu0 0.0
    %129 = vmatprep.subr.mxu0 0.0
    %130 = vmatpush1.msra.mxu0 0.0
    %131 = vmatprep.subr.mxu0 0.0
    %132 = vmatpush1.msra.mxu0 0.0
    %133 = vmatprep.subr.mxu0 0.0
    %134 = vmatpush1.msra.mxu0 0.0
    %135 = vmatprep.subr.mxu0 0.0
    %136 = vmatpush1.msra.mxu0 0.0
    %137 = vmatprep.subr.mxu0 0.0
    %138 = vmatpush1.msra.mxu0 0.0
    %139 = vmatprep.subr.mxu0 0.0
    %140 = vmatpush1.msra.mxu0 0.0
    %141 = vmatprep.subr.mxu0 0.0
    %142 = vmatpush1.msra.mxu0 0.0
    %143 = vmatprep.mubr.f32.mxu0 0.0
    %144 = vmatmul.mubr.f32.gmra.mrb[0].mxu0 %v70
    %v145 = vpop.f32.mrb[0].mxu0
    %v146 = vadd.f32 %v66, %v145
    %v147 = vpop.f32.mrb[0].mxu0
    %148 = vmatprep.mubr.f32.mxu0 0.0
    %149 = vmatmul.mubr.f32.gmra.mrb[0].mxu0 %v73
    %v150 = vpop.f32.mrb[0].mxu0
    %v151 = vadd.f32 %v67, %v150
    %v152 = vpop.f32.mrb[0].mxu0
    %153 = vdwg.mxu0
    %v154 = vlaneseq
    %v155 = vshrl.u32 %v154, 7
    %v156 = vadd.s32 %v155, 8
    %v157 = vshra.s32 %v155, 3
    %v158 = vshra.s32 %v156, 3
    %v159 = vshra.s32 %v48, 3
    %vm160 = vcmp.eq.s32.totalorder %v157, %v159
    %vm161 = vcmp.eq.s32.totalorder %v158, %v159
    %v162 = vsel %vm160, 0.0, -1e+30
    %v163 = vsel %vm161, 0.0, -1e+30
    %v164 = vld [vmem:[%s3] sm:$0xf]
    %v165 = vld [vmem:[%s3 + $0xc] sm:$0xf]
    %v166 = vld [vmem:[%s3 + $0x18] sm:$0xf]
    %v167 = vld [vmem:[%s3 + $0x24] sm:$0xf]
    %v168 = vld [vmem:[%s3 + $0x4] sm:$0xf]
    %v169 = vld [vmem:[%s3 + $0x10] sm:$0xf]
    %v170 = vld [vmem:[%s3 + $0x1c] sm:$0xf]
    %v171 = vld [vmem:[%s3 + $0x28] sm:$0xf]
    %v172 = vld [vmem:[%s3 + $0x8] sm:$0xf]
    %v173 = vld [vmem:[%s3 + $0x14] sm:$0xf]
    %v174 = vld [vmem:[%s3 + $0x20] sm:$0xf]
    %v175 = vld [vmem:[%s3 + $0x2c] sm:$0xf]
    %v176 = vld [vmem:[%s4] sm:$0xf]
    %v177 = vld [vmem:[%s4 + $0x4] sm:$0xf]
    %v178 = vld [vmem:[%s4 + $0x8] sm:$0xf]
    %v179 = vld [vmem:[%s4 + $0xc] sm:$0xf]
    %v180 = vld [vmem:[%s4 + $0x10] sm:$0xf]
    %v181 = vld [vmem:[%s4 + $0x14] sm:$0xf]
    %v182 = vld [vmem:[%s4 + $0x18] sm:$0xf]
    %v183 = vld [vmem:[%s4 + $0x1c] sm:$0xf]
    %v184 = vld [vmem:[#allocation2] sm:$0xff]
    %v185 = vld [vmem:[#allocation2 + $0x8] sm:$0xff]
    %s186 = scalar_lea.vmem [#allocation2], 16
    %v187 = vld [vmem:[%s186] sm:$0xff]
    %v188 = vld [vmem:[%s186 + $0x8] sm:$0xff]
    %s189 = scalar_lea.vmem [#allocation2], 32
    %v190 = vld [vmem:[%s189] sm:$0xff]
    %v191 = vld [vmem:[%s189 + $0x8] sm:$0xff]
    %s192 = scalar_lea.vmem [#allocation2], 48
    %v193 = vld [vmem:[%s192] sm:$0xff]
    %v194 = vld [vmem:[%s192 + $0x8] sm:$0xff]
    %s195 = scalar_lea.vmem [#allocation2], 64
    %v196 = vld [vmem:[%s195] sm:$0xff]
    %v197 = vld [vmem:[%s195 + $0x8] sm:$0xff]
    %s198 = scalar_lea.vmem [#allocation2], 80
    %v199 = vld [vmem:[%s198] sm:$0xff]
    %v200 = vld [vmem:[%s198 + $0x8] sm:$0xff]
    %s201 = scalar_lea.vmem [#allocation2], 96
    %v202 = vld [vmem:[%s201] sm:$0xff]
    %v203 = vld [vmem:[%s201 + $0x8] sm:$0xff]
    %s204 = scalar_lea.vmem [#allocation2], 112
    %v205 = vld [vmem:[%s204] sm:$0xff]
    %v206 = vld [vmem:[%s204 + $0x8] sm:$0xff]
    %v207 = vpack.c.bf16 %v151, %v146
    %v212 = vunpack.c.l.b16 %v164
    %v213 = vunpack.c.l.b16 %v165
    %v214 = vunpack.c.l.b16 %v166
    %v215 = vunpack.c.l.b16 %v167
    %v216 = vpack.c.b16 %v213, %v212
    %v217 = vpack.c.b16 %v215, %v214
    %vm220 = vcmask 261120
    %v222 = vsel %vm220, %v207, 0
    %224 = vmatprep.subr.bf16.mxu0 0
    %225 = vmatpush1.bf16.msra.mxu0 %v216
    %226 = vmatprep.subr.bf16.mxu0 0
    %227 = vmatpush1.bf16.msra.mxu0 %v217
    %228 = vmatprep.subr.bf16.mxu0 0
    %229 = vmatpush1.bf16.msra.mxu0 0
    %230 = vmatprep.subr.bf16.mxu0 0
    %231 = vmatpush1.bf16.msra.mxu0 0
    %232 = vmatprep.subr.bf16.mxu0 0
    %233 = vmatpush1.bf16.msra.mxu0 0
    %234 = vmatprep.subr.bf16.mxu0 0
    %235 = vmatpush1.bf16.msra.mxu0 0
    %236 = vmatprep.subr.bf16.mxu0 0
    %237 = vmatpush1.bf16.msra.mxu0 0
    %238 = vmatprep.subr.bf16.mxu0 0
    %239 = vmatpush1.bf16.msra.mxu0 0
    %240 = vmatprep.subr.bf16.mxu0 0
    %241 = vmatpush1.bf16.msra.mxu0 0
    %242 = vmatprep.subr.bf16.mxu0 0
    %243 = vmatpush1.bf16.msra.mxu0 0
    %244 = vmatprep.subr.bf16.mxu0 0
    %245 = vmatpush1.bf16.msra.mxu0 0
    %246 = vmatprep.subr.bf16.mxu0 0
    %247 = vmatpush1.bf16.msra.mxu0 0
    %248 = vmatprep.subr.bf16.mxu0 0
    %249 = vmatpush1.bf16.msra.mxu0 0
    %250 = vmatprep.subr.bf16.mxu0 0
    %251 = vmatpush1.bf16.msra.mxu0 0
    %252 = vmatprep.subr.bf16.mxu0 0
    %253 = vmatpush1.bf16.msra.mxu0 0
    %254 = vmatprep.subr.bf16.mxu0 0
    %255 = vmatpush1.bf16.msra.mxu0 0
    %256 = vmatprep.mubr.bf16.mxu0 0
    %257 = vmatmul.mubr.bf16.gmra.mrb[0].mxu0 %v222
    %v258 = vpop.f32.mrb[0].mxu0
    %v259 = vadd.f32 %v184, %v258
    %v260 = vpop.f32.mrb[0].mxu0
    %v261 = vpop.f32.mrb[0].mxu0
    %v262 = vadd.f32 %v185, %v261
    %v263 = vpop.f32.mrb[0].mxu0
    %264 = vdwg.mxu0
    %267 = vrot.lane.b32.xlu0 %v259, 96
    %v268 = vpop.permute.xlu0 %267
    %269 = vrot.lane.b32.xlu0 %v262, 96
    %v270 = vpop.permute.xlu0 %269
    %vm271 = vcmask 64512
    %v272 = vsel %vm271, %v259, 0
    %v274 = vsel %vm271, %v262, 0
    %v276 = vsel %vm271, %v268, 0
    %v278 = vsel %vm271, %v270, 0
    %280 = vmatprep.subr.mxu0 0.0
    %281 = vmatpush1.xpose.msra.mxu0 %v276
    %282 = vmatprep.subr.mxu0 0.0
    %283 = vmatpush1.xpose.msra.mxu0 %v278
    %284 = vmatprep.subr.mxu0 0.0
    %285 = vmatpush1.xpose.msra.mxu0 0.0
    %286 = vmatprep.subr.mxu0 0.0
    %287 = vmatpush1.xpose.msra.mxu0 0.0
    %288 = vmatprep.subr.mxu0 0.0
    %289 = vmatpush1.xpose.msra.mxu0 0.0
    %290 = vmatprep.subr.mxu0 0.0
    %291 = vmatpush1.xpose.msra.mxu0 0.0
    %292 = vmatprep.subr.mxu0 0.0
    %293 = vmatpush1.xpose.msra.mxu0 0.0
    %294 = vmatprep.subr.mxu0 0.0
    %295 = vmatpush1.xpose.msra.mxu0 0.0
    %296 = vmatprep.subr.mxu0 0.0
    %297 = vmatpush1.xpose.msra.mxu0 0.0
    %298 = vmatprep.subr.mxu0 0.0
    %299 = vmatpush1.xpose.msra.mxu0 0.0
    %300 = vmatprep.subr.mxu0 0.0
    %301 = vmatpush1.xpose.msra.mxu0 0.0
    %302 = vmatprep.subr.mxu0 0.0
    %303 = vmatpush1.xpose.msra.mxu0 0.0
    %304 = vmatprep.subr.mxu0 0.0
    %305 = vmatpush1.xpose.msra.mxu0 0.0
    %306 = vmatprep.subr.mxu0 0.0
    %307 = vmatpush1.xpose.msra.mxu0 0.0
    %308 = vmatprep.subr.mxu0 0.0
    %309 = vmatpush1.xpose.msra.mxu0 0.0
    %310 = vmatprep.subr.mxu0 0.0
    %311 = vmatpush1.xpose.msra.mxu0 0.0
    %312 = vmatprep.subr.mxu0 0.0
    %313 = vmatpush1.xpose.msra.mxu0 0.0
    %314 = vmatprep.subr.mxu0 0.0
    %315 = vmatpush1.xpose.msra.mxu0 0.0
    %316 = vmatprep.subr.mxu0 0.0
    %317 = vmatpush1.xpose.msra.mxu0 0.0
    %318 = vmatprep.subr.mxu0 0.0
    %319 = vmatpush1.xpose.msra.mxu0 0.0
    %320 = vmatprep.subr.mxu0 0.0
    %321 = vmatpush1.xpose.msra.mxu0 0.0
    %322 = vmatprep.subr.mxu0 0.0
    %323 = vmatpush1.xpose.msra.mxu0 0.0
    %324 = vmatprep.subr.mxu0 0.0
    %325 = vmatpush1.xpose.msra.mxu0 0.0
    %326 = vmatprep.subr.mxu0 0.0
    %327 = vmatpush1.xpose.msra.mxu0 0.0
    %328 = vmatprep.subr.mxu0 0.0
    %329 = vmatpush1.xpose.msra.mxu0 0.0
    %330 = vmatprep.subr.mxu0 0.0
    %331 = vmatpush1.xpose.msra.mxu0 0.0
    %332 = vmatprep.subr.mxu0 0.0
    %333 = vmatpush1.xpose.msra.mxu0 0.0
    %334 = vmatprep.subr.mxu0 0.0
    %335 = vmatpush1.xpose.msra.mxu0 0.0
    %336 = vmatprep.subr.mxu0 0.0
    %337 = vmatpush1.xpose.msra.mxu0 0.0
    %338 = vmatprep.subr.mxu0 0.0
    %339 = vmatpush1.xpose.msra.mxu0 0.0
    %340 = vmatprep.subr.mxu0 0.0
    %341 = vmatpush1.xpose.msra.mxu0 0.0
    %342 = vmatprep.subr.mxu0 0.0
    %343 = vmatpush1.xpose.msra.mxu0 0.0
    %344 = vmatprep.mubr.f32.mxu0 0.0
    %345 = vmatmul.mubr.f32.gmra.mrb[0].mxu0 %v272
    %v346 = vpop.f32.mrb[0].mxu0
    %v347 = vadd.f32 0.0, %v346
    %v348 = vpop.f32.mrb[0].mxu0
    %349 = vmatprep.mubr.f32.mxu0 0.0
    %350 = vmatmul.mubr.f32.gmra.mrb[0].mxu0 %v274
    %v351 = vpop.f32.mrb[0].mxu0
    %v352 = vadd.f32 0.0, %v351
    %v353 = vpop.f32.mrb[0].mxu0
    %354 = vdwg.mxu0
    %v355 = vmul.f32 %v347, 0.35355338
    %v356 = vmul.f32 %v352, 0.35355338
    %v357 = vadd.f32 %v355, %v162
    %v358 = vadd.f32 %v356, %v163
    %vm359 = vcmask 130048
    %v360 = vsel %vm359, %v357, -inf
    %361 = vmax.xlane.f32.xlu0 %v360
    %v362 = vpop.xlane.xlu0 %361
    %v363 = vsel %vm359, %v358, -inf
    %364 = vmax.xlane.f32.xlu0 %v363
    %v365 = vpop.xlane.xlu0 %364
    %v366 = vsub.f32 %v357, %v362
    %v367 = vsub.f32 %v358, %v365
    %v368 = vmul.f32 %v366, 1.442695
    %v369 = vpow.pop %v368
    %v370 = vmul.f32 %v367, 1.442695
    %v371 = vpow.pop %v370
    %v372 = vsel %vm359, %v369, 0.0
    %373 = vadd.xlane.f32.xlu0 %v372
    %v374 = vpop.xlane.xlu0 %373
    %v375 = vsel %vm359, %v371, 0.0
    %376 = vadd.xlane.f32.xlu0 %v375
    %v377 = vpop.xlane.xlu0 %376
    %v378 = vrcp.pop %v374
    %v379 = vrcp.pop %v377
    %v380 = vmul.f32 %v369, %v378
    %v381 = vmul.f32 %v371, %v379
    %382 = vrot.lane.b32.xlu0 %v259, 64
    %v383 = vpop.permute.xlu0 %382
    %384 = vrot.lane.b32.xlu0 %v262, 64
    %v385 = vpop.permute.xlu0 %384
    %v389 = vsel %vm359, %v380, 0
    %v392 = vsel %vm359, %v381, 0
    %394 = vmatprep.subr.mxu0 0.0
    %395 = vmatpush1.msra.mxu0 %v383
    %396 = vmatprep.subr.mxu0 0.0
    %397 = vmatpush1.msra.mxu0 %v385
    %398 = vmatprep.subr.mxu0 0.0
    %399 = vmatpush1.msra.mxu0 0.0
    %400 = vmatprep.subr.mxu0 0.0
    %401 = vmatpush1.msra.mxu0 0.0
    %402 = vmatprep.subr.mxu0 0.0
    %403 = vmatpush1.msra.mxu0 0.0
    %404 = vmatprep.subr.mxu0 0.0
    %405 = vmatpush1.msra.mxu0 0.0
    %406 = vmatprep.subr.mxu0 0.0
    %407 = vmatpush1.msra.mxu0 0.0
    %408 = vmatprep.subr.mxu0 0.0
    %409 = vmatpush1.msra.mxu0 0.0
    %410 = vmatprep.subr.mxu0 0.0
    %411 = vmatpush1.msra.mxu0 0.0
    %412 = vmatprep.subr.mxu0 0.0
    %413 = vmatpush1.msra.mxu0 0.0
    %414 = vmatprep.subr.mxu0 0.0
    %415 = vmatpush1.msra.mxu0 0.0
    %416 = vmatprep.subr.mxu0 0.0
    %417 = vmatpush1.msra.mxu0 0.0
    %418 = vmatprep.subr.mxu0 0.0
    %419 = vmatpush1.msra.mxu0 0.0
    %420 = vmatprep.subr.mxu0 0.0
    %421 = vmatpush1.msra.mxu0 0.0
    %422 = vmatprep.subr.mxu0 0.0
    %423 = vmatpush1.msra.mxu0 0.0
    %424 = vmatprep.subr.mxu0 0.0
    %425 = vmatpush1.msra.mxu0 0.0
    %426 = vmatprep.subr.mxu0 0.0
    %427 = vmatpush1.msra.mxu0 0.0
    %428 = vmatprep.subr.mxu0 0.0
    %429 = vmatpush1.msra.mxu0 0.0
    %430 = vmatprep.subr.mxu0 0.0
    %431 = vmatpush1.msra.mxu0 0.0
    %432 = vmatprep.subr.mxu0 0.0
    %433 = vmatpush1.msra.mxu0 0.0
    %434 = vmatprep.subr.mxu0 0.0
    %435 = vmatpush1.msra.mxu0 0.0
    %436 = vmatprep.subr.mxu0 0.0
    %437 = vmatpush1.msra.mxu0 0.0
    %438 = vmatprep.subr.mxu0 0.0
    %439 = vmatpush1.msra.mxu0 0.0
    %440 = vmatprep.subr.mxu0 0.0
    %441 = vmatpush1.msra.mxu0 0.0
    %442 = vmatprep.subr.mxu0 0.0
    %443 = vmatpush1.msra.mxu0 0.0
    %444 = vmatprep.subr.mxu0 0.0
    %445 = vmatpush1.msra.mxu0 0.0
    %446 = vmatprep.subr.mxu0 0.0
    %447 = vmatpush1.msra.mxu0 0.0
    %448 = vmatprep.subr.mxu0 0.0
    %449 = vmatpush1.msra.mxu0 0.0
    %450 = vmatprep.subr.mxu0 0.0
    %451 = vmatpush1.msra.mxu0 0.0
    %452 = vmatprep.subr.mxu0 0.0
    %453 = vmatpush1.msra.mxu0 0.0
    %454 = vmatprep.subr.mxu0 0.0
    %455 = vmatpush1.msra.mxu0 0.0
    %456 = vmatprep.subr.mxu0 0.0
    %457 = vmatpush1.msra.mxu0 0.0
    %458 = vmatprep.mubr.f32.mxu0 0.0
    %459 = vmatmul.mubr.f32.gmra.mrb[0].mxu0 %v389
    %v460 = vpop.f32.mrb[0].mxu0
    %v461 = vadd.f32 0.0, %v460
    %v462 = vpop.f32.mrb[0].mxu0
    %463 = vmatprep.mubr.f32.mxu0 0.0
    %464 = vmatmul.mubr.f32.gmra.mrb[0].mxu0 %v392
    %v465 = vpop.f32.mrb[0].mxu0
    %v466 = vadd.f32 0.0, %v465
    %v467 = vpop.f32.mrb[0].mxu0
    %468 = vdwg.mxu0
    %469 = vrot.lane.b32.xlu0 %v259, 120
    %v470 = vpop.permute.xlu0 %469
    %471 = vrot.lane.b32.xlu0 %v262, 120
    %v472 = vpop.permute.xlu0 %471
    %473 = vrot.lane.b32.xlu0 %v259, 88
    %v474 = vpop.permute.xlu0 %473
    %475 = vrot.lane.b32.xlu0 %v262, 88
    %v476 = vpop.permute.xlu0 %475
    %v477 = vsel %vm271, %v470, 0
    %v479 = vsel %vm271, %v472, 0
    %v481 = vsel %vm271, %v474, 0
    %v483 = vsel %vm271, %v476, 0
    %485 = vmatprep.subr.mxu0 0.0
    %486 = vmatpush1.xpose.msra.mxu0 %v481
    %487 = vmatprep.subr.mxu0 0.0
    %488 = vmatpush1.xpose.msra.mxu0 %v483
    %489 = vmatprep.subr.mxu0 0.0
    %490 = vmatpush1.xpose.msra.mxu0 0.0
    %491 = vmatprep.subr.mxu0 0.0
    %492 = vmatpush1.xpose.msra.mxu0 0.0
    %493 = vmatprep.subr.mxu0 0.0
    %494 = vmatpush1.xpose.msra.mxu0 0.0
    %495 = vmatprep.subr.mxu0 0.0
    %496 = vmatpush1.xpose.msra.mxu0 0.0
    %497 = vmatprep.subr.mxu0 0.0
    %498 = vmatpush1.xpose.msra.mxu0 0.0
    %499 = vmatprep.subr.mxu0 0.0
    %500 = vmatpush1.xpose.msra.mxu0 0.0
    %501 = vmatprep.subr.mxu0 0.0
    %502 = vmatpush1.xpose.msra.mxu0 0.0
    %503 = vmatprep.subr.mxu0 0.0
    %504 = vmatpush1.xpose.msra.mxu0 0.0
    %505 = vmatprep.subr.mxu0 0.0
    %506 = vmatpush1.xpose.msra.mxu0 0.0
    %507 = vmatprep.subr.mxu0 0.0
    %508 = vmatpush1.xpose.msra.mxu0 0.0
    %509 = vmatprep.subr.mxu0 0.0
    %510 = vmatpush1.xpose.msra.mxu0 0.0
    %511 = vmatprep.subr.mxu0 0.0
    %512 = vmatpush1.xpose.msra.mxu0 0.0
    %513 = vmatprep.subr.mxu0 0.0
    %514 = vmatpush1.xpose.msra.mxu0 0.0
    %515 = vmatprep.subr.mxu0 0.0
    %516 = vmatpush1.xpose.msra.mxu0 0.0
    %517 = vmatprep.subr.mxu0 0.0
    %518 = vmatpush1.xpose.msra.mxu0 0.0
    %519 = vmatprep.subr.mxu0 0.0
    %520 = vmatpush1.xpose.msra.mxu0 0.0
    %521 = vmatprep.subr.mxu0 0.0
    %522 = vmatpush1.xpose.msra.mxu0 0.0
    %523 = vmatprep.subr.mxu0 0.0
    %524 = vmatpush1.xpose.msra.mxu0 0.0
    %525 = vmatprep.subr.mxu0 0.0
    %526 = vmatpush1.xpose.msra.mxu0 0.0
    %527 = vmatprep.subr.mxu0 0.0
    %528 = vmatpush1.xpose.msra.mxu0 0.0
    %529 = vmatprep.subr.mxu0 0.0
    %530 = vmatpush1.xpose.msra.mxu0 0.0
    %531 = vmatprep.subr.mxu0 0.0
    %532 = vmatpush1.xpose.msra.mxu0 0.0
    %533 = vmatprep.subr.mxu0 0.0
    %534 = vmatpush1.xpose.msra.mxu0 0.0
    %535 = vmatprep.subr.mxu0 0.0
    %536 = vmatpush1.xpose.msra.mxu0 0.0
    %537 = vmatprep.subr.mxu0 0.0
    %538 = vmatpush1.xpose.msra.mxu0 0.0
    %539 = vmatprep.subr.mxu0 0.0
    %540 = vmatpush1.xpose.msra.mxu0 0.0
    %541 = vmatprep.subr.mxu0 0.0
    %542 = vmatpush1.xpose.msra.mxu0 0.0
    %543 = vmatprep.subr.mxu0 0.0
    %544 = vmatpush1.xpose.msra.mxu0 0.0
    %545 = vmatprep.subr.mxu0 0.0
    %546 = vmatpush1.xpose.msra.mxu0 0.0
    %547 = vmatprep.subr.mxu0 0.0
    %548 = vmatpush1.xpose.msra.mxu0 0.0
    %549 = vmatprep.mubr.f32.mxu0 0.0
    %550 = vmatmul.mubr.f32.gmra.mrb[0].mxu0 %v477
    %v551 = vpop.f32.mrb[0].mxu0
    %v552 = vadd.f32 0.0, %v551
    %v553 = vpop.f32.mrb[0].mxu0
    %554 = vmatprep.mubr.f32.mxu0 0.0
    %555 = vmatmul.mubr.f32.gmra.mrb[0].mxu0 %v479
    %v556 = vpop.f32.mrb[0].mxu0
    %v557 = vadd.f32 0.0, %v556
    %v558 = vpop.f32.mrb[0].mxu0
    %559 = vdwg.mxu0
    %v560 = vmul.f32 %v552, 0.35355338
    %v561 = vmul.f32 %v557, 0.35355338
    %v562 = vadd.f32 %v560, %v162
    %v563 = vadd.f32 %v561, %v163
    %v564 = vsel %vm359, %v562, -inf
    %565 = vmax.xlane.f32.xlu0 %v564
    %v566 = vpop.xlane.xlu0 %565
    %v567 = vsel %vm359, %v563, -inf
    %568 = vmax.xlane.f32.xlu0 %v567
    %v569 = vpop.xlane.xlu0 %568
    %v570 = vsub.f32 %v562, %v566
    %v571 = vsub.f32 %v563, %v569
    %v572 = vmul.f32 %v570, 1.442695
    %v573 = vpow.pop %v572
    %v574 = vmul.f32 %v571, 1.442695
    %v575 = vpow.pop %v574
    %v576 = vsel %vm359, %v573, 0.0
    %577 = vadd.xlane.f32.xlu0 %v576
    %v578 = vpop.xlane.xlu0 %577
    %v579 = vsel %vm359, %v575, 0.0
    %580 = vadd.xlane.f32.xlu0 %v579
    %v581 = vpop.xlane.xlu0 %580
    %v582 = vrcp.pop %v578
    %v583 = vrcp.pop %v581
    %v584 = vmul.f32 %v573, %v582
    %v585 = vmul.f32 %v575, %v583
    %586 = vrot.lane.b32.xlu0 %v259, 56
    %v587 = vpop.permute.xlu0 %586
    %588 = vrot.lane.b32.xlu0 %v262, 56
    %v589 = vpop.permute.xlu0 %588
    %v593 = vsel %vm359, %v584, 0
    %v596 = vsel %vm359, %v585, 0
    %598 = vmatprep.subr.mxu0 0.0
    %599 = vmatpush1.msra.mxu0 %v587
    %600 = vmatprep.subr.mxu0 0.0
    %601 = vmatpush1.msra.mxu0 %v589
    %602 = vmatprep.subr.mxu0 0.0
    %603 = vmatpush1.msra.mxu0 0.0
    %604 = vmatprep.subr.mxu0 0.0
    %605 = vmatpush1.msra.mxu0 0.0
    %606 = vmatprep.subr.mxu0 0.0
    %607 = vmatpush1.msra.mxu0 0.0
    %608 = vmatprep.subr.mxu0 0.0
    %609 = vmatpush1.msra.mxu0 0.0
    %610 = vmatprep.subr.mxu0 0.0
    %611 = vmatpush1.msra.mxu0 0.0
    %612 = vmatprep.subr.mxu0 0.0
    %613 = vmatpush1.msra.mxu0 0.0
    %614 = vmatprep.subr.mxu0 0.0
    %615 = vmatpush1.msra.mxu0 0.0
    %616 = vmatprep.subr.mxu0 0.0
    %617 = vmatpush1.msra.mxu0 0.0
    %618 = vmatprep.subr.mxu0 0.0
    %619 = vmatpush1.msra.mxu0 0.0
    %620 = vmatprep.subr.mxu0 0.0
    %621 = vmatpush1.msra.mxu0 0.0
    %622 = vmatprep.subr.mxu0 0.0
    %623 = vmatpush1.msra.mxu0 0.0
    %624 = vmatprep.subr.mxu0 0.0
    %625 = vmatpush1.msra.mxu0 0.0
    %626 = vmatprep.subr.mxu0 0.0
    %627 = vmatpush1.msra.mxu0 0.0
    %628 = vmatprep.subr.mxu0 0.0
    %629 = vmatpush1.msra.mxu0 0.0
    %630 = vmatprep.subr.mxu0 0.0
    %631 = vmatpush1.msra.mxu0 0.0
    %632 = vmatprep.subr.mxu0 0.0
    %633 = vmatpush1.msra.mxu0 0.0
    %634 = vmatprep.subr.mxu0 0.0
    %635 = vmatpush1.msra.mxu0 0.0
    %636 = vmatprep.subr.mxu0 0.0
    %637 = vmatpush1.msra.mxu0 0.0
    %638 = vmatprep.subr.mxu0 0.0
    %639 = vmatpush1.msra.mxu0 0.0
    %640 = vmatprep.subr.mxu0 0.0
    %641 = vmatpush1.msra.mxu0 0.0
    %642 = vmatprep.subr.mxu0 0.0
    %643 = vmatpush1.msra.mxu0 0.0
    %644 = vmatprep.subr.mxu0 0.0
    %645 = vmatpush1.msra.mxu0 0.0
    %646 = vmatprep.subr.mxu0 0.0
    %647 = vmatpush1.msra.mxu0 0.0
    %648 = vmatprep.subr.mxu0 0.0
    %649 = vmatpush1.msra.mxu0 0.0
    %650 = vmatprep.subr.mxu0 0.0
    %651 = vmatpush1.msra.mxu0 0.0
    %652 = vmatprep.subr.mxu0 0.0
    %653 = vmatpush1.msra.mxu0 0.0
    %654 = vmatprep.subr.mxu0 0.0
    %655 = vmatpush1.msra.mxu0 0.0
    %656 = vmatprep.subr.mxu0 0.0
    %657 = vmatpush1.msra.mxu0 0.0
    %658 = vmatprep.subr.mxu0 0.0
    %659 = vmatpush1.msra.mxu0 0.0
    %660 = vmatprep.subr.mxu0 0.0
    %661 = vmatpush1.msra.mxu0 0.0
    %662 = vmatprep.mubr.f32.mxu0 0.0
    %663 = vmatmul.mubr.f32.gmra.mrb[0].mxu0 %v593
    %v664 = vpop.f32.mrb[0].mxu0
    %v665 = vadd.f32 0.0, %v664
    %v666 = vpop.f32.mrb[0].mxu0
    %667 = vmatprep.mubr.f32.mxu0 0.0
    %668 = vmatmul.mubr.f32.gmra.mrb[0].mxu0 %v596
    %v669 = vpop.f32.mrb[0].mxu0
    %v670 = vadd.f32 0.0, %v669
    %v671 = vpop.f32.mrb[0].mxu0
    %672 = vdwg.mxu0
    %673 = vrot.lane.b32.xlu0 %v259, 112
    %v674 = vpop.permute.xlu0 %673
    %675 = vrot.lane.b32.xlu0 %v262, 112
    %v676 = vpop.permute.xlu0 %675
    %677 = vrot.lane.b32.xlu0 %v259, 80
    %v678 = vpop.permute.xlu0 %677
    %679 = vrot.lane.b32.xlu0 %v262, 80
    %v680 = vpop.permute.xlu0 %679
    %v681 = vsel %vm271, %v674, 0
    %v683 = vsel %vm271, %v676, 0
    %v685 = vsel %vm271, %v678, 0
    %v687 = vsel %vm271, %v680, 0
    %689 = vmatprep.subr.mxu0 0.0
    %690 = vmatpush1.xpose.msra.mxu0 %v685
    %691 = vmatprep.subr.mxu0 0.0
    %692 = vmatpush1.xpose.msra.mxu0 %v687
    %693 = vmatprep.subr.mxu0 0.0
    %694 = vmatpush1.xpose.msra.mxu0 0.0
    %695 = vmatprep.subr.mxu0 0.0
    %696 = vmatpush1.xpose.msra.mxu0 0.0
    %697 = vmatprep.subr.mxu0 0.0
    %698 = vmatpush1.xpose.msra.mxu0 0.0
    %699 = vmatprep.subr.mxu0 0.0
    %700 = vmatpush1.xpose.msra.mxu0 0.0
    %701 = vmatprep.subr.mxu0 0.0
    %702 = vmatpush1.xpose.msra.mxu0 0.0
    %703 = vmatprep.subr.mxu0 0.0
    %704 = vmatpush1.xpose.msra.mxu0 0.0
    %705 = vmatprep.subr.mxu0 0.0
    %706 = vmatpush1.xpose.msra.mxu0 0.0
    %707 = vmatprep.subr.mxu0 0.0
    %708 = vmatpush1.xpose.msra.mxu0 0.0
    %709 = vmatprep.subr.mxu0 0.0
    %710 = vmatpush1.xpose.msra.mxu0 0.0
    %711 = vmatprep.subr.mxu0 0.0
    %712 = vmatpush1.xpose.msra.mxu0 0.0
    %713 = vmatprep.subr.mxu0 0.0
    %714 = vmatpush1.xpose.msra.mxu0 0.0
    %715 = vmatprep.subr.mxu0 0.0
    %716 = vmatpush1.xpose.msra.mxu0 0.0
    %717 = vmatprep.subr.mxu0 0.0
    %718 = vmatpush1.xpose.msra.mxu0 0.0
    %719 = vmatprep.subr.mxu0 0.0
    %720 = vmatpush1.xpose.msra.mxu0 0.0
    %721 = vmatprep.subr.mxu0 0.0
    %722 = vmatpush1.xpose.msra.mxu0 0.0
    %723 = vmatprep.subr.mxu0 0.0
    %724 = vmatpush1.xpose.msra.mxu0 0.0
    %725 = vmatprep.subr.mxu0 0.0
    %726 = vmatpush1.xpose.msra.mxu0 0.0
    %727 = vmatprep.subr.mxu0 0.0
    %728 = vmatpush1.xpose.msra.mxu0 0.0
    %729 = vmatprep.subr.mxu0 0.0
    %730 = vmatpush1.xpose.msra.mxu0 0.0
    %731 = vmatprep.subr.mxu0 0.0
    %732 = vmatpush1.xpose.msra.mxu0 0.0
    %733 = vmatprep.subr.mxu0 0.0
    %734 = vmatpush1.xpose.msra.mxu0 0.0
    %735 = vmatprep.subr.mxu0 0.0
    %736 = vmatpush1.xpose.msra.mxu0 0.0
    %737 = vmatprep.subr.mxu0 0.0
    %738 = vmatpush1.xpose.msra.mxu0 0.0
    %739 = vmatprep.subr.mxu0 0.0
    %740 = vmatpush1.xpose.msra.mxu0 0.0
    %741 = vmatprep.subr.mxu0 0.0
    %742 = vmatpush1.xpose.msra.mxu0 0.0
    %743 = vmatprep.subr.mxu0 0.0
    %744 = vmatpush1.xpose.msra.mxu0 0.0
    %745 = vmatprep.subr.mxu0 0.0
    %746 = vmatpush1.xpose.msra.mxu0 0.0
    %747 = vmatprep.subr.mxu0 0.0
    %748 = vmatpush1.xpose.msra.mxu0 0.0
    %749 = vmatprep.subr.mxu0 0.0
    %750 = vmatpush1.xpose.msra.mxu0 0.0
    %751 = vmatprep.subr.mxu0 0.0
    %752 = vmatpush1.xpose.msra.mxu0 0.0
    %753 = vmatprep.mubr.f32.mxu0 0.0
    %754 = vmatmul.mubr.f32.gmra.mrb[0].mxu0 %v681
    %v755 = vpop.f32.mrb[0].mxu0
    %v756 = vadd.f32 0.0, %v755
    %v757 = vpop.f32.mrb[0].mxu0
    %758 = vmatprep.mubr.f32.mxu0 0.0
    %759 = vmatmul.mubr.f32.gmra.mrb[0].mxu0 %v683
    %v760 = vpop.f32.mrb[0].mxu0
    %v761 = vadd.f32 0.0, %v760
    %v762 = vpop.f32.mrb[0].mxu0
    %763 = vdwg.mxu0
    %v764 = vmul.f32 %v756, 0.35355338
    %v765 = vmul.f32 %v761, 0.35355338
    %v766 = vadd.f32 %v764, %v162
    %v767 = vadd.f32 %v765, %v163
    %v768 = vsel %vm359, %v766, -inf
    %769 = vmax.xlane.f32.xlu0 %v768
    %v770 = vpop.xlane.xlu0 %769
    %v771 = vsel %vm359, %v767, -inf
    %772 = vmax.xlane.f32.xlu0 %v771
    %v773 = vpop.xlane.xlu0 %772
    %v774 = vsub.f32 %v766, %v770
    %v775 = vsub.f32 %v767, %v773
    %v776 = vmul.f32 %v774, 1.442695
    %v777 = vpow.pop %v776
    %v778 = vmul.f32 %v775, 1.442695
    %v779 = vpow.pop %v778
    %v780 = vsel %vm359, %v777, 0.0
    %781 = vadd.xlane.f32.xlu0 %v780
    %v782 = vpop.xlane.xlu0 %781
    %v783 = vsel %vm359, %v779, 0.0
    %784 = vadd.xlane.f32.xlu0 %v783
    %v785 = vpop.xlane.xlu0 %784
    %v786 = vrcp.pop %v782
    %v787 = vrcp.pop %v785
    %v788 = vmul.f32 %v777, %v786
    %v789 = vmul.f32 %v779, %v787
    %790 = vrot.lane.b32.xlu0 %v259, 48
    %v791 = vpop.permute.xlu0 %790
    %792 = vrot.lane.b32.xlu0 %v262, 48
    %v793 = vpop.permute.xlu0 %792
    %v797 = vsel %vm359, %v788, 0
    %v800 = vsel %vm359, %v789, 0
    %802 = vmatprep.subr.mxu0 0.0
    %803 = vmatpush1.msra.mxu0 %v791
    %804 = vmatprep.subr.mxu0 0.0
    %805 = vmatpush1.msra.mxu0 %v793
    %806 = vmatprep.subr.mxu0 0.0
    %807 = vmatpush1.msra.mxu0 0.0
    %808 = vmatprep.subr.mxu0 0.0
    %809 = vmatpush1.msra.mxu0 0.0
    %810 = vmatprep.subr.mxu0 0.0
    %811 = vmatpush1.msra.mxu0 0.0
    %812 = vmatprep.subr.mxu0 0.0
    %813 = vmatpush1.msra.mxu0 0.0
    %814 = vmatprep.subr.mxu0 0.0
    %815 = vmatpush1.msra.mxu0 0.0
    %816 = vmatprep.subr.mxu0 0.0
    %817 = vmatpush1.msra.mxu0 0.0
    %818 = vmatprep.subr.mxu0 0.0
    %819 = vmatpush1.msra.mxu0 0.0
    %820 = vmatprep.subr.mxu0 0.0
    %821 = vmatpush1.msra.mxu0 0.0
    %822 = vmatprep.subr.mxu0 0.0
    %823 = vmatpush1.msra.mxu0 0.0
    %824 = vmatprep.subr.mxu0 0.0
    %825 = vmatpush1.msra.mxu0 0.0
    %826 = vmatprep.subr.mxu0 0.0
    %827 = vmatpush1.msra.mxu0 0.0
    %828 = vmatprep.subr.mxu0 0.0
    %829 = vmatpush1.msra.mxu0 0.0
    %830 = vmatprep.subr.mxu0 0.0
    %831 = vmatpush1.msra.mxu0 0.0
    %832 = vmatprep.subr.mxu0 0.0
    %833 = vmatpush1.msra.mxu0 0.0
    %834 = vmatprep.subr.mxu0 0.0
    %835 = vmatpush1.msra.mxu0 0.0
    %836 = vmatprep.subr.mxu0 0.0
    %837 = vmatpush1.msra.mxu0 0.0
    %838 = vmatprep.subr.mxu0 0.0
    %839 = vmatpush1.msra.mxu0 0.0
    %840 = vmatprep.subr.mxu0 0.0
    %841 = vmatpush1.msra.mxu0 0.0
    %842 = vmatprep.subr.mxu0 0.0
    %843 = vmatpush1.msra.mxu0 0.0
    %844 = vmatprep.subr.mxu0 0.0
    %845 = vmatpush1.msra.mxu0 0.0
    %846 = vmatprep.subr.mxu0 0.0
    %847 = vmatpush1.msra.mxu0 0.0
    %848 = vmatprep.subr.mxu0 0.0
    %849 = vmatpush1.msra.mxu0 0.0
    %850 = vmatprep.subr.mxu0 0.0
    %851 = vmatpush1.msra.mxu0 0.0
    %852 = vmatprep.subr.mxu0 0.0
    %853 = vmatpush1.msra.mxu0 0.0
    %854 = vmatprep.subr.mxu0 0.0
    %855 = vmatpush1.msra.mxu0 0.0
    %856 = vmatprep.subr.mxu0 0.0
    %857 = vmatpush1.msra.mxu0 0.0
    %858 = vmatprep.subr.mxu0 0.0
    %859 = vmatpush1.msra.mxu0 0.0
    %860 = vmatprep.subr.mxu0 0.0
    %861 = vmatpush1.msra.mxu0 0.0
    %862 = vmatprep.subr.mxu0 0.0
    %863 = vmatpush1.msra.mxu0 0.0
    %864 = vmatprep.subr.mxu0 0.0
    %865 = vmatpush1.msra.mxu0 0.0
    %866 = vmatprep.mubr.f32.mxu0 0.0
    %867 = vmatmul.mubr.f32.gmra.mrb[0].mxu0 %v797
    %v868 = vpop.f32.mrb[0].mxu0
    %v869 = vadd.f32 0.0, %v868
    %v870 = vpop.f32.mrb[0].mxu0
    %871 = vmatprep.mubr.f32.mxu0 0.0
    %872 = vmatmul.mubr.f32.gmra.mrb[0].mxu0 %v800
    %v873 = vpop.f32.mrb[0].mxu0
    %v874 = vadd.f32 0.0, %v873
    %v875 = vpop.f32.mrb[0].mxu0
    %876 = vdwg.mxu0
    %877 = vrot.lane.b32.xlu0 %v259, 104
    %v878 = vpop.permute.xlu0 %877
    %879 = vrot.lane.b32.xlu0 %v262, 104
    %v880 = vpop.permute.xlu0 %879
    %881 = vrot.lane.b32.xlu0 %v259, 72
    %v882 = vpop.permute.xlu0 %881
    %883 = vrot.lane.b32.xlu0 %v262, 72
    %v884 = vpop.permute.xlu0 %883
    %v885 = vsel %vm271, %v878, 0
    %v887 = vsel %vm271, %v880, 0
    %v889 = vsel %vm271, %v882, 0
    %v891 = vsel %vm271, %v884, 0
    %893 = vmatprep.subr.mxu0 0.0
    %894 = vmatpush1.xpose.msra.mxu0 %v889
    %895 = vmatprep.subr.mxu0 0.0
    %896 = vmatpush1.xpose.msra.mxu0 %v891
    %897 = vmatprep.subr.mxu0 0.0
    %898 = vmatpush1.xpose.msra.mxu0 0.0
    %899 = vmatprep.subr.mxu0 0.0
    %900 = vmatpush1.xpose.msra.mxu0 0.0
    %901 = vmatprep.subr.mxu0 0.0
    %902 = vmatpush1.xpose.msra.mxu0 0.0
    %903 = vmatprep.subr.mxu0 0.0
    %904 = vmatpush1.xpose.msra.mxu0 0.0
    %905 = vmatprep.subr.mxu0 0.0
    %906 = vmatpush1.xpose.msra.mxu0 0.0
    %907 = vmatprep.subr.mxu0 0.0
    %908 = vmatpush1.xpose.msra.mxu0 0.0
    %909 = vmatprep.subr.mxu0 0.0
    %910 = vmatpush1.xpose.msra.mxu0 0.0
    %911 = vmatprep.subr.mxu0 0.0
    %912 = vmatpush1.xpose.msra.mxu0 0.0
    %913 = vmatprep.subr.mxu0 0.0
    %914 = vmatpush1.xpose.msra.mxu0 0.0
    %915 = vmatprep.subr.mxu0 0.0
    %916 = vmatpush1.xpose.msra.mxu0 0.0
    %917 = vmatprep.subr.mxu0 0.0
    %918 = vmatpush1.xpose.msra.mxu0 0.0
    %919 = vmatprep.subr.mxu0 0.0
    %920 = vmatpush1.xpose.msra.mxu0 0.0
    %921 = vmatprep.subr.mxu0 0.0
    %922 = vmatpush1.xpose.msra.mxu0 0.0
    %923 = vmatprep.subr.mxu0 0.0
    %924 = vmatpush1.xpose.msra.mxu0 0.0
    %925 = vmatprep.subr.mxu0 0.0
    %926 = vmatpush1.xpose.msra.mxu0 0.0
    %927 = vmatprep.subr.mxu0 0.0
    %928 = vmatpush1.xpose.msra.mxu0 0.0
    %929 = vmatprep.subr.mxu0 0.0
    %930 = vmatpush1.xpose.msra.mxu0 0.0
    %931 = vmatprep.subr.mxu0 0.0
    %932 = vmatpush1.xpose.msra.mxu0 0.0
    %933 = vmatprep.subr.mxu0 0.0
    %934 = vmatpush1.xpose.msra.mxu0 0.0
    %935 = vmatprep.subr.mxu0 0.0
    %936 = vmatpush1.xpose.msra.mxu0 0.0
    %937 = vmatprep.subr.mxu0 0.0
    %938 = vmatpush1.xpose.msra.mxu0 0.0
    %939 = vmatprep.subr.mxu0 0.0
    %940 = vmatpush1.xpose.msra.mxu0 0.0
    %941 = vmatprep.subr.mxu0 0.0
    %942 = vmatpush1.xpose.msra.mxu0 0.0
    %943 = vmatprep.subr.mxu0 0.0
    %944 = vmatpush1.xpose.msra.mxu0 0.0
    %945 = vmatprep.subr.mxu0 0.0
    %946 = vmatpush1.xpose.msra.mxu0 0.0
    %947 = vmatprep.subr.mxu0 0.0
    %948 = vmatpush1.xpose.msra.mxu0 0.0
    %949 = vmatprep.subr.mxu0 0.0
    %950 = vmatpush1.xpose.msra.mxu0 0.0
    %951 = vmatprep.subr.mxu0 0.0
    %952 = vmatpush1.xpose.msra.mxu0 0.0
    %953 = vmatprep.subr.mxu0 0.0
    %954 = vmatpush1.xpose.msra.mxu0 0.0
    %955 = vmatprep.subr.mxu0 0.0
    %956 = vmatpush1.xpose.msra.mxu0 0.0
    %957 = vmatprep.mubr.f32.mxu0 0.0
    %958 = vmatmul.mubr.f32.gmra.mrb[0].mxu0 %v885
    %v959 = vpop.f32.mrb[0].mxu0
    %v960 = vadd.f32 0.0, %v959
    %v961 = vpop.f32.mrb[0].mxu0
    %962 = vmatprep.mubr.f32.mxu0 0.0
    %963 = vmatmul.mubr.f32.gmra.mrb[0].mxu0 %v887
    %v964 = vpop.f32.mrb[0].mxu0
    %v965 = vadd.f32 0.0, %v964
    %v966 = vpop.f32.mrb[0].mxu0
    %967 = vdwg.mxu0
    %v968 = vmul.f32 %v960, 0.35355338
    %v969 = vmul.f32 %v965, 0.35355338
    %v970 = vadd.f32 %v968, %v162
    %v971 = vadd.f32 %v969, %v163
    %v972 = vsel %vm359, %v970, -inf
    %973 = vmax.xlane.f32.xlu0 %v972
    %v974 = vpop.xlane.xlu0 %973
    %v975 = vsel %vm359, %v971, -inf
    %976 = vmax.xlane.f32.xlu0 %v975
    %v977 = vpop.xlane.xlu0 %976
    %v978 = vsub.f32 %v970, %v974
    %v979 = vsub.f32 %v971, %v977
    %v980 = vmul.f32 %v978, 1.442695
    %v981 = vpow.pop %v980
    %v982 = vmul.f32 %v979, 1.442695
    %v983 = vpow.pop %v982
    %v984 = vsel %vm359, %v981, 0.0
    %985 = vadd.xlane.f32.xlu0 %v984
    %v986 = vpop.xlane.xlu0 %985
    %v987 = vsel %vm359, %v983, 0.0
    %988 = vadd.xlane.f32.xlu0 %v987
    %v989 = vpop.xlane.xlu0 %988
    %v990 = vrcp.pop %v986
    %v991 = vrcp.pop %v989
    %v992 = vmul.f32 %v981, %v990
    %v993 = vmul.f32 %v983, %v991
    %994 = vrot.lane.b32.xlu0 %v259, 40
    %v995 = vpop.permute.xlu0 %994
    %996 = vrot.lane.b32.xlu0 %v262, 40
    %v997 = vpop.permute.xlu0 %996
    %v1001 = vsel %vm359, %v992, 0
    %v1004 = vsel %vm359, %v993, 0
    %1006 = vmatprep.subr.mxu0 0.0
    %1007 = vmatpush1.msra.mxu0 %v995
    %1008 = vmatprep.subr.mxu0 0.0
    %1009 = vmatpush1.msra.mxu0 %v997
    %1010 = vmatprep.subr.mxu0 0.0
    %1011 = vmatpush1.msra.mxu0 0.0
    %1012 = vmatprep.subr.mxu0 0.0
    %1013 = vmatpush1.msra.mxu0 0.0
    %1014 = vmatprep.subr.mxu0 0.0
    %1015 = vmatpush1.msra.mxu0 0.0
    %1016 = vmatprep.subr.mxu0 0.0
    %1017 = vmatpush1.msra.mxu0 0.0
    %1018 = vmatprep.subr.mxu0 0.0
    %1019 = vmatpush1.msra.mxu0 0.0
    %1020 = vmatprep.subr.mxu0 0.0
    %1021 = vmatpush1.msra.mxu0 0.0
    %1022 = vmatprep.subr.mxu0 0.0
    %1023 = vmatpush1.msra.mxu0 0.0
    %1024 = vmatprep.subr.mxu0 0.0
    %1025 = vmatpush1.msra.mxu0 0.0
    %1026 = vmatprep.subr.mxu0 0.0
    %1027 = vmatpush1.msra.mxu0 0.0
    %1028 = vmatprep.subr.mxu0 0.0
    %1029 = vmatpush1.msra.mxu0 0.0
    %1030 = vmatprep.subr.mxu0 0.0
    %1031 = vmatpush1.msra.mxu0 0.0
    %1032 = vmatprep.subr.mxu0 0.0
    %1033 = vmatpush1.msra.mxu0 0.0
    %1034 = vmatprep.subr.mxu0 0.0
    %1035 = vmatpush1.msra.mxu0 0.0
    %1036 = vmatprep.subr.mxu0 0.0
    %1037 = vmatpush1.msra.mxu0 0.0
    %1038 = vmatprep.subr.mxu0 0.0
    %1039 = vmatpush1.msra.mxu0 0.0
    %1040 = vmatprep.subr.mxu0 0.0
    %1041 = vmatpush1.msra.mxu0 0.0
    %1042 = vmatprep.subr.mxu0 0.0
    %1043 = vmatpush1.msra.mxu0 0.0
    %1044 = vmatprep.subr.mxu0 0.0
    %1045 = vmatpush1.msra.mxu0 0.0
    %1046 = vmatprep.subr.mxu0 0.0
    %1047 = vmatpush1.msra.mxu0 0.0
    %1048 = vmatprep.subr.mxu0 0.0
    %1049 = vmatpush1.msra.mxu0 0.0
    %1050 = vmatprep.subr.mxu0 0.0
    %1051 = vmatpush1.msra.mxu0 0.0
    %1052 = vmatprep.subr.mxu0 0.0
    %1053 = vmatpush1.msra.mxu0 0.0
    %1054 = vmatprep.subr.mxu0 0.0
    %1055 = vmatpush1.msra.mxu0 0.0
    %1056 = vmatprep.subr.mxu0 0.0
    %1057 = vmatpush1.msra.mxu0 0.0
    %1058 = vmatprep.subr.mxu0 0.0
    %1059 = vmatpush1.msra.mxu0 0.0
    %1060 = vmatprep.subr.mxu0 0.0
    %1061 = vmatpush1.msra.mxu0 0.0
    %1062 = vmatprep.subr.mxu0 0.0
    %1063 = vmatpush1.msra.mxu0 0.0
    %1064 = vmatprep.subr.mxu0 0.0
    %1065 = vmatpush1.msra.mxu0 0.0
    %1066 = vmatprep.subr.mxu0 0.0
    %1067 = vmatpush1.msra.mxu0 0.0
    %1068 = vmatprep.subr.mxu0 0.0
    %1069 = vmatpush1.msra.mxu0 0.0
    %1070 = vmatprep.mubr.f32.mxu0 0.0
    %1071 = vmatmul.mubr.f32.gmra.mrb[0].mxu0 %v1001
    %v1072 = vpop.f32.mrb[0].mxu0
    %v1073 = vadd.f32 0.0, %v1072
    %v1074 = vpop.f32.mrb[0].mxu0
    %1075 = vmatprep.mubr.f32.mxu0 0.0
    %1076 = vmatmul.mubr.f32.gmra.mrb[0].mxu0 %v1004
    %v1077 = vpop.f32.mrb[0].mxu0
    %v1078 = vadd.f32 0.0, %v1077
    %v1079 = vpop.f32.mrb[0].mxu0
    %1080 = vdwg.mxu0
    %1083 = vrot.lane.b32.xlu0 %v665, 8
    %v1084 = vpop.permute.xlu0 %1083
    %1085 = vrot.lane.b32.xlu0 %v670, 8
    %v1086 = vpop.permute.xlu0 %1085
    %1091 = vrot.lane.b32.xlu0 %v869, 16
    %v1092 = vpop.permute.xlu0 %1091
    %1093 = vrot.lane.b32.xlu0 %v874, 16
    %v1094 = vpop.permute.xlu0 %1093
    %1099 = vrot.lane.b32.xlu0 %v1073, 24
    %v1100 = vpop.permute.xlu0 %1099
    %1101 = vrot.lane.b32.xlu0 %v1078, 24
    %v1102 = vpop.permute.xlu0 %1101
    %v1105 = vsel %vm271, %v461, %v1084
    %v1106 = vsel %vm271, %v466, %v1086
    %v1107 = vsel %vm359, %v1105, %v1092
    %v1108 = vsel %vm359, %v1106, %v1094
    %vm1109 = vcmask 195584
    %v1110 = vsel %vm1109, %v1107, %v1100
    %v1111 = vsel %vm1109, %v1108, %v1102
    %v1112 = vpack.c.bf16 %v1111, %v1110
    %v1117 = vunpack.c.l.b16 %v172
    %v1118 = vunpack.c.l.b16 %v173
    %v1119 = vunpack.c.l.b16 %v174
    %v1120 = vunpack.c.l.b16 %v175
    %v1121 = vpack.c.b16 %v1118, %v1117
    %v1122 = vpack.c.b16 %v1120, %v1119
    %v1126 = vsel %vm220, %v1112, 0
    %1128 = vmatprep.subr.bf16.mxu0 0
    %1129 = vmatpush1.bf16.msra.mxu0 %v1121
    %1130 = vmatprep.subr.bf16.mxu0 0
    %1131 = vmatpush1.bf16.msra.mxu0 %v1122
    %1132 = vmatprep.subr.bf16.mxu0 0
    %1133 = vmatpush1.bf16.msra.mxu0 0
    %1134 = vmatprep.subr.bf16.mxu0 0
    %1135 = vmatpush1.bf16.msra.mxu0 0
    %1136 = vmatprep.subr.bf16.mxu0 0
    %1137 = vmatpush1.bf16.msra.mxu0 0
    %1138 = vmatprep.subr.bf16.mxu0 0
    %1139 = vmatpush1.bf16.msra.mxu0 0
    %1140 = vmatprep.subr.bf16.mxu0 0
    %1141 = vmatpush1.bf16.msra.mxu0 0
    %1142 = vmatprep.subr.bf16.mxu0 0
    %1143 = vmatpush1.bf16.msra.mxu0 0
    %1144 = vmatprep.subr.bf16.mxu0 0
    %1145 = vmatpush1.bf16.msra.mxu0 0
    %1146 = vmatprep.subr.bf16.mxu0 0
    %1147 = vmatpush1.bf16.msra.mxu0 0
    %1148 = vmatprep.subr.bf16.mxu0 0
    %1149 = vmatpush1.bf16.msra.mxu0 0
    %1150 = vmatprep.subr.bf16.mxu0 0
    %1151 = vmatpush1.bf16.msra.mxu0 0
    %1152 = vmatprep.subr.bf16.mxu0 0
    %1153 = vmatpush1.bf16.msra.mxu0 0
    %1154 = vmatprep.subr.bf16.mxu0 0
    %1155 = vmatpush1.bf16.msra.mxu0 0
    %1156 = vmatprep.subr.bf16.mxu0 0
    %1157 = vmatpush1.bf16.msra.mxu0 0
    %1158 = vmatprep.subr.bf16.mxu0 0
    %1159 = vmatpush1.bf16.msra.mxu0 0
    %1160 = vmatprep.mubr.bf16.mxu0 0
    %1161 = vmatmul.mubr.bf16.gmra.mrb[0].mxu0 %v1126
    %v1162 = vpop.f32.mrb[0].mxu0
    %v1163 = vadd.f32 0.0, %v1162
    %v1164 = vpop.f32.mrb[0].mxu0
    %v1165 = vpop.f32.mrb[0].mxu0
    %v1166 = vadd.f32 0.0, %v1165
    %v1167 = vpop.f32.mrb[0].mxu0
    %1168 = vdwg.mxu0
    %v1169 = vadd.f32 %v146, %v1163
    %v1170 = vadd.f32 %v151, %v1166
    %v1171 = vadd.f32 %v1169, %v190
    %v1172 = vadd.f32 %v1170, %v191
    %v1173 = vsel %vm220, %v1171, 0.0
    %1174 = vadd.xlane.f32.xlu0 %v1173
    %v1175 = vpop.xlane.xlu0 %1174
    %v1176 = vsel %vm220, %v1172, 0.0
    %1177 = vadd.xlane.f32.xlu0 %v1176
    %v1178 = vpop.xlane.xlu0 %1177
    %v1179 = vrcp.pop 32.0
    %v1180 = vmul.f32 %v1175, %v1179
    %v1181 = vmul.f32 %v1178, %v1179
    %v1182 = vsub.f32 %v1171, %v1180
    %v1183 = vsub.f32 %v1172, %v1181
    %v1184 = vmul.f32 %v1182, %v1182
    %v1185 = vmul.f32 %v1183, %v1183
    %v1186 = vsel %vm220, %v1184, 0.0
    %1187 = vadd.xlane.f32.xlu0 %v1186
    %v1188 = vpop.xlane.xlu0 %1187
    %v1189 = vsel %vm220, %v1185, 0.0
    %1190 = vadd.xlane.f32.xlu0 %v1189
    %v1191 = vpop.xlane.xlu0 %1190
    %v1192 = vmul.f32 %v1188, %v1179
    %v1193 = vmul.f32 %v1191, %v1179
    %v1194 = vadd.f32 %v1192, 1e-05
    %v1195 = vadd.f32 %v1193, 1e-05
    %v1196 = vrsqrt.pop %v1194
    %v1197 = vrsqrt.pop %v1195
    %v1198 = vmul.f32 %v1182, %v1196
    %v1199 = vmul.f32 %v1183, %v1197
    %v1200 = vmul.f32 %v1198, %v196
    %v1201 = vmul.f32 %v1199, %v197
    %v1202 = vadd.f32 %v1200, %v199
    %v1203 = vadd.f32 %v1201, %v200
    %v1204 = vpack.c.bf16 %v1203, %v1202
    %v1209 = vunpack.c.l.b16 %v168
    %v1210 = vunpack.c.l.b16 %v169
    %v1211 = vunpack.c.l.b16 %v170
    %v1212 = vunpack.c.l.b16 %v171
    %v1213 = vpack.c.b16 %v1210, %v1209
    %v1214 = vpack.c.b16 %v1212, %v1211
    %v1218 = vsel %vm220, %v1204, 0
    %1220 = vmatprep.subr.bf16.mxu0 0
    %1221 = vmatpush1.bf16.msra.mxu0 %v1213
    %1222 = vmatprep.subr.bf16.mxu0 0
    %1223 = vmatpush1.bf16.msra.mxu0 %v1214
    %1224 = vmatprep.subr.bf16.mxu0 0
    %1225 = vmatpush1.bf16.msra.mxu0 0
    %1226 = vmatprep.subr.bf16.mxu0 0
    %1227 = vmatpush1.bf16.msra.mxu0 0
    %1228 = vmatprep.subr.bf16.mxu0 0
    %1229 = vmatpush1.bf16.msra.mxu0 0
    %1230 = vmatprep.subr.bf16.mxu0 0
    %1231 = vmatpush1.bf16.msra.mxu0 0
    %1232 = vmatprep.subr.bf16.mxu0 0
    %1233 = vmatpush1.bf16.msra.mxu0 0
    %1234 = vmatprep.subr.bf16.mxu0 0
    %1235 = vmatpush1.bf16.msra.mxu0 0
    %1236 = vmatprep.subr.bf16.mxu0 0
    %1237 = vmatpush1.bf16.msra.mxu0 0
    %1238 = vmatprep.subr.bf16.mxu0 0
    %1239 = vmatpush1.bf16.msra.mxu0 0
    %1240 = vmatprep.subr.bf16.mxu0 0
    %1241 = vmatpush1.bf16.msra.mxu0 0
    %1242 = vmatprep.subr.bf16.mxu0 0
    %1243 = vmatpush1.bf16.msra.mxu0 0
    %1244 = vmatprep.subr.bf16.mxu0 0
    %1245 = vmatpush1.bf16.msra.mxu0 0
    %1246 = vmatprep.subr.bf16.mxu0 0
    %1247 = vmatpush1.bf16.msra.mxu0 0
    %1248 = vmatprep.subr.bf16.mxu0 0
    %1249 = vmatpush1.bf16.msra.mxu0 0
    %1250 = vmatprep.subr.bf16.mxu0 0
    %1251 = vmatpush1.bf16.msra.mxu0 0
    %1252 = vmatprep.mubr.bf16.mxu0 0
    %1253 = vmatmul.mubr.bf16.gmra.mrb[0].mxu0 %v1218
    %v1254 = vpop.f32.mrb[0].mxu0
    %v1255 = vadd.f32 %v187, %v1254
    %v1256 = vpop.f32.mrb[0].mxu0
    %v1257 = vpop.f32.mrb[0].mxu0
    %v1258 = vadd.f32 %v188, %v1257
    %v1259 = vpop.f32.mrb[0].mxu0
    %1260 = vdwg.mxu0
    %v1261 = vmax.f32 %v1255, 0.0
    %v1262 = vmax.f32 %v1258, 0.0
    %v1263 = vpack.c.bf16 %v1262, %v1261
    %v1272 = vunpack.c.l.b16 %v176
    %v1273 = vunpack.c.l.b16 %v177
    %v1274 = vunpack.c.l.b16 %v178
    %v1275 = vunpack.c.l.b16 %v179
    %v1276 = vunpack.c.l.b16 %v180
    %v1277 = vunpack.c.l.b16 %v181
    %v1278 = vunpack.c.l.b16 %v182
    %v1279 = vunpack.c.l.b16 %v183
    %v1280 = vpack.c.b16 %v1273, %v1272
    %v1281 = vpack.c.b16 %v1275, %v1274
    %v1282 = vpack.c.b16 %v1277, %v1276
    %v1283 = vpack.c.b16 %v1279, %v1278
    %vm1288 = vcmask 523264
    %v1290 = vsel %vm1288, %v1263, 0
    %1292 = vmatprep.subr.bf16.mxu0 0
    %1293 = vmatpush1.bf16.msra.mxu0 %v1280
    %1294 = vmatprep.subr.bf16.mxu0 0
    %1295 = vmatpush1.bf16.msra.mxu0 %v1281
    %1296 = vmatprep.subr.bf16.mxu0 0
    %1297 = vmatpush1.bf16.msra.mxu0 %v1282
    %1298 = vmatprep.subr.bf16.mxu0 0
    %1299 = vmatpush1.bf16.msra.mxu0 %v1283
    %1300 = vmatprep.subr.bf16.mxu0 0
    %1301 = vmatpush1.bf16.msra.mxu0 0
    %1302 = vmatprep.subr.bf16.mxu0 0
    %1303 = vmatpush1.bf16.msra.mxu0 0
    %1304 = vmatprep.subr.bf16.mxu0 0
    %1305 = vmatpush1.bf16.msra.mxu0 0
    %1306 = vmatprep.subr.bf16.mxu0 0
    %1307 = vmatpush1.bf16.msra.mxu0 0
    %1308 = vmatprep.subr.bf16.mxu0 0
    %1309 = vmatpush1.bf16.msra.mxu0 0
    %1310 = vmatprep.subr.bf16.mxu0 0
    %1311 = vmatpush1.bf16.msra.mxu0 0
    %1312 = vmatprep.subr.bf16.mxu0 0
    %1313 = vmatpush1.bf16.msra.mxu0 0
    %1314 = vmatprep.subr.bf16.mxu0 0
    %1315 = vmatpush1.bf16.msra.mxu0 0
    %1316 = vmatprep.subr.bf16.mxu0 0
    %1317 = vmatpush1.bf16.msra.mxu0 0
    %1318 = vmatprep.subr.bf16.mxu0 0
    %1319 = vmatpush1.bf16.msra.mxu0 0
    %1320 = vmatprep.subr.bf16.mxu0 0
    %1321 = vmatpush1.bf16.msra.mxu0 0
    %1322 = vmatprep.subr.bf16.mxu0 0
    %1323 = vmatpush1.bf16.msra.mxu0 0
    %1324 = vmatprep.mubr.bf16.mxu0 0
    %1325 = vmatmul.mubr.bf16.gmra.mrb[0].mxu0 %v1290
    %v1326 = vpop.f32.mrb[0].mxu0
    %v1327 = vadd.f32 0.0, %v1326
    %v1328 = vpop.f32.mrb[0].mxu0
    %v1329 = vpop.f32.mrb[0].mxu0
    %v1330 = vadd.f32 0.0, %v1329
    %v1331 = vpop.f32.mrb[0].mxu0
    %1332 = vdwg.mxu0
    %v1333 = vadd.f32 %v1202, %v1327
    %v1334 = vadd.f32 %v1203, %v1330
    %v1335 = vadd.f32 %v1333, %v193
    %v1336 = vadd.f32 %v1334, %v194
    %v1337 = vsel %vm220, %v1335, 0.0
    %1338 = vadd.xlane.f32.xlu0 %v1337
    %v1339 = vpop.xlane.xlu0 %1338
    %v1340 = vsel %vm220, %v1336, 0.0
    %1341 = vadd.xlane.f32.xlu0 %v1340
    %v1342 = vpop.xlane.xlu0 %1341
    %v1343 = vmul.f32 %v1339, %v1179
    %v1344 = vmul.f32 %v1342, %v1179
    %v1345 = vsub.f32 %v1335, %v1343
    %v1346 = vsub.f32 %v1336, %v1344
    %v1347 = vmul.f32 %v1345, %v1345
    %v1348 = vmul.f32 %v1346, %v1346
    %v1349 = vsel %vm220, %v1347, 0.0
    %1350 = vadd.xlane.f32.xlu0 %v1349
    %v1351 = vpop.xlane.xlu0 %1350
    %v1352 = vsel %vm220, %v1348, 0.0
    %1353 = vadd.xlane.f32.xlu0 %v1352
    %v1354 = vpop.xlane.xlu0 %1353
    %v1355 = vmul.f32 %v1351, %v1179
    %v1356 = vmul.f32 %v1354, %v1179
    %v1357 = vadd.f32 %v1355, 1e-05
    %v1358 = vadd.f32 %v1356, 1e-05
    %v1359 = vrsqrt.pop %v1357
    %v1360 = vrsqrt.pop %v1358
    %v1361 = vmul.f32 %v1345, %v1359
    %v1362 = vmul.f32 %v1346, %v1360
    %v1363 = vmul.f32 %v1361, %v202
    %v1364 = vmul.f32 %v1362, %v203
    %v1365 = vadd.f32 %v1363, %v205
    %v1366 = vadd.f32 %v1364, %v206
    %s1367 = scalar_lea.vmem %s3, 48
    %v1368 = vld [vmem:[%s1367] sm:$0xf]
    %v1369 = vld [vmem:[%s1367 + $0xc] sm:$0xf]
    %v1370 = vld [vmem:[%s1367 + $0x18] sm:$0xf]
    %v1371 = vld [vmem:[%s1367 + $0x24] sm:$0xf]
    %v1372 = vld [vmem:[%s1367 + $0x4] sm:$0xf]
    %v1373 = vld [vmem:[%s1367 + $0x10] sm:$0xf]
    %v1374 = vld [vmem:[%s1367 + $0x1c] sm:$0xf]
    %v1375 = vld [vmem:[%s1367 + $0x28] sm:$0xf]
    %v1376 = vld [vmem:[%s1367 + $0x8] sm:$0xf]
    %v1377 = vld [vmem:[%s1367 + $0x14] sm:$0xf]
    %v1378 = vld [vmem:[%s1367 + $0x20] sm:$0xf]
    %v1379 = vld [vmem:[%s1367 + $0x2c] sm:$0xf]
    %s1380 = scalar_lea.vmem %s4, 32
    %v1381 = vld [vmem:[%s1380] sm:$0xf]
    %v1382 = vld [vmem:[%s1380 + $0x4] sm:$0xf]
    %v1383 = vld [vmem:[%s1380 + $0x8] sm:$0xf]
    %v1384 = vld [vmem:[%s1380 + $0xc] sm:$0xf]
    %v1385 = vld [vmem:[%s1380 + $0x10] sm:$0xf]
    %v1386 = vld [vmem:[%s1380 + $0x14] sm:$0xf]
    %v1387 = vld [vmem:[%s1380 + $0x18] sm:$0xf]
    %v1388 = vld [vmem:[%s1380 + $0x1c] sm:$0xf]
    %s1389 = scalar_lea.vmem [#allocation2], 128
    %v1390 = vld [vmem:[%s1389] sm:$0xff]
    %v1391 = vld [vmem:[%s1389 + $0x8] sm:$0xff]
    %s1392 = scalar_lea.vmem [#allocation2], 144
    %v1393 = vld [vmem:[%s1392] sm:$0xff]
    %v1394 = vld [vmem:[%s1392 + $0x8] sm:$0xff]
    %s1395 = scalar_lea.vmem [#allocation2], 160
    %v1396 = vld [vmem:[%s1395] sm:$0xff]
    %v1397 = vld [vmem:[%s1395 + $0x8] sm:$0xff]
    %s1398 = scalar_lea.vmem [#allocation2], 176
    %v1399 = vld [vmem:[%s1398] sm:$0xff]
    %v1400 = vld [vmem:[%s1398 + $0x8] sm:$0xff]
    %s1401 = scalar_lea.vmem [#allocation2], 192
    %v1402 = vld [vmem:[%s1401] sm:$0xff]
    %v1403 = vld [vmem:[%s1401 + $0x8] sm:$0xff]
    %s1404 = scalar_lea.vmem [#allocation2], 208
    %v1405 = vld [vmem:[%s1404] sm:$0xff]
    %v1406 = vld [vmem:[%s1404 + $0x8] sm:$0xff]
    %s1407 = scalar_lea.vmem [#allocation2], 224
    %v1408 = vld [vmem:[%s1407] sm:$0xff]
    %v1409 = vld [vmem:[%s1407 + $0x8] sm:$0xff]
    %s1410 = scalar_lea.vmem [#allocation2], 240
    %v1411 = vld [vmem:[%s1410] sm:$0xff]
    %v1412 = vld [vmem:[%s1410 + $0x8] sm:$0xff]
    %v1413 = vpack.c.bf16 %v1366, %v1365
    %v1418 = vunpack.c.l.b16 %v1368
    %v1419 = vunpack.c.l.b16 %v1369
    %v1420 = vunpack.c.l.b16 %v1370
    %v1421 = vunpack.c.l.b16 %v1371
    %v1422 = vpack.c.b16 %v1419, %v1418
    %v1423 = vpack.c.b16 %v1421, %v1420
    %v1427 = vsel %vm220, %v1413, 0
    %1429 = vmatprep.subr.bf16.mxu0 0
    %1430 = vmatpush1.bf16.msra.mxu0 %v1422
    %1431 = vmatprep.subr.bf16.mxu0 0
    %1432 = vmatpush1.bf16.msra.mxu0 %v1423
    %1433 = vmatprep.subr.bf16.mxu0 0
    %1434 = vmatpush1.bf16.msra.mxu0 0
    %1435 = vmatprep.subr.bf16.mxu0 0
    %1436 = vmatpush1.bf16.msra.mxu0 0
    %1437 = vmatprep.subr.bf16.mxu0 0
    %1438 = vmatpush1.bf16.msra.mxu0 0
    %1439 = vmatprep.subr.bf16.mxu0 0
    %1440 = vmatpush1.bf16.msra.mxu0 0
    %1441 = vmatprep.subr.bf16.mxu0 0
    %1442 = vmatpush1.bf16.msra.mxu0 0
    %1443 = vmatprep.subr.bf16.mxu0 0
    %1444 = vmatpush1.bf16.msra.mxu0 0
    %1445 = vmatprep.subr.bf16.mxu0 0
    %1446 = vmatpush1.bf16.msra.mxu0 0
    %1447 = vmatprep.subr.bf16.mxu0 0
    %1448 = vmatpush1.bf16.msra.mxu0 0
    %1449 = vmatprep.subr.bf16.mxu0 0
    %1450 = vmatpush1.bf16.msra.mxu0 0
    %1451 = vmatprep.subr.bf16.mxu0 0
    %1452 = vmatpush1.bf16.msra.mxu0 0
    %1453 = vmatprep.subr.bf16.mxu0 0
    %1454 = vmatpush1.bf16.msra.mxu0 0
    %1455 = vmatprep.subr.bf16.mxu0 0
    %1456 = vmatpush1.bf16.msra.mxu0 0
    %1457 = vmatprep.subr.bf16.mxu0 0
    %1458 = vmatpush1.bf16.msra.mxu0 0
    %1459 = vmatprep.subr.bf16.mxu0 0
    %1460 = vmatpush1.bf16.msra.mxu0 0
    %1461 = vmatprep.mubr.bf16.mxu0 0
    %1462 = vmatmul.mubr.bf16.gmra.mrb[0].mxu0 %v1427
    %v1463 = vpop.f32.mrb[0].mxu0
    %v1464 = vadd.f32 %v1390, %v1463
    %v1465 = vpop.f32.mrb[0].mxu0
    %v1466 = vpop.f32.mrb[0].mxu0
    %v1467 = vadd.f32 %v1391, %v1466
    %v1468 = vpop.f32.mrb[0].mxu0
    %1469 = vdwg.mxu0
    %1472 = vrot.lane.b32.xlu0 %v1464, 96
    %v1473 = vpop.permute.xlu0 %1472
    %1474 = vrot.lane.b32.xlu0 %v1467, 96
    %v1475 = vpop.permute.xlu0 %1474
    %v1476 = vsel %vm271, %v1464, 0
    %v1478 = vsel %vm271, %v1467, 0
    %v1480 = vsel %vm271, %v1473, 0
    %v1482 = vsel %vm271, %v1475, 0
    %1484 = vmatprep.subr.mxu0 0.0
    %1485 = vmatpush1.xpose.msra.mxu0 %v1480
    %1486 = vmatprep.subr.mxu0 0.0
    %1487 = vmatpush1.xpose.msra.mxu0 %v1482
    %1488 = vmatprep.subr.mxu0 0.0
    %1489 = vmatpush1.xpose.msra.mxu0 0.0
    %1490 = vmatprep.subr.mxu0 0.0
    %1491 = vmatpush1.xpose.msra.mxu0 0.0
    %1492 = vmatprep.subr.mxu0 0.0
    %1493 = vmatpush1.xpose.msra.mxu0 0.0
    %1494 = vmatprep.subr.mxu0 0.0
    %1495 = vmatpush1.xpose.msra.mxu0 0.0
    %1496 = vmatprep.subr.mxu0 0.0
    %1497 = vmatpush1.xpose.msra.mxu0 0.0
    %1498 = vmatprep.subr.mxu0 0.0
    %1499 = vmatpush1.xpose.msra.mxu0 0.0
    %1500 = vmatprep.subr.mxu0 0.0
    %1501 = vmatpush1.xpose.msra.mxu0 0.0
    %1502 = vmatprep.subr.mxu0 0.0
    %1503 = vmatpush1.xpose.msra.mxu0 0.0
    %1504 = vmatprep.subr.mxu0 0.0
    %1505 = vmatpush1.xpose.msra.mxu0 0.0
    %1506 = vmatprep.subr.mxu0 0.0
    %1507 = vmatpush1.xpose.msra.mxu0 0.0
    %1508 = vmatprep.subr.mxu0 0.0
    %1509 = vmatpush1.xpose.msra.mxu0 0.0
    %1510 = vmatprep.subr.mxu0 0.0
    %1511 = vmatpush1.xpose.msra.mxu0 0.0
    %1512 = vmatprep.subr.mxu0 0.0
    %1513 = vmatpush1.xpose.msra.mxu0 0.0
    %1514 = vmatprep.subr.mxu0 0.0
    %1515 = vmatpush1.xpose.msra.mxu0 0.0
    %1516 = vmatprep.subr.mxu0 0.0
    %1517 = vmatpush1.xpose.msra.mxu0 0.0
    %1518 = vmatprep.subr.mxu0 0.0
    %1519 = vmatpush1.xpose.msra.mxu0 0.0
    %1520 = vmatprep.subr.mxu0 0.0
    %1521 = vmatpush1.xpose.msra.mxu0 0.0
    %1522 = vmatprep.subr.mxu0 0.0
    %1523 = vmatpush1.xpose.msra.mxu0 0.0
    %1524 = vmatprep.subr.mxu0 0.0
    %1525 = vmatpush1.xpose.msra.mxu0 0.0
    %1526 = vmatprep.subr.mxu0 0.0
    %1527 = vmatpush1.xpose.msra.mxu0 0.0
    %1528 = vmatprep.subr.mxu0 0.0
    %1529 = vmatpush1.xpose.msra.mxu0 0.0
    %1530 = vmatprep.subr.mxu0 0.0
    %1531 = vmatpush1.xpose.msra.mxu0 0.0
    %1532 = vmatprep.subr.mxu0 0.0
    %1533 = vmatpush1.xpose.msra.mxu0 0.0
    %1534 = vmatprep.subr.mxu0 0.0
    %1535 = vmatpush1.xpose.msra.mxu0 0.0
    %1536 = vmatprep.subr.mxu0 0.0
    %1537 = vmatpush1.xpose.msra.mxu0 0.0
    %1538 = vmatprep.subr.mxu0 0.0
    %1539 = vmatpush1.xpose.msra.mxu0 0.0
    %1540 = vmatprep.subr.mxu0 0.0
    %1541 = vmatpush1.xpose.msra.mxu0 0.0
    %1542 = vmatprep.subr.mxu0 0.0
    %1543 = vmatpush1.xpose.msra.mxu0 0.0
    %1544 = vmatprep.subr.mxu0 0.0
    %1545 = vmatpush1.xpose.msra.mxu0 0.0
    %1546 = vmatprep.subr.mxu0 0.0
    %1547 = vmatpush1.xpose.msra.mxu0 0.0
    %1548 = vmatprep.mubr.f32.mxu0 0.0
    %1549 = vmatmul.mubr.f32.gmra.mrb[0].mxu0 %v1476
    %v1550 = vpop.f32.mrb[0].mxu0
    %v1551 = vadd.f32 0.0, %v1550
    %v1552 = vpop.f32.mrb[0].mxu0
    %1553 = vmatprep.mubr.f32.mxu0 0.0
    %1554 = vmatmul.mubr.f32.gmra.mrb[0].mxu0 %v1478
    %v1555 = vpop.f32.mrb[0].mxu0
    %v1556 = vadd.f32 0.0, %v1555
    %v1557 = vpop.f32.mrb[0].mxu0
    %1558 = vdwg.mxu0
    %v1559 = vmul.f32 %v1551, 0.35355338
    %v1560 = vmul.f32 %v1556, 0.35355338
    %v1561 = vadd.f32 %v1559, %v162
    %v1562 = vadd.f32 %v1560, %v163
    %v1563 = vsel %vm359, %v1561, -inf
    %1564 = vmax.xlane.f32.xlu0 %v1563
    %v1565 = vpop.xlane.xlu0 %1564
    %v1566 = vsel %vm359, %v1562, -inf
    %1567 = vmax.xlane.f32.xlu0 %v1566
    %v1568 = vpop.xlane.xlu0 %1567
    %v1569 = vsub.f32 %v1561, %v1565
    %v1570 = vsub.f32 %v1562, %v1568
    %v1571 = vmul.f32 %v1569, 1.442695
    %v1572 = vpow.pop %v1571
    %v1573 = vmul.f32 %v1570, 1.442695
    %v1574 = vpow.pop %v1573
    %v1575 = vsel %vm359, %v1572, 0.0
    %1576 = vadd.xlane.f32.xlu0 %v1575
    %v1577 = vpop.xlane.xlu0 %1576
    %v1578 = vsel %vm359, %v1574, 0.0
    %1579 = vadd.xlane.f32.xlu0 %v1578
    %v1580 = vpop.xlane.xlu0 %1579
    %v1581 = vrcp.pop %v1577
    %v1582 = vrcp.pop %v1580
    %v1583 = vmul.f32 %v1572, %v1581
    %v1584 = vmul.f32 %v1574, %v1582
    %1585 = vrot.lane.b32.xlu0 %v1464, 64
    %v1586 = vpop.permute.xlu0 %1585
    %1587 = vrot.lane.b32.xlu0 %v1467, 64
    %v1588 = vpop.permute.xlu0 %1587
    %v1592 = vsel %vm359, %v1583, 0
    %v1595 = vsel %vm359, %v1584, 0
    %1597 = vmatprep.subr.mxu0 0.0
    %1598 = vmatpush1.msra.mxu0 %v1586
    %1599 = vmatprep.subr.mxu0 0.0
    %1600 = vmatpush1.msra.mxu0 %v1588
    %1601 = vmatprep.subr.mxu0 0.0
    %1602 = vmatpush1.msra.mxu0 0.0
    %1603 = vmatprep.subr.mxu0 0.0
    %1604 = vmatpush1.msra.mxu0 0.0
    %1605 = vmatprep.subr.mxu0 0.0
    %1606 = vmatpush1.msra.mxu0 0.0
    %1607 = vmatprep.subr.mxu0 0.0
    %1608 = vmatpush1.msra.mxu0 0.0
    %1609 = vmatprep.subr.mxu0 0.0
    %1610 = vmatpush1.msra.mxu0 0.0
    %1611 = vmatprep.subr.mxu0 0.0
    %1612 = vmatpush1.msra.mxu0 0.0
    %1613 = vmatprep.subr.mxu0 0.0
    %1614 = vmatpush1.msra.mxu0 0.0
    %1615 = vmatprep.subr.mxu0 0.0
    %1616 = vmatpush1.msra.mxu0 0.0
    %1617 = vmatprep.subr.mxu0 0.0
    %1618 = vmatpush1.msra.mxu0 0.0
    %1619 = vmatprep.subr.mxu0 0.0
    %1620 = vmatpush1.msra.mxu0 0.0
    %1621 = vmatprep.subr.mxu0 0.0
    %1622 = vmatpush1.msra.mxu0 0.0
    %1623 = vmatprep.subr.mxu0 0.0
    %1624 = vmatpush1.msra.mxu0 0.0
    %1625 = vmatprep.subr.mxu0 0.0
    %1626 = vmatpush1.msra.mxu0 0.0
    %1627 = vmatprep.subr.mxu0 0.0
    %1628 = vmatpush1.msra.mxu0 0.0
    %1629 = vmatprep.subr.mxu0 0.0
    %1630 = vmatpush1.msra.mxu0 0.0
    %1631 = vmatprep.subr.mxu0 0.0
    %1632 = vmatpush1.msra.mxu0 0.0
    %1633 = vmatprep.subr.mxu0 0.0
    %1634 = vmatpush1.msra.mxu0 0.0
    %1635 = vmatprep.subr.mxu0 0.0
    %1636 = vmatpush1.msra.mxu0 0.0
    %1637 = vmatprep.subr.mxu0 0.0
    %1638 = vmatpush1.msra.mxu0 0.0
    %1639 = vmatprep.subr.mxu0 0.0
    %1640 = vmatpush1.msra.mxu0 0.0
    %1641 = vmatprep.subr.mxu0 0.0
    %1642 = vmatpush1.msra.mxu0 0.0
    %1643 = vmatprep.subr.mxu0 0.0
    %1644 = vmatpush1.msra.mxu0 0.0
    %1645 = vmatprep.subr.mxu0 0.0
    %1646 = vmatpush1.msra.mxu0 0.0
    %1647 = vmatprep.subr.mxu0 0.0
    %1648 = vmatpush1.msra.mxu0 0.0
    %1649 = vmatprep.subr.mxu0 0.0
    %1650 = vmatpush1.msra.mxu0 0.0
    %1651 = vmatprep.subr.mxu0 0.0
    %1652 = vmatpush1.msra.mxu0 0.0
    %1653 = vmatprep.subr.mxu0 0.0
    %1654 = vmatpush1.msra.mxu0 0.0
    %1655 = vmatprep.subr.mxu0 0.0
    %1656 = vmatpush1.msra.mxu0 0.0
    %1657 = vmatprep.subr.mxu0 0.0
    %1658 = vmatpush1.msra.mxu0 0.0
    %1659 = vmatprep.subr.mxu0 0.0
    %1660 = vmatpush1.msra.mxu0 0.0
    %1661 = vmatprep.mubr.f32.mxu0 0.0
    %1662 = vmatmul.mubr.f32.gmra.mrb[0].mxu0 %v1592
    %v1663 = vpop.f32.mrb[0].mxu0
    %v1664 = vadd.f32 0.0, %v1663
    %v1665 = vpop.f32.mrb[0].mxu0
    %1666 = vmatprep.mubr.f32.mxu0 0.0
    %1667 = vmatmul.mubr.f32.gmra.mrb[0].mxu0 %v1595
    %v1668 = vpop.f32.mrb[0].mxu0
    %v1669 = vadd.f32 0.0, %v1668
    %v1670 = vpop.f32.mrb[0].mxu0
    %1671 = vdwg.mxu0
    %1672 = vrot.lane.b32.xlu0 %v1464, 120
    %v1673 = vpop.permute.xlu0 %1672
    %1674 = vrot.lane.b32.xlu0 %v1467, 120
    %v1675 = vpop.permute.xlu0 %1674
    %1676 = vrot.lane.b32.xlu0 %v1464, 88
    %v1677 = vpop.permute.xlu0 %1676
    %1678 = vrot.lane.b32.xlu0 %v1467, 88
    %v1679 = vpop.permute.xlu0 %1678
    %v1680 = vsel %vm271, %v1673, 0
    %v1682 = vsel %vm271, %v1675, 0
    %v1684 = vsel %vm271, %v1677, 0
    %v1686 = vsel %vm271, %v1679, 0
    %1688 = vmatprep.subr.mxu0 0.0
    %1689 = vmatpush1.xpose.msra.mxu0 %v1684
    %1690 = vmatprep.subr.mxu0 0.0
    %1691 = vmatpush1.xpose.msra.mxu0 %v1686
    %1692 = vmatprep.subr.mxu0 0.0
    %1693 = vmatpush1.xpose.msra.mxu0 0.0
    %1694 = vmatprep.subr.mxu0 0.0
    %1695 = vmatpush1.xpose.msra.mxu0 0.0
    %1696 = vmatprep.subr.mxu0 0.0
    %1697 = vmatpush1.xpose.msra.mxu0 0.0
    %1698 = vmatprep.subr.mxu0 0.0
    %1699 = vmatpush1.xpose.msra.mxu0 0.0
    %1700 = vmatprep.subr.mxu0 0.0
    %1701 = vmatpush1.xpose.msra.mxu0 0.0
    %1702 = vmatprep.subr.mxu0 0.0
    %1703 = vmatpush1.xpose.msra.mxu0 0.0
    %1704 = vmatprep.subr.mxu0 0.0
    %1705 = vmatpush1.xpose.msra.mxu0 0.0
    %1706 = vmatprep.subr.mxu0 0.0
    %1707 = vmatpush1.xpose.msra.mxu0 0.0
    %1708 = vmatprep.subr.mxu0 0.0
    %1709 = vmatpush1.xpose.msra.mxu0 0.0
    %1710 = vmatprep.subr.mxu0 0.0
    %1711 = vmatpush1.xpose.msra.mxu0 0.0
    %1712 = vmatprep.subr.mxu0 0.0
    %1713 = vmatpush1.xpose.msra.mxu0 0.0
    %1714 = vmatprep.subr.mxu0 0.0
    %1715 = vmatpush1.xpose.msra.mxu0 0.0
    %1716 = vmatprep.subr.mxu0 0.0
    %1717 = vmatpush1.xpose.msra.mxu0 0.0
    %1718 = vmatprep.subr.mxu0 0.0
    %1719 = vmatpush1.xpose.msra.mxu0 0.0
    %1720 = vmatprep.subr.mxu0 0.0
    %1721 = vmatpush1.xpose.msra.mxu0 0.0
    %1722 = vmatprep.subr.mxu0 0.0
    %1723 = vmatpush1.xpose.msra.mxu0 0.0
    %1724 = vmatprep.subr.mxu0 0.0
    %1725 = vmatpush1.xpose.msra.mxu0 0.0
    %1726 = vmatprep.subr.mxu0 0.0
    %1727 = vmatpush1.xpose.msra.mxu0 0.0
    %1728 = vmatprep.subr.mxu0 0.0
    %1729 = vmatpush1.xpose.msra.mxu0 0.0
    %1730 = vmatprep.subr.mxu0 0.0
    %1731 = vmatpush1.xpose.msra.mxu0 0.0
    %1732 = vmatprep.subr.mxu0 0.0
    %1733 = vmatpush1.xpose.msra.mxu0 0.0
    %1734 = vmatprep.subr.mxu0 0.0
    %1735 = vmatpush1.xpose.msra.mxu0 0.0
    %1736 = vmatprep.subr.mxu0 0.0
    %1737 = vmatpush1.xpose.msra.mxu0 0.0
    %1738 = vmatprep.subr.mxu0 0.0
    %1739 = vmatpush1.xpose.msra.mxu0 0.0
    %1740 = vmatprep.subr.mxu0 0.0
    %1741 = vmatpush1.xpose.msra.mxu0 0.0
    %1742 = vmatprep.subr.mxu0 0.0
    %1743 = vmatpush1.xpose.msra.mxu0 0.0
    %1744 = vmatprep.subr.mxu0 0.0
    %1745 = vmatpush1.xpose.msra.mxu0 0.0
    %1746 = vmatprep.subr.mxu0 0.0
    %1747 = vmatpush1.xpose.msra.mxu0 0.0
    %1748 = vmatprep.subr.mxu0 0.0
    %1749 = vmatpush1.xpose.msra.mxu0 0.0
    %1750 = vmatprep.subr.mxu0 0.0
    %1751 = vmatpush1.xpose.msra.mxu0 0.0
    %1752 = vmatprep.mubr.f32.mxu0 0.0
    %1753 = vmatmul.mubr.f32.gmra.mrb[0].mxu0 %v1680
    %v1754 = vpop.f32.mrb[0].mxu0
    %v1755 = vadd.f32 0.0, %v1754
    %v1756 = vpop.f32.mrb[0].mxu0
    %1757 = vmatprep.mubr.f32.mxu0 0.0
    %1758 = vmatmul.mubr.f32.gmra.mrb[0].mxu0 %v1682
    %v1759 = vpop.f32.mrb[0].mxu0
    %v1760 = vadd.f32 0.0, %v1759
    %v1761 = vpop.f32.mrb[0].mxu0
    %1762 = vdwg.mxu0
    %v1763 = vmul.f32 %v1755, 0.35355338
    %v1764 = vmul.f32 %v1760, 0.35355338
    %v1765 = vadd.f32 %v1763, %v162
    %v1766 = vadd.f32 %v1764, %v163
    %v1767 = vsel %vm359, %v1765, -inf
    %1768 = vmax.xlane.f32.xlu0 %v1767
    %v1769 = vpop.xlane.xlu0 %1768
    %v1770 = vsel %vm359, %v1766, -inf
    %1771 = vmax.xlane.f32.xlu0 %v1770
    %v1772 = vpop.xlane.xlu0 %1771
    %v1773 = vsub.f32 %v1765, %v1769
    %v1774 = vsub.f32 %v1766, %v1772
    %v1775 = vmul.f32 %v1773, 1.442695
    %v1776 = vpow.pop %v1775
    %v1777 = vmul.f32 %v1774, 1.442695
    %v1778 = vpow.pop %v1777
    %v1779 = vsel %vm359, %v1776, 0.0
    %1780 = vadd.xlane.f32.xlu0 %v1779
    %v1781 = vpop.xlane.xlu0 %1780
    %v1782 = vsel %vm359, %v1778, 0.0
    %1783 = vadd.xlane.f32.xlu0 %v1782
    %v1784 = vpop.xlane.xlu0 %1783
    %v1785 = vrcp.pop %v1781
    %v1786 = vrcp.pop %v1784
    %v1787 = vmul.f32 %v1776, %v1785
    %v1788 = vmul.f32 %v1778, %v1786
    %1789 = vrot.lane.b32.xlu0 %v1464, 56
    %v1790 = vpop.permute.xlu0 %1789
    %1791 = vrot.lane.b32.xlu0 %v1467, 56
    %v1792 = vpop.permute.xlu0 %1791
    %v1796 = vsel %vm359, %v1787, 0
    %v1799 = vsel %vm359, %v1788, 0
    %1801 = vmatprep.subr.mxu0 0.0
    %1802 = vmatpush1.msra.mxu0 %v1790
    %1803 = vmatprep.subr.mxu0 0.0
    %1804 = vmatpush1.msra.mxu0 %v1792
    %1805 = vmatprep.subr.mxu0 0.0
    %1806 = vmatpush1.msra.mxu0 0.0
    %1807 = vmatprep.subr.mxu0 0.0
    %1808 = vmatpush1.msra.mxu0 0.0
    %1809 = vmatprep.subr.mxu0 0.0
    %1810 = vmatpush1.msra.mxu0 0.0
    %1811 = vmatprep.subr.mxu0 0.0
    %1812 = vmatpush1.msra.mxu0 0.0
    %1813 = vmatprep.subr.mxu0 0.0
    %1814 = vmatpush1.msra.mxu0 0.0
    %1815 = vmatprep.subr.mxu0 0.0
    %1816 = vmatpush1.msra.mxu0 0.0
    %1817 = vmatprep.subr.mxu0 0.0
    %1818 = vmatpush1.msra.mxu0 0.0
    %1819 = vmatprep.subr.mxu0 0.0
    %1820 = vmatpush1.msra.mxu0 0.0
    %1821 = vmatprep.subr.mxu0 0.0
    %1822 = vmatpush1.msra.mxu0 0.0
    %1823 = vmatprep.subr.mxu0 0.0
    %1824 = vmatpush1.msra.mxu0 0.0
    %1825 = vmatprep.subr.mxu0 0.0
    %1826 = vmatpush1.msra.mxu0 0.0
    %1827 = vmatprep.subr.mxu0 0.0
    %1828 = vmatpush1.msra.mxu0 0.0
    %1829 = vmatprep.subr.mxu0 0.0
    %1830 = vmatpush1.msra.mxu0 0.0
    %1831 = vmatprep.subr.mxu0 0.0
    %1832 = vmatpush1.msra.mxu0 0.0
    %1833 = vmatprep.subr.mxu0 0.0
    %1834 = vmatpush1.msra.mxu0 0.0
    %1835 = vmatprep.subr.mxu0 0.0
    %1836 = vmatpush1.msra.mxu0 0.0
    %1837 = vmatprep.subr.mxu0 0.0
    %1838 = vmatpush1.msra.mxu0 0.0
    %1839 = vmatprep.subr.mxu0 0.0
    %1840 = vmatpush1.msra.mxu0 0.0
    %1841 = vmatprep.subr.mxu0 0.0
    %1842 = vmatpush1.msra.mxu0 0.0
    %1843 = vmatprep.subr.mxu0 0.0
    %1844 = vmatpush1.msra.mxu0 0.0
    %1845 = vmatprep.subr.mxu0 0.0
    %1846 = vmatpush1.msra.mxu0 0.0
    %1847 = vmatprep.subr.mxu0 0.0
    %1848 = vmatpush1.msra.mxu0 0.0
    %1849 = vmatprep.subr.mxu0 0.0
    %1850 = vmatpush1.msra.mxu0 0.0
    %1851 = vmatprep.subr.mxu0 0.0
    %1852 = vmatpush1.msra.mxu0 0.0
    %1853 = vmatprep.subr.mxu0 0.0
    %1854 = vmatpush1.msra.mxu0 0.0
    %1855 = vmatprep.subr.mxu0 0.0
    %1856 = vmatpush1.msra.mxu0 0.0
    %1857 = vmatprep.subr.mxu0 0.0
    %1858 = vmatpush1.msra.mxu0 0.0
    %1859 = vmatprep.subr.mxu0 0.0
    %1860 = vmatpush1.msra.mxu0 0.0
    %1861 = vmatprep.subr.mxu0 0.0
    %1862 = vmatpush1.msra.mxu0 0.0
    %1863 = vmatprep.subr.mxu0 0.0
    %1864 = vmatpush1.msra.mxu0 0.0
    %1865 = vmatprep.mubr.f32.mxu0 0.0
    %1866 = vmatmul.mubr.f32.gmra.mrb[0].mxu0 %v1796
    %v1867 = vpop.f32.mrb[0].mxu0
    %v1868 = vadd.f32 0.0, %v1867
    %v1869 = vpop.f32.mrb[0].mxu0
    %1870 = vmatprep.mubr.f32.mxu0 0.0
    %1871 = vmatmul.mubr.f32.gmra.mrb[0].mxu0 %v1799
    %v1872 = vpop.f32.mrb[0].mxu0
    %v1873 = vadd.f32 0.0, %v1872
    %v1874 = vpop.f32.mrb[0].mxu0
    %1875 = vdwg.mxu0
    %1876 = vrot.lane.b32.xlu0 %v1464, 112
    %v1877 = vpop.permute.xlu0 %1876
    %1878 = vrot.lane.b32.xlu0 %v1467, 112
    %v1879 = vpop.permute.xlu0 %1878
    %1880 = vrot.lane.b32.xlu0 %v1464, 80
    %v1881 = vpop.permute.xlu0 %1880
    %1882 = vrot.lane.b32.xlu0 %v1467, 80
    %v1883 = vpop.permute.xlu0 %1882
    %v1884 = vsel %vm271, %v1877, 0
    %v1886 = vsel %vm271, %v1879, 0
    %v1888 = vsel %vm271, %v1881, 0
    %v1890 = vsel %vm271, %v1883, 0
    %1892 = vmatprep.subr.mxu0 0.0
    %1893 = vmatpush1.xpose.msra.mxu0 %v1888
    %1894 = vmatprep.subr.mxu0 0.0
    %1895 = vmatpush1.xpose.msra.mxu0 %v1890
    %1896 = vmatprep.subr.mxu0 0.0
    %1897 = vmatpush1.xpose.msra.mxu0 0.0
    %1898 = vmatprep.subr.mxu0 0.0
    %1899 = vmatpush1.xpose.msra.mxu0 0.0
    %1900 = vmatprep.subr.mxu0 0.0
    %1901 = vmatpush1.xpose.msra.mxu0 0.0
    %1902 = vmatprep.subr.mxu0 0.0
    %1903 = vmatpush1.xpose.msra.mxu0 0.0
    %1904 = vmatprep.subr.mxu0 0.0
    %1905 = vmatpush1.xpose.msra.mxu0 0.0
    %1906 = vmatprep.subr.mxu0 0.0
    %1907 = vmatpush1.xpose.msra.mxu0 0.0
    %1908 = vmatprep.subr.mxu0 0.0
    %1909 = vmatpush1.xpose.msra.mxu0 0.0
    %1910 = vmatprep.subr.mxu0 0.0
    %1911 = vmatpush1.xpose.msra.mxu0 0.0
    %1912 = vmatprep.subr.mxu0 0.0
    %1913 = vmatpush1.xpose.msra.mxu0 0.0
    %1914 = vmatprep.subr.mxu0 0.0
    %1915 = vmatpush1.xpose.msra.mxu0 0.0
    %1916 = vmatprep.subr.mxu0 0.0
    %1917 = vmatpush1.xpose.msra.mxu0 0.0
    %1918 = vmatprep.subr.mxu0 0.0
    %1919 = vmatpush1.xpose.msra.mxu0 0.0
    %1920 = vmatprep.subr.mxu0 0.0
    %1921 = vmatpush1.xpose.msra.mxu0 0.0
    %1922 = vmatprep.subr.mxu0 0.0
    %1923 = vmatpush1.xpose.msra.mxu0 0.0
    %1924 = vmatprep.subr.mxu0 0.0
    %1925 = vmatpush1.xpose.msra.mxu0 0.0
    %1926 = vmatprep.subr.mxu0 0.0
    %1927 = vmatpush1.xpose.msra.mxu0 0.0
    %1928 = vmatprep.subr.mxu0 0.0
    %1929 = vmatpush1.xpose.msra.mxu0 0.0
    %1930 = vmatprep.subr.mxu0 0.0
    %1931 = vmatpush1.xpose.msra.mxu0 0.0
    %1932 = vmatprep.subr.mxu0 0.0
    %1933 = vmatpush1.xpose.msra.mxu0 0.0
    %1934 = vmatprep.subr.mxu0 0.0
    %1935 = vmatpush1.xpose.msra.mxu0 0.0
    %1936 = vmatprep.subr.mxu0 0.0
    %1937 = vmatpush1.xpose.msra.mxu0 0.0
    %1938 = vmatprep.subr.mxu0 0.0
    %1939 = vmatpush1.xpose.msra.mxu0 0.0
    %1940 = vmatprep.subr.mxu0 0.0
    %1941 = vmatpush1.xpose.msra.mxu0 0.0
    %1942 = vmatprep.subr.mxu0 0.0
    %1943 = vmatpush1.xpose.msra.mxu0 0.0
    %1944 = vmatprep.subr.mxu0 0.0
    %1945 = vmatpush1.xpose.msra.mxu0 0.0
    %1946 = vmatprep.subr.mxu0 0.0
    %1947 = vmatpush1.xpose.msra.mxu0 0.0
    %1948 = vmatprep.subr.mxu0 0.0
    %1949 = vmatpush1.xpose.msra.mxu0 0.0
    %1950 = vmatprep.subr.mxu0 0.0
    %1951 = vmatpush1.xpose.msra.mxu0 0.0
    %1952 = vmatprep.subr.mxu0 0.0
    %1953 = vmatpush1.xpose.msra.mxu0 0.0
    %1954 = vmatprep.subr.mxu0 0.0
    %1955 = vmatpush1.xpose.msra.mxu0 0.0
    %1956 = vmatprep.mubr.f32.mxu0 0.0
    %1957 = vmatmul.mubr.f32.gmra.mrb[0].mxu0 %v1884
    %v1958 = vpop.f32.mrb[0].mxu0
    %v1959 = vadd.f32 0.0, %v1958
    %v1960 = vpop.f32.mrb[0].mxu0
    %1961 = vmatprep.mubr.f32.mxu0 0.0
    %1962 = vmatmul.mubr.f32.gmra.mrb[0].mxu0 %v1886
    %v1963 = vpop.f32.mrb[0].mxu0
    %v1964 = vadd.f32 0.0, %v1963
    %v1965 = vpop.f32.mrb[0].mxu0
    %1966 = vdwg.mxu0
    %v1967 = vmul.f32 %v1959, 0.35355338
    %v1968 = vmul.f32 %v1964, 0.35355338
    %v1969 = vadd.f32 %v1967, %v162
    %v1970 = vadd.f32 %v1968, %v163
    %v1971 = vsel %vm359, %v1969, -inf
    %1972 = vmax.xlane.f32.xlu0 %v1971
    %v1973 = vpop.xlane.xlu0 %1972
    %v1974 = vsel %vm359, %v1970, -inf
    %1975 = vmax.xlane.f32.xlu0 %v1974
    %v1976 = vpop.xlane.xlu0 %1975
    %v1977 = vsub.f32 %v1969, %v1973
    %v1978 = vsub.f32 %v1970, %v1976
    %v1979 = vmul.f32 %v1977, 1.442695
    %v1980 = vpow.pop %v1979
    %v1981 = vmul.f32 %v1978, 1.442695
    %v1982 = vpow.pop %v1981
    %v1983 = vsel %vm359, %v1980, 0.0
    %1984 = vadd.xlane.f32.xlu0 %v1983
    %v1985 = vpop.xlane.xlu0 %1984
    %v1986 = vsel %vm359, %v1982, 0.0
    %1987 = vadd.xlane.f32.xlu0 %v1986
    %v1988 = vpop.xlane.xlu0 %1987
    %v1989 = vrcp.pop %v1985
    %v1990 = vrcp.pop %v1988
    %v1991 = vmul.f32 %v1980, %v1989
    %v1992 = vmul.f32 %v1982, %v1990
    %1993 = vrot.lane.b32.xlu0 %v1464, 48
    %v1994 = vpop.permute.xlu0 %1993
    %1995 = vrot.lane.b32.xlu0 %v1467, 48
    %v1996 = vpop.permute.xlu0 %1995
    %v2000 = vsel %vm359, %v1991, 0
    %v2003 = vsel %vm359, %v1992, 0
    %2005 = vmatprep.subr.mxu0 0.0
    %2006 = vmatpush1.msra.mxu0 %v1994
    %2007 = vmatprep.subr.mxu0 0.0
    %2008 = vmatpush1.msra.mxu0 %v1996
    %2009 = vmatprep.subr.mxu0 0.0
    %2010 = vmatpush1.msra.mxu0 0.0
    %2011 = vmatprep.subr.mxu0 0.0
    %2012 = vmatpush1.msra.mxu0 0.0
    %2013 = vmatprep.subr.mxu0 0.0
    %2014 = vmatpush1.msra.mxu0 0.0
    %2015 = vmatprep.subr.mxu0 0.0
    %2016 = vmatpush1.msra.mxu0 0.0
    %2017 = vmatprep.subr.mxu0 0.0
    %2018 = vmatpush1.msra.mxu0 0.0
    %2019 = vmatprep.subr.mxu0 0.0
    %2020 = vmatpush1.msra.mxu0 0.0
    %2021 = vmatprep.subr.mxu0 0.0
    %2022 = vmatpush1.msra.mxu0 0.0
    %2023 = vmatprep.subr.mxu0 0.0
    %2024 = vmatpush1.msra.mxu0 0.0
    %2025 = vmatprep.subr.mxu0 0.0
    %2026 = vmatpush1.msra.mxu0 0.0
    %2027 = vmatprep.subr.mxu0 0.0
    %2028 = vmatpush1.msra.mxu0 0.0
    %2029 = vmatprep.subr.mxu0 0.0
    %2030 = vmatpush1.msra.mxu0 0.0
    %2031 = vmatprep.subr.mxu0 0.0
    %2032 = vmatpush1.msra.mxu0 0.0
    %2033 = vmatprep.subr.mxu0 0.0
    %2034 = vmatpush1.msra.mxu0 0.0
    %2035 = vmatprep.subr.mxu0 0.0
    %2036 = vmatpush1.msra.mxu0 0.0
    %2037 = vmatprep.subr.mxu0 0.0
    %2038 = vmatpush1.msra.mxu0 0.0
    %2039 = vmatprep.subr.mxu0 0.0
    %2040 = vmatpush1.msra.mxu0 0.0
    %2041 = vmatprep.subr.mxu0 0.0
    %2042 = vmatpush1.msra.mxu0 0.0
    %2043 = vmatprep.subr.mxu0 0.0
    %2044 = vmatpush1.msra.mxu0 0.0
    %2045 = vmatprep.subr.mxu0 0.0
    %2046 = vmatpush1.msra.mxu0 0.0
    %2047 = vmatprep.subr.mxu0 0.0
    %2048 = vmatpush1.msra.mxu0 0.0
    %2049 = vmatprep.subr.mxu0 0.0
    %2050 = vmatpush1.msra.mxu0 0.0
    %2051 = vmatprep.subr.mxu0 0.0
    %2052 = vmatpush1.msra.mxu0 0.0
    %2053 = vmatprep.subr.mxu0 0.0
    %2054 = vmatpush1.msra.mxu0 0.0
    %2055 = vmatprep.subr.mxu0 0.0
    %2056 = vmatpush1.msra.mxu0 0.0
    %2057 = vmatprep.subr.mxu0 0.0
    %2058 = vmatpush1.msra.mxu0 0.0
    %2059 = vmatprep.subr.mxu0 0.0
    %2060 = vmatpush1.msra.mxu0 0.0
    %2061 = vmatprep.subr.mxu0 0.0
    %2062 = vmatpush1.msra.mxu0 0.0
    %2063 = vmatprep.subr.mxu0 0.0
    %2064 = vmatpush1.msra.mxu0 0.0
    %2065 = vmatprep.subr.mxu0 0.0
    %2066 = vmatpush1.msra.mxu0 0.0
    %2067 = vmatprep.subr.mxu0 0.0
    %2068 = vmatpush1.msra.mxu0 0.0
    %2069 = vmatprep.mubr.f32.mxu0 0.0
    %2070 = vmatmul.mubr.f32.gmra.mrb[0].mxu0 %v2000
    %v2071 = vpop.f32.mrb[0].mxu0
    %v2072 = vadd.f32 0.0, %v2071
    %v2073 = vpop.f32.mrb[0].mxu0
    %2074 = vmatprep.mubr.f32.mxu0 0.0
    %2075 = vmatmul.mubr.f32.gmra.mrb[0].mxu0 %v2003
    %v2076 = vpop.f32.mrb[0].mxu0
    %v2077 = vadd.f32 0.0, %v2076
    %v2078 = vpop.f32.mrb[0].mxu0
    %2079 = vdwg.mxu0
    %2080 = vrot.lane.b32.xlu0 %v1464, 104
    %v2081 = vpop.permute.xlu0 %2080
    %2082 = vrot.lane.b32.xlu0 %v1467, 104
    %v2083 = vpop.permute.xlu0 %2082
    %2084 = vrot.lane.b32.xlu0 %v1464, 72
    %v2085 = vpop.permute.xlu0 %2084
    %2086 = vrot.lane.b32.xlu0 %v1467, 72
    %v2087 = vpop.permute.xlu0 %2086
    %v2088 = vsel %vm271, %v2081, 0
    %v2090 = vsel %vm271, %v2083, 0
    %v2092 = vsel %vm271, %v2085, 0
    %v2094 = vsel %vm271, %v2087, 0
    %2096 = vmatprep.subr.mxu0 0.0
    %2097 = vmatpush1.xpose.msra.mxu0 %v2092
    %2098 = vmatprep.subr.mxu0 0.0
    %2099 = vmatpush1.xpose.msra.mxu0 %v2094
    %2100 = vmatprep.subr.mxu0 0.0
    %2101 = vmatpush1.xpose.msra.mxu0 0.0
    %2102 = vmatprep.subr.mxu0 0.0
    %2103 = vmatpush1.xpose.msra.mxu0 0.0
    %2104 = vmatprep.subr.mxu0 0.0
    %2105 = vmatpush1.xpose.msra.mxu0 0.0
    %2106 = vmatprep.subr.mxu0 0.0
    %2107 = vmatpush1.xpose.msra.mxu0 0.0
    %2108 = vmatprep.subr.mxu0 0.0
    %2109 = vmatpush1.xpose.msra.mxu0 0.0
    %2110 = vmatprep.subr.mxu0 0.0
    %2111 = vmatpush1.xpose.msra.mxu0 0.0
    %2112 = vmatprep.subr.mxu0 0.0
    %2113 = vmatpush1.xpose.msra.mxu0 0.0
    %2114 = vmatprep.subr.mxu0 0.0
    %2115 = vmatpush1.xpose.msra.mxu0 0.0
    %2116 = vmatprep.subr.mxu0 0.0
    %2117 = vmatpush1.xpose.msra.mxu0 0.0
    %2118 = vmatprep.subr.mxu0 0.0
    %2119 = vmatpush1.xpose.msra.mxu0 0.0
    %2120 = vmatprep.subr.mxu0 0.0
    %2121 = vmatpush1.xpose.msra.mxu0 0.0
    %2122 = vmatprep.subr.mxu0 0.0
    %2123 = vmatpush1.xpose.msra.mxu0 0.0
    %2124 = vmatprep.subr.mxu0 0.0
    %2125 = vmatpush1.xpose.msra.mxu0 0.0
    %2126 = vmatprep.subr.mxu0 0.0
    %2127 = vmatpush1.xpose.msra.mxu0 0.0
    %2128 = vmatprep.subr.mxu0 0.0
    %2129 = vmatpush1.xpose.msra.mxu0 0.0
    %2130 = vmatprep.subr.mxu0 0.0
    %2131 = vmatpush1.xpose.msra.mxu0 0.0
    %2132 = vmatprep.subr.mxu0 0.0
    %2133 = vmatpush1.xpose.msra.mxu0 0.0
    %2134 = vmatprep.subr.mxu0 0.0
    %2135 = vmatpush1.xpose.msra.mxu0 0.0
    %2136 = vmatprep.subr.mxu0 0.0
    %2137 = vmatpush1.xpose.msra.mxu0 0.0
    %2138 = vmatprep.subr.mxu0 0.0
    %2139 = vmatpush1.xpose.msra.mxu0 0.0
    %2140 = vmatprep.subr.mxu0 0.0
    %2141 = vmatpush1.xpose.msra.mxu0 0.0
    %2142 = vmatprep.subr.mxu0 0.0
    %2143 = vmatpush1.xpose.msra.mxu0 0.0
    %2144 = vmatprep.subr.mxu0 0.0
    %2145 = vmatpush1.xpose.msra.mxu0 0.0
    %2146 = vmatprep.subr.mxu0 0.0
    %2147 = vmatpush1.xpose.msra.mxu0 0.0
    %2148 = vmatprep.subr.mxu0 0.0
    %2149 = vmatpush1.xpose.msra.mxu0 0.0
    %2150 = vmatprep.subr.mxu0 0.0
    %2151 = vmatpush1.xpose.msra.mxu0 0.0
    %2152 = vmatprep.subr.mxu0 0.0
    %2153 = vmatpush1.xpose.msra.mxu0 0.0
    %2154 = vmatprep.subr.mxu0 0.0
    %2155 = vmatpush1.xpose.msra.mxu0 0.0
    %2156 = vmatprep.subr.mxu0 0.0
    %2157 = vmatpush1.xpose.msra.mxu0 0.0
    %2158 = vmatprep.subr.mxu0 0.0
    %2159 = vmatpush1.xpose.msra.mxu0 0.0
    %2160 = vmatprep.mubr.f32.mxu0 0.0
    %2161 = vmatmul.mubr.f32.gmra.mrb[0].mxu0 %v2088
    %v2162 = vpop.f32.mrb[0].mxu0
    %v2163 = vadd.f32 0.0, %v2162
    %v2164 = vpop.f32.mrb[0].mxu0
    %2165 = vmatprep.mubr.f32.mxu0 0.0
    %2166 = vmatmul.mubr.f32.gmra.mrb[0].mxu0 %v2090
    %v2167 = vpop.f32.mrb[0].mxu0
    %v2168 = vadd.f32 0.0, %v2167
    %v2169 = vpop.f32.mrb[0].mxu0
    %2170 = vdwg.mxu0
    %v2171 = vmul.f32 %v2163, 0.35355338
    %v2172 = vmul.f32 %v2168, 0.35355338
    %v2173 = vadd.f32 %v2171, %v162
    %v2174 = vadd.f32 %v2172, %v163
    %v2175 = vsel %vm359, %v2173, -inf
    %2176 = vmax.xlane.f32.xlu0 %v2175
    %v2177 = vpop.xlane.xlu0 %2176
    %v2178 = vsel %vm359, %v2174, -inf
    %2179 = vmax.xlane.f32.xlu0 %v2178
    %v2180 = vpop.xlane.xlu0 %2179
    %v2181 = vsub.f32 %v2173, %v2177
    %v2182 = vsub.f32 %v2174, %v2180
    %v2183 = vmul.f32 %v2181, 1.442695
    %v2184 = vpow.pop %v2183
    %v2185 = vmul.f32 %v2182, 1.442695
    %v2186 = vpow.pop %v2185
    %v2187 = vsel %vm359, %v2184, 0.0
    %2188 = vadd.xlane.f32.xlu0 %v2187
    %v2189 = vpop.xlane.xlu0 %2188
    %v2190 = vsel %vm359, %v2186, 0.0
    %2191 = vadd.xlane.f32.xlu0 %v2190
    %v2192 = vpop.xlane.xlu0 %2191
    %v2193 = vrcp.pop %v2189
    %v2194 = vrcp.pop %v2192
    %v2195 = vmul.f32 %v2184, %v2193
    %v2196 = vmul.f32 %v2186, %v2194
    %2197 = vrot.lane.b32.xlu0 %v1464, 40
    %v2198 = vpop.permute.xlu0 %2197
    %2199 = vrot.lane.b32.xlu0 %v1467, 40
    %v2200 = vpop.permute.xlu0 %2199
    %v2204 = vsel %vm359, %v2195, 0
    %v2207 = vsel %vm359, %v2196, 0
    %2209 = vmatprep.subr.mxu0 0.0
    %2210 = vmatpush1.msra.mxu0 %v2198
    %2211 = vmatprep.subr.mxu0 0.0
    %2212 = vmatpush1.msra.mxu0 %v2200
    %2213 = vmatprep.subr.mxu0 0.0
    %2214 = vmatpush1.msra.mxu0 0.0
    %2215 = vmatprep.subr.mxu0 0.0
    %2216 = vmatpush1.msra.mxu0 0.0
    %2217 = vmatprep.subr.mxu0 0.0
    %2218 = vmatpush1.msra.mxu0 0.0
    %2219 = vmatprep.subr.mxu0 0.0
    %2220 = vmatpush1.msra.mxu0 0.0
    %2221 = vmatprep.subr.mxu0 0.0
    %2222 = vmatpush1.msra.mxu0 0.0
    %2223 = vmatprep.subr.mxu0 0.0
    %2224 = vmatpush1.msra.mxu0 0.0
    %2225 = vmatprep.subr.mxu0 0.0
    %2226 = vmatpush1.msra.mxu0 0.0
    %2227 = vmatprep.subr.mxu0 0.0
    %2228 = vmatpush1.msra.mxu0 0.0
    %2229 = vmatprep.subr.mxu0 0.0
    %2230 = vmatpush1.msra.mxu0 0.0
    %2231 = vmatprep.subr.mxu0 0.0
    %2232 = vmatpush1.msra.mxu0 0.0
    %2233 = vmatprep.subr.mxu0 0.0
    %2234 = vmatpush1.msra.mxu0 0.0
    %2235 = vmatprep.subr.mxu0 0.0
    %2236 = vmatpush1.msra.mxu0 0.0
    %2237 = vmatprep.subr.mxu0 0.0
    %2238 = vmatpush1.msra.mxu0 0.0
    %2239 = vmatprep.subr.mxu0 0.0
    %2240 = vmatpush1.msra.mxu0 0.0
    %2241 = vmatprep.subr.mxu0 0.0
    %2242 = vmatpush1.msra.mxu0 0.0
    %2243 = vmatprep.subr.mxu0 0.0
    %2244 = vmatpush1.msra.mxu0 0.0
    %2245 = vmatprep.subr.mxu0 0.0
    %2246 = vmatpush1.msra.mxu0 0.0
    %2247 = vmatprep.subr.mxu0 0.0
    %2248 = vmatpush1.msra.mxu0 0.0
    %2249 = vmatprep.subr.mxu0 0.0
    %2250 = vmatpush1.msra.mxu0 0.0
    %2251 = vmatprep.subr.mxu0 0.0
    %2252 = vmatpush1.msra.mxu0 0.0
    %2253 = vmatprep.subr.mxu0 0.0
    %2254 = vmatpush1.msra.mxu0 0.0
    %2255 = vmatprep.subr.mxu0 0.0
    %2256 = vmatpush1.msra.mxu0 0.0
    %2257 = vmatprep.subr.mxu0 0.0
    %2258 = vmatpush1.msra.mxu0 0.0
    %2259 = vmatprep.subr.mxu0 0.0
    %2260 = vmatpush1.msra.mxu0 0.0
    %2261 = vmatprep.subr.mxu0 0.0
    %2262 = vmatpush1.msra.mxu0 0.0
    %2263 = vmatprep.subr.mxu0 0.0
    %2264 = vmatpush1.msra.mxu0 0.0
    %2265 = vmatprep.subr.mxu0 0.0
    %2266 = vmatpush1.msra.mxu0 0.0
    %2267 = vmatprep.subr.mxu0 0.0
    %2268 = vmatpush1.msra.mxu0 0.0
    %2269 = vmatprep.subr.mxu0 0.0
    %2270 = vmatpush1.msra.mxu0 0.0
    %2271 = vmatprep.subr.mxu0 0.0
    %2272 = vmatpush1.msra.mxu0 0.0
    %2273 = vmatprep.mubr.f32.mxu0 0.0
    %2274 = vmatmul.mubr.f32.gmra.mrb[0].mxu0 %v2204
    %v2275 = vpop.f32.mrb[0].mxu0
    %v2276 = vadd.f32 0.0, %v2275
    %v2277 = vpop.f32.mrb[0].mxu0
    %2278 = vmatprep.mubr.f32.mxu0 0.0
    %2279 = vmatmul.mubr.f32.gmra.mrb[0].mxu0 %v2207
    %v2280 = vpop.f32.mrb[0].mxu0
    %v2281 = vadd.f32 0.0, %v2280
    %v2282 = vpop.f32.mrb[0].mxu0
    %2283 = vdwg.mxu0
    %2286 = vrot.lane.b32.xlu0 %v1868, 8
    %v2287 = vpop.permute.xlu0 %2286
    %2288 = vrot.lane.b32.xlu0 %v1873, 8
    %v2289 = vpop.permute.xlu0 %2288
    %2294 = vrot.lane.b32.xlu0 %v2072, 16
    %v2295 = vpop.permute.xlu0 %2294
    %2296 = vrot.lane.b32.xlu0 %v2077, 16
    %v2297 = vpop.permute.xlu0 %2296
    %2302 = vrot.lane.b32.xlu0 %v2276, 24
    %v2303 = vpop.permute.xlu0 %2302
    %2304 = vrot.lane.b32.xlu0 %v2281, 24
    %v2305 = vpop.permute.xlu0 %2304
    %v2308 = vsel %vm271, %v1664, %v2287
    %v2309 = vsel %vm271, %v1669, %v2289
    %v2310 = vsel %vm359, %v2308, %v2295
    %v2311 = vsel %vm359, %v2309, %v2297
    %v2312 = vsel %vm1109, %v2310, %v2303
    %v2313 = vsel %vm1109, %v2311, %v2305
    %v2314 = vpack.c.bf16 %v2313, %v2312
    %v2319 = vunpack.c.l.b16 %v1376
    %v2320 = vunpack.c.l.b16 %v1377
    %v2321 = vunpack.c.l.b16 %v1378
    %v2322 = vunpack.c.l.b16 %v1379
    %v2323 = vpack.c.b16 %v2320, %v2319
    %v2324 = vpack.c.b16 %v2322, %v2321
    %v2328 = vsel %vm220, %v2314, 0
    %2330 = vmatprep.subr.bf16.mxu0 0
    %2331 = vmatpush1.bf16.msra.mxu0 %v2323
    %2332 = vmatprep.subr.bf16.mxu0 0
    %2333 = vmatpush1.bf16.msra.mxu0 %v2324
    %2334 = vmatprep.subr.bf16.mxu0 0
    %2335 = vmatpush1.bf16.msra.mxu0 0
    %2336 = vmatprep.subr.bf16.mxu0 0
    %2337 = vmatpush1.bf16.msra.mxu0 0
    %2338 = vmatprep.subr.bf16.mxu0 0
    %2339 = vmatpush1.bf16.msra.mxu0 0
    %2340 = vmatprep.subr.bf16.mxu0 0
    %2341 = vmatpush1.bf16.msra.mxu0 0
    %2342 = vmatprep.subr.bf16.mxu0 0
    %2343 = vmatpush1.bf16.msra.mxu0 0
    %2344 = vmatprep.subr.bf16.mxu0 0
    %2345 = vmatpush1.bf16.msra.mxu0 0
    %2346 = vmatprep.subr.bf16.mxu0 0
    %2347 = vmatpush1.bf16.msra.mxu0 0
    %2348 = vmatprep.subr.bf16.mxu0 0
    %2349 = vmatpush1.bf16.msra.mxu0 0
    %2350 = vmatprep.subr.bf16.mxu0 0
    %2351 = vmatpush1.bf16.msra.mxu0 0
    %2352 = vmatprep.subr.bf16.mxu0 0
    %2353 = vmatpush1.bf16.msra.mxu0 0
    %2354 = vmatprep.subr.bf16.mxu0 0
    %2355 = vmatpush1.bf16.msra.mxu0 0
    %2356 = vmatprep.subr.bf16.mxu0 0
    %2357 = vmatpush1.bf16.msra.mxu0 0
    %2358 = vmatprep.subr.bf16.mxu0 0
    %2359 = vmatpush1.bf16.msra.mxu0 0
    %2360 = vmatprep.subr.bf16.mxu0 0
    %2361 = vmatpush1.bf16.msra.mxu0 0
    %2362 = vmatprep.mubr.bf16.mxu0 0
    %2363 = vmatmul.mubr.bf16.gmra.mrb[0].mxu0 %v2328
    %v2364 = vpop.f32.mrb[0].mxu0
    %v2365 = vadd.f32 0.0, %v2364
    %v2366 = vpop.f32.mrb[0].mxu0
    %v2367 = vpop.f32.mrb[0].mxu0
    %v2368 = vadd.f32 0.0, %v2367
    %v2369 = vpop.f32.mrb[0].mxu0
    %2370 = vdwg.mxu0
    %v2371 = vadd.f32 %v1365, %v2365
    %v2372 = vadd.f32 %v1366, %v2368
    %v2373 = vadd.f32 %v2371, %v1396
    %v2374 = vadd.f32 %v2372, %v1397
    %v2375 = vsel %vm220, %v2373, 0.0
    %2376 = vadd.xlane.f32.xlu0 %v2375
    %v2377 = vpop.xlane.xlu0 %2376
    %v2378 = vsel %vm220, %v2374, 0.0
    %2379 = vadd.xlane.f32.xlu0 %v2378
    %v2380 = vpop.xlane.xlu0 %2379
    %v2381 = vmul.f32 %v2377, %v1179
    %v2382 = vmul.f32 %v2380, %v1179
    %v2383 = vsub.f32 %v2373, %v2381
    %v2384 = vsub.f32 %v2374, %v2382
    %v2385 = vmul.f32 %v2383, %v2383
    %v2386 = vmul.f32 %v2384, %v2384
    %v2387 = vsel %vm220, %v2385, 0.0
    %2388 = vadd.xlane.f32.xlu0 %v2387
    %v2389 = vpop.xlane.xlu0 %2388
    %v2390 = vsel %vm220, %v2386, 0.0
    %2391 = vadd.xlane.f32.xlu0 %v2390
    %v2392 = vpop.xlane.xlu0 %2391
    %v2393 = vmul.f32 %v2389, %v1179
    %v2394 = vmul.f32 %v2392, %v1179
    %v2395 = vadd.f32 %v2393, 1e-05
    %v2396 = vadd.f32 %v2394, 1e-05
    %v2397 = vrsqrt.pop %v2395
    %v2398 = vrsqrt.pop %v2396
    %v2399 = vmul.f32 %v2383, %v2397
    %v2400 = vmul.f32 %v2384, %v2398
    %v2401 = vmul.f32 %v2399, %v1402
    %v2402 = vmul.f32 %v2400, %v1403
    %v2403 = vadd.f32 %v2401, %v1405
    %v2404 = vadd.f32 %v2402, %v1406
    %v2405 = vpack.c.bf16 %v2404, %v2403
    %v2410 = vunpack.c.l.b16 %v1372
    %v2411 = vunpack.c.l.b16 %v1373
    %v2412 = vunpack.c.l.b16 %v1374
    %v2413 = vunpack.c.l.b16 %v1375
    %v2414 = vpack.c.b16 %v2411, %v2410
    %v2415 = vpack.c.b16 %v2413, %v2412
    %v2419 = vsel %vm220, %v2405, 0
    %2421 = vmatprep.subr.bf16.mxu0 0
    %2422 = vmatpush1.bf16.msra.mxu0 %v2414
    %2423 = vmatprep.subr.bf16.mxu0 0
    %2424 = vmatpush1.bf16.msra.mxu0 %v2415
    %2425 = vmatprep.subr.bf16.mxu0 0
    %2426 = vmatpush1.bf16.msra.mxu0 0
    %2427 = vmatprep.subr.bf16.mxu0 0
    %2428 = vmatpush1.bf16.msra.mxu0 0
    %2429 = vmatprep.subr.bf16.mxu0 0
    %2430 = vmatpush1.bf16.msra.mxu0 0
    %2431 = vmatprep.subr.bf16.mxu0 0
    %2432 = vmatpush1.bf16.msra.mxu0 0
    %2433 = vmatprep.subr.bf16.mxu0 0
    %2434 = vmatpush1.bf16.msra.mxu0 0
    %2435 = vmatprep.subr.bf16.mxu0 0
    %2436 = vmatpush1.bf16.msra.mxu0 0
    %2437 = vmatprep.subr.bf16.mxu0 0
    %2438 = vmatpush1.bf16.msra.mxu0 0
    %2439 = vmatprep.subr.bf16.mxu0 0
    %2440 = vmatpush1.bf16.msra.mxu0 0
    %2441 = vmatprep.subr.bf16.mxu0 0
    %2442 = vmatpush1.bf16.msra.mxu0 0
    %2443 = vmatprep.subr.bf16.mxu0 0
    %2444 = vmatpush1.bf16.msra.mxu0 0
    %2445 = vmatprep.subr.bf16.mxu0 0
    %2446 = vmatpush1.bf16.msra.mxu0 0
    %2447 = vmatprep.subr.bf16.mxu0 0
    %2448 = vmatpush1.bf16.msra.mxu0 0
    %2449 = vmatprep.subr.bf16.mxu0 0
    %2450 = vmatpush1.bf16.msra.mxu0 0
    %2451 = vmatprep.subr.bf16.mxu0 0
    %2452 = vmatpush1.bf16.msra.mxu0 0
    %2453 = vmatprep.mubr.bf16.mxu0 0
    %2454 = vmatmul.mubr.bf16.gmra.mrb[0].mxu0 %v2419
    %v2455 = vpop.f32.mrb[0].mxu0
    %v2456 = vadd.f32 %v1393, %v2455
    %v2457 = vpop.f32.mrb[0].mxu0
    %v2458 = vpop.f32.mrb[0].mxu0
    %v2459 = vadd.f32 %v1394, %v2458
    %v2460 = vpop.f32.mrb[0].mxu0
    %2461 = vdwg.mxu0
    %v2462 = vmax.f32 %v2456, 0.0
    %v2463 = vmax.f32 %v2459, 0.0
    %v2464 = vpack.c.bf16 %v2463, %v2462
    %v2473 = vunpack.c.l.b16 %v1381
    %v2474 = vunpack.c.l.b16 %v1382
    %v2475 = vunpack.c.l.b16 %v1383
    %v2476 = vunpack.c.l.b16 %v1384
    %v2477 = vunpack.c.l.b16 %v1385
    %v2478 = vunpack.c.l.b16 %v1386
    %v2479 = vunpack.c.l.b16 %v1387
    %v2480 = vunpack.c.l.b16 %v1388
    %v2481 = vpack.c.b16 %v2474, %v2473
    %v2482 = vpack.c.b16 %v2476, %v2475
    %v2483 = vpack.c.b16 %v2478, %v2477
    %v2484 = vpack.c.b16 %v2480, %v2479
    %v2490 = vsel %vm1288, %v2464, 0
    %2492 = vmatprep.subr.bf16.mxu0 0
    %2493 = vmatpush1.bf16.msra.mxu0 %v2481
    %2494 = vmatprep.subr.bf16.mxu0 0
    %2495 = vmatpush1.bf16.msra.mxu0 %v2482
    %2496 = vmatprep.subr.bf16.mxu0 0
    %2497 = vmatpush1.bf16.msra.mxu0 %v2483
    %2498 = vmatprep.subr.bf16.mxu0 0
    %2499 = vmatpush1.bf16.msra.mxu0 %v2484
    %2500 = vmatprep.subr.bf16.mxu0 0
    %2501 = vmatpush1.bf16.msra.mxu0 0
    %2502 = vmatprep.subr.bf16.mxu0 0
    %2503 = vmatpush1.bf16.msra.mxu0 0
    %2504 = vmatprep.subr.bf16.mxu0 0
    %2505 = vmatpush1.bf16.msra.mxu0 0
    %2506 = vmatprep.subr.bf16.mxu0 0
    %2507 = vmatpush1.bf16.msra.mxu0 0
    %2508 = vmatprep.subr.bf16.mxu0 0
    %2509 = vmatpush1.bf16.msra.mxu0 0
    %2510 = vmatprep.subr.bf16.mxu0 0
    %2511 = vmatpush1.bf16.msra.mxu0 0
    %2512 = vmatprep.subr.bf16.mxu0 0
    %2513 = vmatpush1.bf16.msra.mxu0 0
    %2514 = vmatprep.subr.bf16.mxu0 0
    %2515 = vmatpush1.bf16.msra.mxu0 0
    %2516 = vmatprep.subr.bf16.mxu0 0
    %2517 = vmatpush1.bf16.msra.mxu0 0
    %2518 = vmatprep.subr.bf16.mxu0 0
    %2519 = vmatpush1.bf16.msra.mxu0 0
    %2520 = vmatprep.subr.bf16.mxu0 0
    %2521 = vmatpush1.bf16.msra.mxu0 0
    %2522 = vmatprep.subr.bf16.mxu0 0
    %2523 = vmatpush1.bf16.msra.mxu0 0
    %2524 = vmatprep.mubr.bf16.mxu0 0
    %2525 = vmatmul.mubr.bf16.gmra.mrb[0].mxu0 %v2490
    %v2526 = vpop.f32.mrb[0].mxu0
    %v2527 = vadd.f32 0.0, %v2526
    %v2528 = vpop.f32.mrb[0].mxu0
    %v2529 = vpop.f32.mrb[0].mxu0
    %v2530 = vadd.f32 0.0, %v2529
    %v2531 = vpop.f32.mrb[0].mxu0
    %2532 = vdwg.mxu0
    %v2533 = vadd.f32 %v2403, %v2527
    %v2534 = vadd.f32 %v2404, %v2530
    %v2535 = vadd.f32 %v2533, %v1399
    %v2536 = vadd.f32 %v2534, %v1400
    %v2537 = vsel %vm220, %v2535, 0.0
    %2538 = vadd.xlane.f32.xlu0 %v2537
    %v2539 = vpop.xlane.xlu0 %2538
    %v2540 = vsel %vm220, %v2536, 0.0
    %2541 = vadd.xlane.f32.xlu0 %v2540
    %v2542 = vpop.xlane.xlu0 %2541
    %v2543 = vmul.f32 %v2539, %v1179
    %v2544 = vmul.f32 %v2542, %v1179
    %v2545 = vsub.f32 %v2535, %v2543
    %v2546 = vsub.f32 %v2536, %v2544
    %v2547 = vmul.f32 %v2545, %v2545
    %v2548 = vmul.f32 %v2546, %v2546
    %v2549 = vsel %vm220, %v2547, 0.0
    %2550 = vadd.xlane.f32.xlu0 %v2549
    %v2551 = vpop.xlane.xlu0 %2550
    %v2552 = vsel %vm220, %v2548, 0.0
    %2553 = vadd.xlane.f32.xlu0 %v2552
    %v2554 = vpop.xlane.xlu0 %2553
    %v2555 = vmul.f32 %v2551, %v1179
    %v2556 = vmul.f32 %v2554, %v1179
    %v2557 = vadd.f32 %v2555, 1e-05
    %v2558 = vadd.f32 %v2556, 1e-05
    %v2559 = vrsqrt.pop %v2557
    %v2560 = vrsqrt.pop %v2558
    %v2561 = vmul.f32 %v2545, %v2559
    %v2562 = vmul.f32 %v2546, %v2560
    %v2563 = vmul.f32 %v2561, %v1408
    %v2564 = vmul.f32 %v2562, %v1409
    %v2565 = vadd.f32 %v2563, %v1411
    %v2566 = vadd.f32 %v2564, %v1412
    %v2567 = vld [vmem:[%s6] sm:$0xf]
    %v2568 = vld [vmem:[%s6 + $0x4] sm:$0xf]
    %v2569 = vld [vmem:[%s6 + $0x8] sm:$0xf]
    %v2570 = vld [vmem:[%s6 + $0xc] sm:$0xf]
    %v2571 = vpack.c.bf16 %v2566, %v2565
    %v2576 = vunpack.c.l.b16 %v2567
    %v2577 = vunpack.c.l.b16 %v2568
    %v2578 = vunpack.c.l.b16 %v2569
    %v2579 = vunpack.c.l.b16 %v2570
    %v2580 = vpack.c.b16 %v2577, %v2576
    %v2581 = vpack.c.b16 %v2579, %v2578
    %v2585 = vsel %vm220, %v2571, 0
    %2587 = vmatprep.subr.bf16.mxu0 0
    %2588 = vmatpush1.bf16.msra.mxu0 %v2580
    %2589 = vmatprep.subr.bf16.mxu0 0
    %2590 = vmatpush1.bf16.msra.mxu0 %v2581
    %2591 = vmatprep.subr.bf16.mxu0 0
    %2592 = vmatpush1.bf16.msra.mxu0 0
    %2593 = vmatprep.subr.bf16.mxu0 0
    %2594 = vmatpush1.bf16.msra.mxu0 0
    %2595 = vmatprep.subr.bf16.mxu0 0
    %2596 = vmatpush1.bf16.msra.mxu0 0
    %2597 = vmatprep.subr.bf16.mxu0 0
    %2598 = vmatpush1.bf16.msra.mxu0 0
    %2599 = vmatprep.subr.bf16.mxu0 0
    %2600 = vmatpush1.bf16.msra.mxu0 0
    %2601 = vmatprep.subr.bf16.mxu0 0
    %2602 = vmatpush1.bf16.msra.mxu0 0
    %2603 = vmatprep.subr.bf16.mxu0 0
    %2604 = vmatpush1.bf16.msra.mxu0 0
    %2605 = vmatprep.subr.bf16.mxu0 0
    %2606 = vmatpush1.bf16.msra.mxu0 0
    %2607 = vmatprep.subr.bf16.mxu0 0
    %2608 = vmatpush1.bf16.msra.mxu0 0
    %2609 = vmatprep.subr.bf16.mxu0 0
    %2610 = vmatpush1.bf16.msra.mxu0 0
    %2611 = vmatprep.subr.bf16.mxu0 0
    %2612 = vmatpush1.bf16.msra.mxu0 0
    %2613 = vmatprep.subr.bf16.mxu0 0
    %2614 = vmatpush1.bf16.msra.mxu0 0
    %2615 = vmatprep.subr.bf16.mxu0 0
    %2616 = vmatpush1.bf16.msra.mxu0 0
    %2617 = vmatprep.subr.bf16.mxu0 0
    %2618 = vmatpush1.bf16.msra.mxu0 0
    %2619 = vmatprep.mubr.bf16.mxu0 0
    %2620 = vmatmul.mubr.bf16.gmra.mrb[0].mxu0 %v2585
    %v2621 = vpop.f32.mrb[0].mxu0
    %v2622 = vadd.f32 0.0, %v2621
    %v2623 = vpop.f32.mrb[0].mxu0
    %v2624 = vpop.f32.mrb[0].mxu0
    %v2625 = vadd.f32 0.0, %v2624
    %v2626 = vpop.f32.mrb[0].mxu0
    %2627 = vdwg.mxu0
    %v2628 = vld [vmem:[%s7] sm:$0x3]
    %v2629 = vld [vmem:[%s7 + $0x2] sm:$0x3]
    %v2631 = vsel %vm359, %v2628, 0
    %2633 = vmatprep.subr.mxu0 0.0
    %2634 = vmatpush1.msra.mxu0 %v2622
    %2635 = vmatprep.subr.mxu0 0.0
    %2636 = vmatpush1.msra.mxu0 %v2625
    %2637 = vmatprep.subr.mxu0 0.0
    %2638 = vmatpush1.msra.mxu0 0.0
    %2639 = vmatprep.subr.mxu0 0.0
    %2640 = vmatpush1.msra.mxu0 0.0
    %2641 = vmatprep.subr.mxu0 0.0
    %2642 = vmatpush1.msra.mxu0 0.0
    %2643 = vmatprep.subr.mxu0 0.0
    %2644 = vmatpush1.msra.mxu0 0.0
    %2645 = vmatprep.subr.mxu0 0.0
    %2646 = vmatpush1.msra.mxu0 0.0
    %2647 = vmatprep.subr.mxu0 0.0
    %2648 = vmatpush1.msra.mxu0 0.0
    %2649 = vmatprep.subr.mxu0 0.0
    %2650 = vmatpush1.msra.mxu0 0.0
    %2651 = vmatprep.subr.mxu0 0.0
    %2652 = vmatpush1.msra.mxu0 0.0
    %2653 = vmatprep.subr.mxu0 0.0
    %2654 = vmatpush1.msra.mxu0 0.0
    %2655 = vmatprep.subr.mxu0 0.0
    %2656 = vmatpush1.msra.mxu0 0.0
    %2657 = vmatprep.subr.mxu0 0.0
    %2658 = vmatpush1.msra.mxu0 0.0
    %2659 = vmatprep.subr.mxu0 0.0
    %2660 = vmatpush1.msra.mxu0 0.0
    %2661 = vmatprep.subr.mxu0 0.0
    %2662 = vmatpush1.msra.mxu0 0.0
    %2663 = vmatprep.subr.mxu0 0.0
    %2664 = vmatpush1.msra.mxu0 0.0
    %2665 = vmatprep.subr.mxu0 0.0
    %2666 = vmatpush1.msra.mxu0 0.0
    %2667 = vmatprep.subr.mxu0 0.0
    %2668 = vmatpush1.msra.mxu0 0.0
    %2669 = vmatprep.subr.mxu0 0.0
    %2670 = vmatpush1.msra.mxu0 0.0
    %2671 = vmatprep.subr.mxu0 0.0
    %2672 = vmatpush1.msra.mxu0 0.0
    %2673 = vmatprep.subr.mxu0 0.0
    %2674 = vmatpush1.msra.mxu0 0.0
    %2675 = vmatprep.subr.mxu0 0.0
    %2676 = vmatpush1.msra.mxu0 0.0
    %2677 = vmatprep.subr.mxu0 0.0
    %2678 = vmatpush1.msra.mxu0 0.0
    %2679 = vmatprep.subr.mxu0 0.0
    %2680 = vmatpush1.msra.mxu0 0.0
    %2681 = vmatprep.subr.mxu0 0.0
    %2682 = vmatpush1.msra.mxu0 0.0
    %2683 = vmatprep.subr.mxu0 0.0
    %2684 = vmatpush1.msra.mxu0 0.0
    %2685 = vmatprep.subr.mxu0 0.0
    %2686 = vmatpush1.msra.mxu0 0.0
    %2687 = vmatprep.subr.mxu0 0.0
    %2688 = vmatpush1.msra.mxu0 0.0
    %2689 = vmatprep.subr.mxu0 0.0
    %2690 = vmatpush1.msra.mxu0 0.0
    %2691 = vmatprep.subr.mxu0 0.0
    %2692 = vmatpush1.msra.mxu0 0.0
    %2693 = vmatprep.subr.mxu0 0.0
    %2694 = vmatpush1.msra.mxu0 0.0
    %2695 = vmatprep.subr.mxu0 0.0
    %2696 = vmatpush1.msra.mxu0 0.0
    %2697 = vmatprep.mubr.f32.mxu0 0.0
    %2698 = vmatmul.mubr.f32.gmra.mrb[0].mxu0 %v2631
    %v2699 = vpop.f32.mrb[0].mxu0
    %v2700 = vadd.f32 %v2629, %v2699
    %v2701 = vpop.f32.mrb[0].mxu0
    %2702 = vdwg.mxu0
    %vm2703 = vcmask 74752
    %v2704 = vsel %vm2703, %v2700, -inf
    %2705 = vmax.xlane.f32.xlu0 %v2704
    %v2706 = vpop.xlane.xlu0 %2705
    %v2707 = vsub.f32 %v2700, %v2706
    %v2708 = vmul.f32 %v2707, 1.442695
    %v2709 = vpow.pop %v2708
    %v2710 = vsel %vm2703, %v2709, 0.0
    %2711 = vadd.xlane.f32.xlu0 %v2710
    %v2712 = vpop.xlane.xlu0 %2711
    %v2713 = vlog2.pop %v2712
    %v2714 = vmul.f32 %v2713, 0.6931472
    %v2715 = vsub.f32 %v2707, %v2714
    %2716 = vst.msk [vmem:[#allocation5] sm:$0x3] %vm2703, %v2715
    // Predicated region
    $region38: #{pallas_forward.1} parent=1 // pred_check
      _
    $region39: #{pallas_forward.1} parent=1 // pred_check_branch
      %2718 = sbr.rel (0) target = $region41
    $region40: #{pallas_forward.1} parent=1 // pred_region
      %s2720 = ssub.s32 32, 32
      %2721 = vsyncadd [#allocation4], %s2720
      %s2723 = sshll.u32 [#allocation5], 4
      %s2724 = int_to_ptr.vmem [resolvable:$true] %s2723
      %2726 = dma.vmem_to_hbm [thread:$0]  %s2724, 32, %s8, [#allocation4]
    $region41: #{pallas_forward.1} parent=1 // pred_fallthru
      _
    // Predicated region
    $region42: #{pallas_forward.1} parent=1 // pred_check
      _
    $region43: #{pallas_forward.1} parent=1 // pred_check_branch
      %2728 = sbr.rel (0) target = $region45
    $region44: #{pallas_forward.1} parent=1 // pred_region
      %2729 = dma.done [#allocation4], 32
    $region45: #{pallas_forward.1} parent=1 // pred_fallthru
      _
    %2730 = vsyncpa [#allocation3], 1
    %2731 = vsyncpa [#allocation4], 1

</llo_original>
